<compile_context>
chip_gen: v5e
topology: v5e:2x2
jax: 0.10.0
libtpu: 0.0.40
codegen_flags: <defaults>
</compile_context>

<pallas_src>
import jax
import jax.numpy as jnp
from jax.experimental import pallas as pl
from jax.experimental.pallas import tpu as pltpu


def _round_up(v, m):
    return ((v + m - 1) // m) * m


def _bilstm_kernel(x_ref,      # [T, Bp, D]       time-major, batch-padded input
                   wx_ref,     # [D, 2*GW]        input proj (fwd layout | bwd layout)
                   bx_ref,     # [1, 2*GW]        folded b_ih + b_hh (both dirs)
                   wrec_ref,   # [SW, GW]         fused fwd+bwd recurrent weight
                   whead_ref,  # [SW, 2*Op]       fused linear head (fwd block | bwd block)
                   bhead_ref,  # [1, Op]          linear bias (lane padded)
                   out_ref,    # [T, Bp, Op]      lane-dense output slab
                   xp_s):      # scratch [T, Bp, 2*GW]  hoisted input projection
    T, Bp, D = x_ref.shape
    SW = wrec_ref.shape[0]          # state lane width: [h_f | h_b | zero pad] (>=128)
    GW = 4 * SW                     # gate slab width per direction (i|f|g|o blocks)
    Op = bhead_ref.shape[1]
    mm_dtype = wrec_ref.dtype       # f32 or bf16 (operands only; accumulate in f32)
    f32 = jnp.float32

    # ---- hoisted input projection: ONE 2-D MXU matmul over all timesteps ----
    # (Bp == 8 makes the (T, Bp) <-> T*Bp reshapes layout-free.)
    x2 = x_ref[...].reshape(T * Bp, D)
    xp = jnp.dot(x2, wx_ref[...], preferred_element_type=f32) + bx_ref[...]
    xp_s[...] = xp.reshape(T, Bp, 2 * GW)

    # ---- init output slab with the (lane-padded) linear bias ----
    out_ref[...] = jnp.broadcast_to(bhead_ref[...], out_ref.shape)

    wrec = wrec_ref[...]
    whead = whead_ref[...]
    zeros = jnp.zeros((Bp, SW), f32)

    # ---- fused forward + backward recurrence (both directions per iter) ----
    def body(s, carry):
        h, c = carry                # [Bp, SW]: lanes 0:H fwd, H:2H bwd, rest exactly 0
        tb = T - 1 - s

        # fwd projection @ t=s (cols 0:GW) + bwd projection @ t=T-1-s (cols GW:2GW);
        # both slices are GW-aligned (multiple of 128 lanes) -> exact tiles.
        gates = (jnp.dot(h.astype(mm_dtype), wrec, preferred_element_type=f32)
                 + xp_s[s, :, 0:GW] + xp_s[tb, :, GW:2 * GW])

        # each gate occupies its own 128-lane block -> full-vreg EUP/VPU ops,
        # one transcendental push per gate for BOTH directions combined.
        i = jax.nn.sigmoid(gates[:, 0:SW])
        f = jax.nn.sigmoid(gates[:, SW:2 * SW])
        g = jnp.tanh(gates[:, 2 * SW:3 * SW])
        o = jax.nn.sigmoid(gates[:, 3 * SW:4 * SW])

        c = f * c + i * g
        h = o * jnp.tanh(c)

        # fused incremental head: one dot, split at the Op lane boundary into two
        # aligned (8, Op) read-modify-write stores (fwd -> out[s], bwd -> out[tb]).
        head = jnp.dot(h.astype(mm_dtype), whead, preferred_element_type=f32)
        out_ref[s] = out_ref[s] + head[:, 0:Op]
        out_ref[tb] = out_ref[tb] + head[:, Op:2 * Op]
        return (h, c)

    jax.lax.fori_loop(0, T, body, (zeros, zeros), unroll=True)


def bidirectional_lstm(x, params, matmul_dtype=jnp.float32):
    """x: [B, T, D] float32 -> [B, T, O] float32 (matches the PyTorch module)."""
    B, T, D = x.shape
    H = params['w_hh_f'].shape[1]
    O = params['w_lin'].shape[0]
    f32 = jnp.float32

    SW = _round_up(2 * H, 128)      # per-gate lane block: [fwd H | bwd H | zero pad]
    GW = 4 * SW                     # per-direction gate slab width
    Op = _round_up(O, 128)          # lane-dense output stores
    Bp = _round_up(B, 8)            # 8-sublane batch tile

    # ---- time-major input, batch padded with zero rows ----
    x_tm = jnp.transpose(x, (1, 0, 2)).astype(f32)          # [T, B, D]
    x_tm = jnp.pad(x_tm, ((0, 0), (0, Bp - B), (0, 0)))     # [T, Bp, D]

    # ---- input-projection weight [D, 2*GW]; cols 0:GW fwd-gate layout, GW:2GW bwd ----
    wx = jnp.zeros((D, 2, 4, SW), f32)
    wx = wx.at[:, 0, :, 0:H].set(params['w_ih_f'].T.reshape(D, 4, H))
    wx = wx.at[:, 1, :, H:2 * H].set(params['w_ih_b'].T.reshape(D, 4, H))
    wx = wx.reshape(D, 2 * GW)
    bx = jnp.zeros((2, 4, SW), f32)
    bx = bx.at[0, :, 0:H].set((params['b_ih_f'] + params['b_hh_f']).reshape(4, H))
    bx = bx.at[1, :, H:2 * H].set((params['b_ih_b'] + params['b_hh_b']).reshape(4, H))
    bx = bx.reshape(1, 2 * GW)

    # ---- fused recurrent weight [SW, GW]: rows 0:H fwd, rows H:2H bwd, rest zero ----
    wrec = jnp.zeros((SW, 4, SW), f32)
    wrec = wrec.at[0:H, :, 0:H].set(params['w_hh_f'].T.reshape(H, 4, H))
    wrec = wrec.at[H:2 * H, :, H:2 * H].set(params['w_hh_b'].T.reshape(H, 4, H))
    wrec = wrec.reshape(SW, GW)

    # ---- fused linear head [SW, 2*Op]: block 0 <- fwd hidden rows, block 1 <- bwd ----
    wlinT = params['w_lin'].T                                # [2H, O]
    whead = jnp.zeros((SW, 2, Op), f32)
    whead = whead.at[0:H, 0, 0:O].set(wlinT[0:H])
    whead = whead.at[H:2 * H, 1, 0:O].set(wlinT[H:2 * H])
    whead = whead.reshape(SW, 2 * Op)
    bhead = jnp.zeros((1, Op), f32).at[0, 0:O].set(params['b_lin'])

    mm = matmul_dtype   # bf16 on v6e/v7x: cast dot operands only; accumulate f32

    out_tm = pl.pallas_call(
        _bilstm_kernel,
        out_shape=jax.ShapeDtypeStruct((T, Bp, Op), f32),
        grid=(1,),
        in_specs=[
            pl.BlockSpec((T, Bp, D), lambda i: (0, 0, 0)),
            pl.BlockSpec((D, 2 * GW), lambda i: (0, 0)),
            pl.BlockSpec((1, 2 * GW), lambda i: (0, 0)),
            pl.BlockSpec((SW, GW), lambda i: (0, 0)),
            pl.BlockSpec((SW, 2 * Op), lambda i: (0, 0)),
            pl.BlockSpec((1, Op), lambda i: (0, 0)),
        ],
        out_specs=pl.BlockSpec((T, Bp, Op), lambda i: (0, 0, 0)),
        scratch_shapes=[
            pltpu.VMEM((T, Bp, 2 * GW), jnp.float32),   # hoisted input projection
        ],
        compiler_params=pltpu.CompilerParams(
            dimension_semantics=("arbitrary",)),
    )(x_tm.astype(mm), wx.astype(mm), bx, wrec.astype(mm), whead.astype(mm), bhead)

    return jnp.transpose(out_tm[:, :B, :O], (1, 0, 2))       # [B, T, O]


# ---------------- pure-JAX reference (PyTorch semantics) ----------------
def _ref_lstm_dir(x, w_ih, w_hh, b_ih, b_hh, reverse):
    B = x.shape[0]
    H = w_hh.shape[1]

    def step(carry, x_t):
        h, c = carry
        g = x_t @ w_ih.T + b_ih + h @ w_hh.T + b_hh
        i = jax.nn.sigmoid(g[:, :H])
        f = jax.nn.sigmoid(g[:, H:2 * H])
        gg = jnp.tanh(g[:, 2 * H:3 * H])
        o = jax.nn.sigmoid(g[:, 3 * H:])
        c = f * c + i * gg
        h = o * jnp.tanh(c)
        return (h, c), h

    xs = jnp.swapaxes(x, 0, 1)
    if reverse:
        xs = xs[::-1]
    _, hs = jax.lax.scan(step, (jnp.zeros((B, H)), jnp.zeros((B, H))), xs)
    if reverse:
        hs = hs[::-1]
    return jnp.swapaxes(hs, 0, 1)


def _ref_forward(x, p):
    hf = _ref_lstm_dir(x, p['w_ih_f'], p['w_hh_f'], p['b_ih_f'], p['b_hh_f'], False)
    hb = _ref_lstm_dir(x, p['w_ih_b'], p['w_hh_b'], p['b_ih_b'], p['b_hh_b'], True)
    cat = jnp.concatenate([hf, hb], axis=-1)
    return cat @ p['w_lin'].T + p['b_lin']


if __name__ == "__main__":
    # small shapes implied by the module: input [B, T, input_size]
    B, T, D, H, O = 2, 8, 16, 32, 16

    key = jax.random.PRNGKey(0)
    keys = jax.random.split(key, 12)
    k = 1.0 / jnp.sqrt(jnp.float32(H))       # PyTorch uniform(-1/sqrt(H), 1/sqrt(H))

    def u(kk, shape):
        return jax.random.uniform(kk, shape, jnp.float32, -k, k)

    params = {
        'w_ih_f': u(keys[0], (4 * H, D)),
        'w_hh_f': u(keys[1], (4 * H, H)),
        'b_ih_f': u(keys[2], (4 * H,)),
        'b_hh_f': u(keys[3], (4 * H,)),
        'w_ih_b': u(keys[4], (4 * H, D)),
        'w_hh_b': u(keys[5], (4 * H, H)),
        'b_ih_b': u(keys[6], (4 * H,)),
        'b_hh_b': u(keys[7], (4 * H,)),
        'w_lin':  u(keys[8], (O, 2 * H)),
        'b_lin':  u(keys[9], (O,)),
    }

    x = jax.random.normal(keys[10], (B, T, D), jnp.float32)

    ref = _ref_forward(x, params)

    # f32 matmul path (bit-for-bit module semantics)
    out = bidirectional_lstm(x, params)
    out = jax.block_until_ready(out)
    assert out.shape == (B, T, O)
    assert jnp.allclose(out, ref, atol=1e-4, rtol=1e-4), "f32 mismatch vs reference"

    # bf16 matmul-operand path (v6e/v7x MXU-native); f32 cell state / accumulation
    out_bf16 = bidirectional_lstm(x, params, matmul_dtype=jnp.bfloat16)
    out_bf16 = jax.block_until_ready(out_bf16)
    assert jnp.max(jnp.abs(out_bf16 - ref)) < 1e-1, "bf16 path out of tolerance"

    print("KERNEL_OK")
</pallas_src>

<mosaic_0001>
module attributes {stable_mosaic.version = 11 : i64} {
  func.func @_bilstm_kernel(%arg0: i32, %arg1: memref<8x8x16xf32, #tpu.memory_space<vmem>>, %arg2: memref<16x1024xf32, #tpu.memory_space<vmem>>, %arg3: memref<1x1024xf32, #tpu.memory_space<vmem>>, %arg4: memref<128x512xf32, #tpu.memory_space<vmem>>, %arg5: memref<128x256xf32, #tpu.memory_space<vmem>>, %arg6: memref<1x128xf32, #tpu.memory_space<vmem>>, %arg7: memref<8x8x128xf32, #tpu.memory_space<vmem>>, %arg8: memref<8x8x1024xf32, #tpu.memory_space<vmem>>) attributes {dimension_semantics = [#tpu.dimension_semantics<arbitrary>], iteration_bounds = array<i64: 1>, scalar_prefetch = 0 : i64, scratch_operands = 1 : i64, tpu.core_type = #tpu.core_type<tc>, window_params = [{pipeline_mode = #tpu.pipeline_mode<synchronous>, transform_indices = @transform_0, window_bounds = array<i64: 8, 8, 16>}, {pipeline_mode = #tpu.pipeline_mode<synchronous>, transform_indices = @transform_1, window_bounds = array<i64: 16, 1024>}, {pipeline_mode = #tpu.pipeline_mode<synchronous>, transform_indices = @transform_2, window_bounds = array<i64: 1, 1024>}, {pipeline_mode = #tpu.pipeline_mode<synchronous>, transform_indices = @transform_3, window_bounds = array<i64: 128, 512>}, {pipeline_mode = #tpu.pipeline_mode<synchronous>, transform_indices = @transform_4, window_bounds = array<i64: 128, 256>}, {pipeline_mode = #tpu.pipeline_mode<synchronous>, transform_indices = @transform_5, window_bounds = array<i64: 1, 128>}, {pipeline_mode = #tpu.pipeline_mode<synchronous>, transform_indices = @transform_6, window_bounds = array<i64: 8, 8, 128>}]} {
    %c0 = arith.constant 0 : index
    %c0_0 = arith.constant 0 : index
    %c0_1 = arith.constant 0 : index
    %0 = vector.load %arg1[%c0, %c0_0, %c0_1] : memref<8x8x16xf32, #tpu.memory_space<vmem>>, vector<8x8x16xf32>
    %1 = vector.shape_cast %0 : vector<8x8x16xf32> to vector<64x16xf32>
    %c0_2 = arith.constant 0 : index
    %c0_3 = arith.constant 0 : index
    %2 = vector.load %arg2[%c0_2, %c0_3] : memref<16x1024xf32, #tpu.memory_space<vmem>>, vector<16x1024xf32>
    %cst = arith.constant dense<0.000000e+00> : vector<64x1024xf32>
    %3 = tpu.matmul %1, %2, %cst {dimension_numbers = #tpu.dot_dimension_numbers<[1], [0], [0], [1], [0, 0, 1, 1], [], []>} : vector<64x16xf32>, vector<16x1024xf32>, vector<64x1024xf32> -> vector<64x1024xf32>
    %c0_4 = arith.constant 0 : index
    %c0_5 = arith.constant 0 : index
    %4 = vector.load %arg3[%c0_4, %c0_5] : memref<1x1024xf32, #tpu.memory_space<vmem>>, vector<1x1024xf32>
    %5 = vector.broadcast %4 : vector<1x1024xf32> to vector<64x1024xf32>
    %6 = arith.addf %3, %5 : vector<64x1024xf32>
    %7 = vector.shape_cast %6 : vector<64x1024xf32> to vector<8x8x1024xf32>
    %c0_6 = arith.constant 0 : index
    %c0_7 = arith.constant 0 : index
    %c0_8 = arith.constant 0 : index
    %8 = vector.load %arg8[%c0_6, %c0_7, %c0_8] : memref<8x8x1024xf32, #tpu.memory_space<vmem>>, vector<8x8x1024xf32>
    tpu.vector_store %arg8[%c0_6, %c0_7, %c0_8], %7 {strides = array<i32>} : memref<8x8x1024xf32, #tpu.memory_space<vmem>>, vector<8x8x1024xf32>,
    %c0_9 = arith.constant 0 : index
    %c0_10 = arith.constant 0 : index
    %9 = vector.load %arg6[%c0_9, %c0_10] : memref<1x128xf32, #tpu.memory_space<vmem>>, vector<1x128xf32>
    %10 = vector.shape_cast %9 : vector<1x128xf32> to vector<1x1x128xf32>
    %11 = vector.broadcast %10 : vector<1x1x128xf32> to vector<8x8x128xf32>
    %c0_11 = arith.constant 0 : index
    %c0_12 = arith.constant 0 : index
    %c0_13 = arith.constant 0 : index
    %12 = vector.load %arg7[%c0_11, %c0_12, %c0_13] : memref<8x8x128xf32, #tpu.memory_space<vmem>>, vector<8x8x128xf32>
    tpu.vector_store %arg7[%c0_11, %c0_12, %c0_13], %11 {strides = array<i32>} : memref<8x8x128xf32, #tpu.memory_space<vmem>>, vector<8x8x128xf32>,
    %c0_14 = arith.constant 0 : index
    %c0_15 = arith.constant 0 : index
    %13 = vector.load %arg4[%c0_14, %c0_15] : memref<128x512xf32, #tpu.memory_space<vmem>>, vector<128x512xf32>
    %c0_16 = arith.constant 0 : index
    %c0_17 = arith.constant 0 : index
    %14 = vector.load %arg5[%c0_16, %c0_17] : memref<128x256xf32, #tpu.memory_space<vmem>>, vector<128x256xf32>
    %cst_18 = arith.constant 0.000000e+00 : f32
    %15 = vector.broadcast %cst_18 : f32 to vector<8x128xf32>
    %c0_i32 = arith.constant 0 : i32
    %c7_i32 = arith.constant 7 : i32
    %16 = arith.subi %c7_i32, %c0_i32 : i32
    %cst_19 = arith.constant dense<0.000000e+00> : vector<8x512xf32>
    %17 = tpu.matmul %15, %13, %cst_19 {dimension_numbers = #tpu.dot_dimension_numbers<[1], [0], [0], [1], [0, 0, 1, 1], [], []>} : vector<8x128xf32>, vector<128x512xf32>, vector<8x512xf32> -> vector<8x512xf32>
    %18 = arith.index_cast %c0_i32 : i32 to index
    %c0_20 = arith.constant 0 : index
    %c0_21 = arith.constant 0 : index
    %19 = vector.load %arg8[%18, %c0_20, %c0_21] : memref<8x8x1024xf32, #tpu.memory_space<vmem>>, vector<1x8x512xf32>
    %20 = vector.shape_cast %19 : vector<1x8x512xf32> to vector<8x512xf32>
    %21 = arith.addf %17, %20 : vector<8x512xf32>
    %22 = arith.index_cast %16 : i32 to index
    %c0_22 = arith.constant 0 : index
    %c512 = arith.constant 512 : index
    %23 = vector.load %arg8[%22, %c0_22, %c512] : memref<8x8x1024xf32, #tpu.memory_space<vmem>>, vector<1x8x512xf32>
    %24 = vector.shape_cast %23 : vector<1x8x512xf32> to vector<8x512xf32>
    %25 = arith.addf %21, %24 : vector<8x512xf32>
    %26 = vector.extract_strided_slice %25 {offsets = [0, 0], sizes = [8, 128], strides = [1, 1]} : vector<8x512xf32> to vector<8x128xf32>
    %27 = arith.negf %26 : vector<8x128xf32>
    %28 = math.exp %27 : vector<8x128xf32>
    %cst_23 = arith.constant 1.000000e+00 : f32
    %29 = vector.broadcast %cst_23 : f32 to vector<8x128xf32>
    %30 = arith.addf %29, %28 : vector<8x128xf32>
    %31 = arith.divf %29, %30 : vector<8x128xf32>
    %32 = vector.extract_strided_slice %25 {offsets = [0, 128], sizes = [8, 128], strides = [1, 1]} : vector<8x512xf32> to vector<8x128xf32>
    %33 = arith.negf %32 : vector<8x128xf32>
    %34 = math.exp %33 : vector<8x128xf32>
    %cst_24 = arith.constant 1.000000e+00 : f32
    %35 = vector.broadcast %cst_24 : f32 to vector<8x128xf32>
    %36 = arith.addf %35, %34 : vector<8x128xf32>
    %37 = arith.divf %35, %36 : vector<8x128xf32>
    %38 = vector.extract_strided_slice %25 {offsets = [0, 256], sizes = [8, 128], strides = [1, 1]} : vector<8x512xf32> to vector<8x128xf32>
    %39 = math.tanh %38 : vector<8x128xf32>
    %40 = vector.extract_strided_slice %25 {offsets = [0, 384], sizes = [8, 128], strides = [1, 1]} : vector<8x512xf32> to vector<8x128xf32>
    %41 = arith.negf %40 : vector<8x128xf32>
    %42 = math.exp %41 : vector<8x128xf32>
    %cst_25 = arith.constant 1.000000e+00 : f32
    %43 = vector.broadcast %cst_25 : f32 to vector<8x128xf32>
    %44 = arith.addf %43, %42 : vector<8x128xf32>
    %45 = arith.divf %43, %44 : vector<8x128xf32>
    %46 = arith.mulf %37, %15 : vector<8x128xf32>
    %47 = arith.mulf %31, %39 : vector<8x128xf32>
    %48 = arith.addf %46, %47 : vector<8x128xf32>
    %49 = math.tanh %48 : vector<8x128xf32>
    %50 = arith.mulf %45, %49 : vector<8x128xf32>
    %cst_26 = arith.constant dense<0.000000e+00> : vector<8x256xf32>
    %51 = tpu.matmul %50, %14, %cst_26 {dimension_numbers = #tpu.dot_dimension_numbers<[1], [0], [0], [1], [0, 0, 1, 1], [], []>} : vector<8x128xf32>, vector<128x256xf32>, vector<8x256xf32> -> vector<8x256xf32>
    %52 = arith.index_cast %c0_i32 : i32 to index
    %c0_27 = arith.constant 0 : index
    %c0_28 = arith.constant 0 : index
    %53 = vector.load %arg7[%52, %c0_27, %c0_28] : memref<8x8x128xf32, #tpu.memory_space<vmem>>, vector<1x8x128xf32>
    %54 = vector.shape_cast %53 : vector<1x8x128xf32> to vector<8x128xf32>
    %55 = vector.extract_strided_slice %51 {offsets = [0, 0], sizes = [8, 128], strides = [1, 1]} : vector<8x256xf32> to vector<8x128xf32>
    %56 = arith.addf %54, %55 : vector<8x128xf32>
    %57 = arith.index_cast %c0_i32 : i32 to index
    %c0_29 = arith.constant 0 : index
    %c0_30 = arith.constant 0 : index
    %58 = vector.load %arg7[%57, %c0_29, %c0_30] : memref<8x8x128xf32, #tpu.memory_space<vmem>>, vector<1x8x128xf32>
    %59 = vector.shape_cast %58 : vector<1x8x128xf32> to vector<8x128xf32>
    %60 = vector.shape_cast %56 : vector<8x128xf32> to vector<1x8x128xf32>
    tpu.vector_store %arg7[%57, %c0_29, %c0_30], %60 {strides = array<i32>} : memref<8x8x128xf32, #tpu.memory_space<vmem>>, vector<1x8x128xf32>,
    %61 = arith.index_cast %16 : i32 to index
    %c0_31 = arith.constant 0 : index
    %c0_32 = arith.constant 0 : index
    %62 = vector.load %arg7[%61, %c0_31, %c0_32] : memref<8x8x128xf32, #tpu.memory_space<vmem>>, vector<1x8x128xf32>
    %63 = vector.shape_cast %62 : vector<1x8x128xf32> to vector<8x128xf32>
    %64 = vector.extract_strided_slice %51 {offsets = [0, 128], sizes = [8, 128], strides = [1, 1]} : vector<8x256xf32> to vector<8x128xf32>
    %65 = arith.addf %63, %64 : vector<8x128xf32>
    %66 = arith.index_cast %16 : i32 to index
    %c0_33 = arith.constant 0 : index
    %c0_34 = arith.constant 0 : index
    %67 = vector.load %arg7[%66, %c0_33, %c0_34] : memref<8x8x128xf32, #tpu.memory_space<vmem>>, vector<1x8x128xf32>
    %68 = vector.shape_cast %67 : vector<1x8x128xf32> to vector<8x128xf32>
    %69 = vector.shape_cast %65 : vector<8x128xf32> to vector<1x8x128xf32>
    tpu.vector_store %arg7[%66, %c0_33, %c0_34], %69 {strides = array<i32>} : memref<8x8x128xf32, #tpu.memory_space<vmem>>, vector<1x8x128xf32>,
    %c1_i32 = arith.constant 1 : i32
    %c7_i32_35 = arith.constant 7 : i32
    %70 = arith.subi %c7_i32_35, %c1_i32 : i32
    %cst_36 = arith.constant dense<0.000000e+00> : vector<8x512xf32>
    %71 = tpu.matmul %50, %13, %cst_36 {dimension_numbers = #tpu.dot_dimension_numbers<[1], [0], [0], [1], [0, 0, 1, 1], [], []>} : vector<8x128xf32>, vector<128x512xf32>, vector<8x512xf32> -> vector<8x512xf32>
    %72 = arith.index_cast %c1_i32 : i32 to index
    %c0_37 = arith.constant 0 : index
    %c0_38 = arith.constant 0 : index
    %73 = vector.load %arg8[%72, %c0_37, %c0_38] : memref<8x8x1024xf32, #tpu.memory_space<vmem>>, vector<1x8x512xf32>
    %74 = vector.shape_cast %73 : vector<1x8x512xf32> to vector<8x512xf32>
    %75 = arith.addf %71, %74 : vector<8x512xf32>
    %76 = arith.index_cast %70 : i32 to index
    %c0_39 = arith.constant 0 : index
    %c512_40 = arith.constant 512 : index
    %77 = vector.load %arg8[%76, %c0_39, %c512_40] : memref<8x8x1024xf32, #tpu.memory_space<vmem>>, vector<1x8x512xf32>
    %78 = vector.shape_cast %77 : vector<1x8x512xf32> to vector<8x512xf32>
    %79 = arith.addf %75, %78 : vector<8x512xf32>
    %80 = vector.extract_strided_slice %79 {offsets = [0, 0], sizes = [8, 128], strides = [1, 1]} : vector<8x512xf32> to vector<8x128xf32>
    %81 = arith.negf %80 : vector<8x128xf32>
    %82 = math.exp %81 : vector<8x128xf32>
    %cst_41 = arith.constant 1.000000e+00 : f32
    %83 = vector.broadcast %cst_41 : f32 to vector<8x128xf32>
    %84 = arith.addf %83, %82 : vector<8x128xf32>
    %85 = arith.divf %83, %84 : vector<8x128xf32>
    %86 = vector.extract_strided_slice %79 {offsets = [0, 128], sizes = [8, 128], strides = [1, 1]} : vector<8x512xf32> to vector<8x128xf32>
    %87 = arith.negf %86 : vector<8x128xf32>
    %88 = math.exp %87 : vector<8x128xf32>
    %cst_42 = arith.constant 1.000000e+00 : f32
    %89 = vector.broadcast %cst_42 : f32 to vector<8x128xf32>
    %90 = arith.addf %89, %88 : vector<8x128xf32>
    %91 = arith.divf %89, %90 : vector<8x128xf32>
    %92 = vector.extract_strided_slice %79 {offsets = [0, 256], sizes = [8, 128], strides = [1, 1]} : vector<8x512xf32> to vector<8x128xf32>
    %93 = math.tanh %92 : vector<8x128xf32>
    %94 = vector.extract_strided_slice %79 {offsets = [0, 384], sizes = [8, 128], strides = [1, 1]} : vector<8x512xf32> to vector<8x128xf32>
    %95 = arith.negf %94 : vector<8x128xf32>
    %96 = math.exp %95 : vector<8x128xf32>
    %cst_43 = arith.constant 1.000000e+00 : f32
    %97 = vector.broadcast %cst_43 : f32 to vector<8x128xf32>
    %98 = arith.addf %97, %96 : vector<8x128xf32>
    %99 = arith.divf %97, %98 : vector<8x128xf32>
    %100 = arith.mulf %91, %48 : vector<8x128xf32>
    %101 = arith.mulf %85, %93 : vector<8x128xf32>
    %102 = arith.addf %100, %101 : vector<8x128xf32>
    %103 = math.tanh %102 : vector<8x128xf32>
    %104 = arith.mulf %99, %103 : vector<8x128xf32>
    %cst_44 = arith.constant dense<0.000000e+00> : vector<8x256xf32>
    %105 = tpu.matmul %104, %14, %cst_44 {dimension_numbers = #tpu.dot_dimension_numbers<[1], [0], [0], [1], [0, 0, 1, 1], [], []>} : vector<8x128xf32>, vector<128x256xf32>, vector<8x256xf32> -> vector<8x256xf32>
    %106 = arith.index_cast %c1_i32 : i32 to index
    %c0_45 = arith.constant 0 : index
    %c0_46 = arith.constant 0 : index
    %107 = vector.load %arg7[%106, %c0_45, %c0_46] : memref<8x8x128xf32, #tpu.memory_space<vmem>>, vector<1x8x128xf32>
    %108 = vector.shape_cast %107 : vector<1x8x128xf32> to vector<8x128xf32>
    %109 = vector.extract_strided_slice %105 {offsets = [0, 0], sizes = [8, 128], strides = [1, 1]} : vector<8x256xf32> to vector<8x128xf32>
    %110 = arith.addf %108, %109 : vector<8x128xf32>
    %111 = arith.index_cast %c1_i32 : i32 to index
    %c0_47 = arith.constant 0 : index
    %c0_48 = arith.constant 0 : index
    %112 = vector.load %arg7[%111, %c0_47, %c0_48] : memref<8x8x128xf32, #tpu.memory_space<vmem>>, vector<1x8x128xf32>
    %113 = vector.shape_cast %112 : vector<1x8x128xf32> to vector<8x128xf32>
    %114 = vector.shape_cast %110 : vector<8x128xf32> to vector<1x8x128xf32>
    tpu.vector_store %arg7[%111, %c0_47, %c0_48], %114 {strides = array<i32>} : memref<8x8x128xf32, #tpu.memory_space<vmem>>, vector<1x8x128xf32>,
    %115 = arith.index_cast %70 : i32 to index
    %c0_49 = arith.constant 0 : index
    %c0_50 = arith.constant 0 : index
    %116 = vector.load %arg7[%115, %c0_49, %c0_50] : memref<8x8x128xf32, #tpu.memory_space<vmem>>, vector<1x8x128xf32>
    %117 = vector.shape_cast %116 : vector<1x8x128xf32> to vector<8x128xf32>
    %118 = vector.extract_strided_slice %105 {offsets = [0, 128], sizes = [8, 128], strides = [1, 1]} : vector<8x256xf32> to vector<8x128xf32>
    %119 = arith.addf %117, %118 : vector<8x128xf32>
    %120 = arith.index_cast %70 : i32 to index
    %c0_51 = arith.constant 0 : index
    %c0_52 = arith.constant 0 : index
    %121 = vector.load %arg7[%120, %c0_51, %c0_52] : memref<8x8x128xf32, #tpu.memory_space<vmem>>, vector<1x8x128xf32>
    %122 = vector.shape_cast %121 : vector<1x8x128xf32> to vector<8x128xf32>
    %123 = vector.shape_cast %119 : vector<8x128xf32> to vector<1x8x128xf32>
    tpu.vector_store %arg7[%120, %c0_51, %c0_52], %123 {strides = array<i32>} : memref<8x8x128xf32, #tpu.memory_space<vmem>>, vector<1x8x128xf32>,
    %c2_i32 = arith.constant 2 : i32
    %c7_i32_53 = arith.constant 7 : i32
    %124 = arith.subi %c7_i32_53, %c2_i32 : i32
    %cst_54 = arith.constant dense<0.000000e+00> : vector<8x512xf32>
    %125 = tpu.matmul %104, %13, %cst_54 {dimension_numbers = #tpu.dot_dimension_numbers<[1], [0], [0], [1], [0, 0, 1, 1], [], []>} : vector<8x128xf32>, vector<128x512xf32>, vector<8x512xf32> -> vector<8x512xf32>
    %126 = arith.index_cast %c2_i32 : i32 to index
    %c0_55 = arith.constant 0 : index
    %c0_56 = arith.constant 0 : index
    %127 = vector.load %arg8[%126, %c0_55, %c0_56] : memref<8x8x1024xf32, #tpu.memory_space<vmem>>, vector<1x8x512xf32>
    %128 = vector.shape_cast %127 : vector<1x8x512xf32> to vector<8x512xf32>
    %129 = arith.addf %125, %128 : vector<8x512xf32>
    %130 = arith.index_cast %124 : i32 to index
    %c0_57 = arith.constant 0 : index
    %c512_58 = arith.constant 512 : index
    %131 = vector.load %arg8[%130, %c0_57, %c512_58] : memref<8x8x1024xf32, #tpu.memory_space<vmem>>, vector<1x8x512xf32>
    %132 = vector.shape_cast %131 : vector<1x8x512xf32> to vector<8x512xf32>
    %133 = arith.addf %129, %132 : vector<8x512xf32>
    %134 = vector.extract_strided_slice %133 {offsets = [0, 0], sizes = [8, 128], strides = [1, 1]} : vector<8x512xf32> to vector<8x128xf32>
    %135 = arith.negf %134 : vector<8x128xf32>
    %136 = math.exp %135 : vector<8x128xf32>
    %cst_59 = arith.constant 1.000000e+00 : f32
    %137 = vector.broadcast %cst_59 : f32 to vector<8x128xf32>
    %138 = arith.addf %137, %136 : vector<8x128xf32>
    %139 = arith.divf %137, %138 : vector<8x128xf32>
    %140 = vector.extract_strided_slice %133 {offsets = [0, 128], sizes = [8, 128], strides = [1, 1]} : vector<8x512xf32> to vector<8x128xf32>
    %141 = arith.negf %140 : vector<8x128xf32>
    %142 = math.exp %141 : vector<8x128xf32>
    %cst_60 = arith.constant 1.000000e+00 : f32
    %143 = vector.broadcast %cst_60 : f32 to vector<8x128xf32>
    %144 = arith.addf %143, %142 : vector<8x128xf32>
    %145 = arith.divf %143, %144 : vector<8x128xf32>
    %146 = vector.extract_strided_slice %133 {offsets = [0, 256], sizes = [8, 128], strides = [1, 1]} : vector<8x512xf32> to vector<8x128xf32>
    %147 = math.tanh %146 : vector<8x128xf32>
    %148 = vector.extract_strided_slice %133 {offsets = [0, 384], sizes = [8, 128], strides = [1, 1]} : vector<8x512xf32> to vector<8x128xf32>
    %149 = arith.negf %148 : vector<8x128xf32>
    %150 = math.exp %149 : vector<8x128xf32>
    %cst_61 = arith.constant 1.000000e+00 : f32
    %151 = vector.broadcast %cst_61 : f32 to vector<8x128xf32>
    %152 = arith.addf %151, %150 : vector<8x128xf32>
    %153 = arith.divf %151, %152 : vector<8x128xf32>
    %154 = arith.mulf %145, %102 : vector<8x128xf32>
    %155 = arith.mulf %139, %147 : vector<8x128xf32>
    %156 = arith.addf %154, %155 : vector<8x128xf32>
    %157 = math.tanh %156 : vector<8x128xf32>
    %158 = arith.mulf %153, %157 : vector<8x128xf32>
    %cst_62 = arith.constant dense<0.000000e+00> : vector<8x256xf32>
    %159 = tpu.matmul %158, %14, %cst_62 {dimension_numbers = #tpu.dot_dimension_numbers<[1], [0], [0], [1], [0, 0, 1, 1], [], []>} : vector<8x128xf32>, vector<128x256xf32>, vector<8x256xf32> -> vector<8x256xf32>
    %160 = arith.index_cast %c2_i32 : i32 to index
    %c0_63 = arith.constant 0 : index
    %c0_64 = arith.constant 0 : index
    %161 = vector.load %arg7[%160, %c0_63, %c0_64] : memref<8x8x128xf32, #tpu.memory_space<vmem>>, vector<1x8x128xf32>
    %162 = vector.shape_cast %161 : vector<1x8x128xf32> to vector<8x128xf32>
    %163 = vector.extract_strided_slice %159 {offsets = [0, 0], sizes = [8, 128], strides = [1, 1]} : vector<8x256xf32> to vector<8x128xf32>
    %164 = arith.addf %162, %163 : vector<8x128xf32>
    %165 = arith.index_cast %c2_i32 : i32 to index
    %c0_65 = arith.constant 0 : index
    %c0_66 = arith.constant 0 : index
    %166 = vector.load %arg7[%165, %c0_65, %c0_66] : memref<8x8x128xf32, #tpu.memory_space<vmem>>, vector<1x8x128xf32>
    %167 = vector.shape_cast %166 : vector<1x8x128xf32> to vector<8x128xf32>
    %168 = vector.shape_cast %164 : vector<8x128xf32> to vector<1x8x128xf32>
    tpu.vector_store %arg7[%165, %c0_65, %c0_66], %168 {strides = array<i32>} : memref<8x8x128xf32, #tpu.memory_space<vmem>>, vector<1x8x128xf32>,
    %169 = arith.index_cast %124 : i32 to index
    %c0_67 = arith.constant 0 : index
    %c0_68 = arith.constant 0 : index
    %170 = vector.load %arg7[%169, %c0_67, %c0_68] : memref<8x8x128xf32, #tpu.memory_space<vmem>>, vector<1x8x128xf32>
    %171 = vector.shape_cast %170 : vector<1x8x128xf32> to vector<8x128xf32>
    %172 = vector.extract_strided_slice %159 {offsets = [0, 128], sizes = [8, 128], strides = [1, 1]} : vector<8x256xf32> to vector<8x128xf32>
    %173 = arith.addf %171, %172 : vector<8x128xf32>
    %174 = arith.index_cast %124 : i32 to index
    %c0_69 = arith.constant 0 : index
    %c0_70 = arith.constant 0 : index
    %175 = vector.load %arg7[%174, %c0_69, %c0_70] : memref<8x8x128xf32, #tpu.memory_space<vmem>>, vector<1x8x128xf32>
    %176 = vector.shape_cast %175 : vector<1x8x128xf32> to vector<8x128xf32>
    %177 = vector.shape_cast %173 : vector<8x128xf32> to vector<1x8x128xf32>
    tpu.vector_store %arg7[%174, %c0_69, %c0_70], %177 {strides = array<i32>} : memref<8x8x128xf32, #tpu.memory_space<vmem>>, vector<1x8x128xf32>,
    %c3_i32 = arith.constant 3 : i32
    %c7_i32_71 = arith.constant 7 : i32
    %178 = arith.subi %c7_i32_71, %c3_i32 : i32
    %cst_72 = arith.constant dense<0.000000e+00> : vector<8x512xf32>
    %179 = tpu.matmul %158, %13, %cst_72 {dimension_numbers = #tpu.dot_dimension_numbers<[1], [0], [0], [1], [0, 0, 1, 1], [], []>} : vector<8x128xf32>, vector<128x512xf32>, vector<8x512xf32> -> vector<8x512xf32>
    %180 = arith.index_cast %c3_i32 : i32 to index
    %c0_73 = arith.constant 0 : index
    %c0_74 = arith.constant 0 : index
    %181 = vector.load %arg8[%180, %c0_73, %c0_74] : memref<8x8x1024xf32, #tpu.memory_space<vmem>>, vector<1x8x512xf32>
    %182 = vector.shape_cast %181 : vector<1x8x512xf32> to vector<8x512xf32>
    %183 = arith.addf %179, %182 : vector<8x512xf32>
    %184 = arith.index_cast %178 : i32 to index
    %c0_75 = arith.constant 0 : index
    %c512_76 = arith.constant 512 : index
    %185 = vector.load %arg8[%184, %c0_75, %c512_76] : memref<8x8x1024xf32, #tpu.memory_space<vmem>>, vector<1x8x512xf32>
    %186 = vector.shape_cast %185 : vector<1x8x512xf32> to vector<8x512xf32>
    %187 = arith.addf %183, %186 : vector<8x512xf32>
    %188 = vector.extract_strided_slice %187 {offsets = [0, 0], sizes = [8, 128], strides = [1, 1]} : vector<8x512xf32> to vector<8x128xf32>
    %189 = arith.negf %188 : vector<8x128xf32>
    %190 = math.exp %189 : vector<8x128xf32>
    %cst_77 = arith.constant 1.000000e+00 : f32
    %191 = vector.broadcast %cst_77 : f32 to vector<8x128xf32>
    %192 = arith.addf %191, %190 : vector<8x128xf32>
    %193 = arith.divf %191, %192 : vector<8x128xf32>
    %194 = vector.extract_strided_slice %187 {offsets = [0, 128], sizes = [8, 128], strides = [1, 1]} : vector<8x512xf32> to vector<8x128xf32>
    %195 = arith.negf %194 : vector<8x128xf32>
    %196 = math.exp %195 : vector<8x128xf32>
    %cst_78 = arith.constant 1.000000e+00 : f32
    %197 = vector.broadcast %cst_78 : f32 to vector<8x128xf32>
    %198 = arith.addf %197, %196 : vector<8x128xf32>
    %199 = arith.divf %197, %198 : vector<8x128xf32>
    %200 = vector.extract_strided_slice %187 {offsets = [0, 256], sizes = [8, 128], strides = [1, 1]} : vector<8x512xf32> to vector<8x128xf32>
    %201 = math.tanh %200 : vector<8x128xf32>
    %202 = vector.extract_strided_slice %187 {offsets = [0, 384], sizes = [8, 128], strides = [1, 1]} : vector<8x512xf32> to vector<8x128xf32>
    %203 = arith.negf %202 : vector<8x128xf32>
    %204 = math.exp %203 : vector<8x128xf32>
    %cst_79 = arith.constant 1.000000e+00 : f32
    %205 = vector.broadcast %cst_79 : f32 to vector<8x128xf32>
    %206 = arith.addf %205, %204 : vector<8x128xf32>
    %207 = arith.divf %205, %206 : vector<8x128xf32>
    %208 = arith.mulf %199, %156 : vector<8x128xf32>
    %209 = arith.mulf %193, %201 : vector<8x128xf32>
    %210 = arith.addf %208, %209 : vector<8x128xf32>
    %211 = math.tanh %210 : vector<8x128xf32>
    %212 = arith.mulf %207, %211 : vector<8x128xf32>
    %cst_80 = arith.constant dense<0.000000e+00> : vector<8x256xf32>
    %213 = tpu.matmul %212, %14, %cst_80 {dimension_numbers = #tpu.dot_dimension_numbers<[1], [0], [0], [1], [0, 0, 1, 1], [], []>} : vector<8x128xf32>, vector<128x256xf32>, vector<8x256xf32> -> vector<8x256xf32>
    %214 = arith.index_cast %c3_i32 : i32 to index
    %c0_81 = arith.constant 0 : index
    %c0_82 = arith.constant 0 : index
    %215 = vector.load %arg7[%214, %c0_81, %c0_82] : memref<8x8x128xf32, #tpu.memory_space<vmem>>, vector<1x8x128xf32>
    %216 = vector.shape_cast %215 : vector<1x8x128xf32> to vector<8x128xf32>
    %217 = vector.extract_strided_slice %213 {offsets = [0, 0], sizes = [8, 128], strides = [1, 1]} : vector<8x256xf32> to vector<8x128xf32>
    %218 = arith.addf %216, %217 : vector<8x128xf32>
    %219 = arith.index_cast %c3_i32 : i32 to index
    %c0_83 = arith.constant 0 : index
    %c0_84 = arith.constant 0 : index
    %220 = vector.load %arg7[%219, %c0_83, %c0_84] : memref<8x8x128xf32, #tpu.memory_space<vmem>>, vector<1x8x128xf32>
    %221 = vector.shape_cast %220 : vector<1x8x128xf32> to vector<8x128xf32>
    %222 = vector.shape_cast %218 : vector<8x128xf32> to vector<1x8x128xf32>
    tpu.vector_store %arg7[%219, %c0_83, %c0_84], %222 {strides = array<i32>} : memref<8x8x128xf32, #tpu.memory_space<vmem>>, vector<1x8x128xf32>,
    %223 = arith.index_cast %178 : i32 to index
    %c0_85 = arith.constant 0 : index
    %c0_86 = arith.constant 0 : index
    %224 = vector.load %arg7[%223, %c0_85, %c0_86] : memref<8x8x128xf32, #tpu.memory_space<vmem>>, vector<1x8x128xf32>
    %225 = vector.shape_cast %224 : vector<1x8x128xf32> to vector<8x128xf32>
    %226 = vector.extract_strided_slice %213 {offsets = [0, 128], sizes = [8, 128], strides = [1, 1]} : vector<8x256xf32> to vector<8x128xf32>
    %227 = arith.addf %225, %226 : vector<8x128xf32>
    %228 = arith.index_cast %178 : i32 to index
    %c0_87 = arith.constant 0 : index
    %c0_88 = arith.constant 0 : index
    %229 = vector.load %arg7[%228, %c0_87, %c0_88] : memref<8x8x128xf32, #tpu.memory_space<vmem>>, vector<1x8x128xf32>
    %230 = vector.shape_cast %229 : vector<1x8x128xf32> to vector<8x128xf32>
    %231 = vector.shape_cast %227 : vector<8x128xf32> to vector<1x8x128xf32>
    tpu.vector_store %arg7[%228, %c0_87, %c0_88], %231 {strides = array<i32>} : memref<8x8x128xf32, #tpu.memory_space<vmem>>, vector<1x8x128xf32>,
    %c4_i32 = arith.constant 4 : i32
    %c7_i32_89 = arith.constant 7 : i32
    %232 = arith.subi %c7_i32_89, %c4_i32 : i32
    %cst_90 = arith.constant dense<0.000000e+00> : vector<8x512xf32>
    %233 = tpu.matmul %212, %13, %cst_90 {dimension_numbers = #tpu.dot_dimension_numbers<[1], [0], [0], [1], [0, 0, 1, 1], [], []>} : vector<8x128xf32>, vector<128x512xf32>, vector<8x512xf32> -> vector<8x512xf32>
    %234 = arith.index_cast %c4_i32 : i32 to index
    %c0_91 = arith.constant 0 : index
    %c0_92 = arith.constant 0 : index
    %235 = vector.load %arg8[%234, %c0_91, %c0_92] : memref<8x8x1024xf32, #tpu.memory_space<vmem>>, vector<1x8x512xf32>
    %236 = vector.shape_cast %235 : vector<1x8x512xf32> to vector<8x512xf32>
    %237 = arith.addf %233, %236 : vector<8x512xf32>
    %238 = arith.index_cast %232 : i32 to index
    %c0_93 = arith.constant 0 : index
    %c512_94 = arith.constant 512 : index
    %239 = vector.load %arg8[%238, %c0_93, %c512_94] : memref<8x8x1024xf32, #tpu.memory_space<vmem>>, vector<1x8x512xf32>
    %240 = vector.shape_cast %239 : vector<1x8x512xf32> to vector<8x512xf32>
    %241 = arith.addf %237, %240 : vector<8x512xf32>
    %242 = vector.extract_strided_slice %241 {offsets = [0, 0], sizes = [8, 128], strides = [1, 1]} : vector<8x512xf32> to vector<8x128xf32>
    %243 = arith.negf %242 : vector<8x128xf32>
    %244 = math.exp %243 : vector<8x128xf32>
    %cst_95 = arith.constant 1.000000e+00 : f32
    %245 = vector.broadcast %cst_95 : f32 to vector<8x128xf32>
    %246 = arith.addf %245, %244 : vector<8x128xf32>
    %247 = arith.divf %245, %246 : vector<8x128xf32>
    %248 = vector.extract_strided_slice %241 {offsets = [0, 128], sizes = [8, 128], strides = [1, 1]} : vector<8x512xf32> to vector<8x128xf32>
    %249 = arith.negf %248 : vector<8x128xf32>
    %250 = math.exp %249 : vector<8x128xf32>
    %cst_96 = arith.constant 1.000000e+00 : f32
    %251 = vector.broadcast %cst_96 : f32 to vector<8x128xf32>
    %252 = arith.addf %251, %250 : vector<8x128xf32>
    %253 = arith.divf %251, %252 : vector<8x128xf32>
    %254 = vector.extract_strided_slice %241 {offsets = [0, 256], sizes = [8, 128], strides = [1, 1]} : vector<8x512xf32> to vector<8x128xf32>
    %255 = math.tanh %254 : vector<8x128xf32>
    %256 = vector.extract_strided_slice %241 {offsets = [0, 384], sizes = [8, 128], strides = [1, 1]} : vector<8x512xf32> to vector<8x128xf32>
    %257 = arith.negf %256 : vector<8x128xf32>
    %258 = math.exp %257 : vector<8x128xf32>
    %cst_97 = arith.constant 1.000000e+00 : f32
    %259 = vector.broadcast %cst_97 : f32 to vector<8x128xf32>
    %260 = arith.addf %259, %258 : vector<8x128xf32>
    %261 = arith.divf %259, %260 : vector<8x128xf32>
    %262 = arith.mulf %253, %210 : vector<8x128xf32>
    %263 = arith.mulf %247, %255 : vector<8x128xf32>
    %264 = arith.addf %262, %263 : vector<8x128xf32>
    %265 = math.tanh %264 : vector<8x128xf32>
    %266 = arith.mulf %261, %265 : vector<8x128xf32>
    %cst_98 = arith.constant dense<0.000000e+00> : vector<8x256xf32>
    %267 = tpu.matmul %266, %14, %cst_98 {dimension_numbers = #tpu.dot_dimension_numbers<[1], [0], [0], [1], [0, 0, 1, 1], [], []>} : vector<8x128xf32>, vector<128x256xf32>, vector<8x256xf32> -> vector<8x256xf32>
    %268 = arith.index_cast %c4_i32 : i32 to index
    %c0_99 = arith.constant 0 : index
    %c0_100 = arith.constant 0 : index
    %269 = vector.load %arg7[%268, %c0_99, %c0_100] : memref<8x8x128xf32, #tpu.memory_space<vmem>>, vector<1x8x128xf32>
    %270 = vector.shape_cast %269 : vector<1x8x128xf32> to vector<8x128xf32>
    %271 = vector.extract_strided_slice %267 {offsets = [0, 0], sizes = [8, 128], strides = [1, 1]} : vector<8x256xf32> to vector<8x128xf32>
    %272 = arith.addf %270, %271 : vector<8x128xf32>
    %273 = arith.index_cast %c4_i32 : i32 to index
    %c0_101 = arith.constant 0 : index
    %c0_102 = arith.constant 0 : index
    %274 = vector.load %arg7[%273, %c0_101, %c0_102] : memref<8x8x128xf32, #tpu.memory_space<vmem>>, vector<1x8x128xf32>
    %275 = vector.shape_cast %274 : vector<1x8x128xf32> to vector<8x128xf32>
    %276 = vector.shape_cast %272 : vector<8x128xf32> to vector<1x8x128xf32>
    tpu.vector_store %arg7[%273, %c0_101, %c0_102], %276 {strides = array<i32>} : memref<8x8x128xf32, #tpu.memory_space<vmem>>, vector<1x8x128xf32>,
    %277 = arith.index_cast %232 : i32 to index
    %c0_103 = arith.constant 0 : index
    %c0_104 = arith.constant 0 : index
    %278 = vector.load %arg7[%277, %c0_103, %c0_104] : memref<8x8x128xf32, #tpu.memory_space<vmem>>, vector<1x8x128xf32>
    %279 = vector.shape_cast %278 : vector<1x8x128xf32> to vector<8x128xf32>
    %280 = vector.extract_strided_slice %267 {offsets = [0, 128], sizes = [8, 128], strides = [1, 1]} : vector<8x256xf32> to vector<8x128xf32>
    %281 = arith.addf %279, %280 : vector<8x128xf32>
    %282 = arith.index_cast %232 : i32 to index
    %c0_105 = arith.constant 0 : index
    %c0_106 = arith.constant 0 : index
    %283 = vector.load %arg7[%282, %c0_105, %c0_106] : memref<8x8x128xf32, #tpu.memory_space<vmem>>, vector<1x8x128xf32>
    %284 = vector.shape_cast %283 : vector<1x8x128xf32> to vector<8x128xf32>
    %285 = vector.shape_cast %281 : vector<8x128xf32> to vector<1x8x128xf32>
    tpu.vector_store %arg7[%282, %c0_105, %c0_106], %285 {strides = array<i32>} : memref<8x8x128xf32, #tpu.memory_space<vmem>>, vector<1x8x128xf32>,
    %c5_i32 = arith.constant 5 : i32
    %c7_i32_107 = arith.constant 7 : i32
    %286 = arith.subi %c7_i32_107, %c5_i32 : i32
    %cst_108 = arith.constant dense<0.000000e+00> : vector<8x512xf32>
    %287 = tpu.matmul %266, %13, %cst_108 {dimension_numbers = #tpu.dot_dimension_numbers<[1], [0], [0], [1], [0, 0, 1, 1], [], []>} : vector<8x128xf32>, vector<128x512xf32>, vector<8x512xf32> -> vector<8x512xf32>
    %288 = arith.index_cast %c5_i32 : i32 to index
    %c0_109 = arith.constant 0 : index
    %c0_110 = arith.constant 0 : index
    %289 = vector.load %arg8[%288, %c0_109, %c0_110] : memref<8x8x1024xf32, #tpu.memory_space<vmem>>, vector<1x8x512xf32>
    %290 = vector.shape_cast %289 : vector<1x8x512xf32> to vector<8x512xf32>
    %291 = arith.addf %287, %290 : vector<8x512xf32>
    %292 = arith.index_cast %286 : i32 to index
    %c0_111 = arith.constant 0 : index
    %c512_112 = arith.constant 512 : index
    %293 = vector.load %arg8[%292, %c0_111, %c512_112] : memref<8x8x1024xf32, #tpu.memory_space<vmem>>, vector<1x8x512xf32>
    %294 = vector.shape_cast %293 : vector<1x8x512xf32> to vector<8x512xf32>
    %295 = arith.addf %291, %294 : vector<8x512xf32>
    %296 = vector.extract_strided_slice %295 {offsets = [0, 0], sizes = [8, 128], strides = [1, 1]} : vector<8x512xf32> to vector<8x128xf32>
    %297 = arith.negf %296 : vector<8x128xf32>
    %298 = math.exp %297 : vector<8x128xf32>
    %cst_113 = arith.constant 1.000000e+00 : f32
    %299 = vector.broadcast %cst_113 : f32 to vector<8x128xf32>
    %300 = arith.addf %299, %298 : vector<8x128xf32>
    %301 = arith.divf %299, %300 : vector<8x128xf32>
    %302 = vector.extract_strided_slice %295 {offsets = [0, 128], sizes = [8, 128], strides = [1, 1]} : vector<8x512xf32> to vector<8x128xf32>
    %303 = arith.negf %302 : vector<8x128xf32>
    %304 = math.exp %303 : vector<8x128xf32>
    %cst_114 = arith.constant 1.000000e+00 : f32
    %305 = vector.broadcast %cst_114 : f32 to vector<8x128xf32>
    %306 = arith.addf %305, %304 : vector<8x128xf32>
    %307 = arith.divf %305, %306 : vector<8x128xf32>
    %308 = vector.extract_strided_slice %295 {offsets = [0, 256], sizes = [8, 128], strides = [1, 1]} : vector<8x512xf32> to vector<8x128xf32>
    %309 = math.tanh %308 : vector<8x128xf32>
    %310 = vector.extract_strided_slice %295 {offsets = [0, 384], sizes = [8, 128], strides = [1, 1]} : vector<8x512xf32> to vector<8x128xf32>
    %311 = arith.negf %310 : vector<8x128xf32>
    %312 = math.exp %311 : vector<8x128xf32>
    %cst_115 = arith.constant 1.000000e+00 : f32
    %313 = vector.broadcast %cst_115 : f32 to vector<8x128xf32>
    %314 = arith.addf %313, %312 : vector<8x128xf32>
    %315 = arith.divf %313, %314 : vector<8x128xf32>
    %316 = arith.mulf %307, %264 : vector<8x128xf32>
    %317 = arith.mulf %301, %309 : vector<8x128xf32>
    %318 = arith.addf %316, %317 : vector<8x128xf32>
    %319 = math.tanh %318 : vector<8x128xf32>
    %320 = arith.mulf %315, %319 : vector<8x128xf32>
    %cst_116 = arith.constant dense<0.000000e+00> : vector<8x256xf32>
    %321 = tpu.matmul %320, %14, %cst_116 {dimension_numbers = #tpu.dot_dimension_numbers<[1], [0], [0], [1], [0, 0, 1, 1], [], []>} : vector<8x128xf32>, vector<128x256xf32>, vector<8x256xf32> -> vector<8x256xf32>
    %322 = arith.index_cast %c5_i32 : i32 to index
    %c0_117 = arith.constant 0 : index
    %c0_118 = arith.constant 0 : index
    %323 = vector.load %arg7[%322, %c0_117, %c0_118] : memref<8x8x128xf32, #tpu.memory_space<vmem>>, vector<1x8x128xf32>
    %324 = vector.shape_cast %323 : vector<1x8x128xf32> to vector<8x128xf32>
    %325 = vector.extract_strided_slice %321 {offsets = [0, 0], sizes = [8, 128], strides = [1, 1]} : vector<8x256xf32> to vector<8x128xf32>
    %326 = arith.addf %324, %325 : vector<8x128xf32>
    %327 = arith.index_cast %c5_i32 : i32 to index
    %c0_119 = arith.constant 0 : index
    %c0_120 = arith.constant 0 : index
    %328 = vector.load %arg7[%327, %c0_119, %c0_120] : memref<8x8x128xf32, #tpu.memory_space<vmem>>, vector<1x8x128xf32>
    %329 = vector.shape_cast %328 : vector<1x8x128xf32> to vector<8x128xf32>
    %330 = vector.shape_cast %326 : vector<8x128xf32> to vector<1x8x128xf32>
    tpu.vector_store %arg7[%327, %c0_119, %c0_120], %330 {strides = array<i32>} : memref<8x8x128xf32, #tpu.memory_space<vmem>>, vector<1x8x128xf32>,
    %331 = arith.index_cast %286 : i32 to index
    %c0_121 = arith.constant 0 : index
    %c0_122 = arith.constant 0 : index
    %332 = vector.load %arg7[%331, %c0_121, %c0_122] : memref<8x8x128xf32, #tpu.memory_space<vmem>>, vector<1x8x128xf32>
    %333 = vector.shape_cast %332 : vector<1x8x128xf32> to vector<8x128xf32>
    %334 = vector.extract_strided_slice %321 {offsets = [0, 128], sizes = [8, 128], strides = [1, 1]} : vector<8x256xf32> to vector<8x128xf32>
    %335 = arith.addf %333, %334 : vector<8x128xf32>
    %336 = arith.index_cast %286 : i32 to index
    %c0_123 = arith.constant 0 : index
    %c0_124 = arith.constant 0 : index
    %337 = vector.load %arg7[%336, %c0_123, %c0_124] : memref<8x8x128xf32, #tpu.memory_space<vmem>>, vector<1x8x128xf32>
    %338 = vector.shape_cast %337 : vector<1x8x128xf32> to vector<8x128xf32>
    %339 = vector.shape_cast %335 : vector<8x128xf32> to vector<1x8x128xf32>
    tpu.vector_store %arg7[%336, %c0_123, %c0_124], %339 {strides = array<i32>} : memref<8x8x128xf32, #tpu.memory_space<vmem>>, vector<1x8x128xf32>,
    %c6_i32 = arith.constant 6 : i32
    %c7_i32_125 = arith.constant 7 : i32
    %340 = arith.subi %c7_i32_125, %c6_i32 : i32
    %cst_126 = arith.constant dense<0.000000e+00> : vector<8x512xf32>
    %341 = tpu.matmul %320, %13, %cst_126 {dimension_numbers = #tpu.dot_dimension_numbers<[1], [0], [0], [1], [0, 0, 1, 1], [], []>} : vector<8x128xf32>, vector<128x512xf32>, vector<8x512xf32> -> vector<8x512xf32>
    %342 = arith.index_cast %c6_i32 : i32 to index
    %c0_127 = arith.constant 0 : index
    %c0_128 = arith.constant 0 : index
    %343 = vector.load %arg8[%342, %c0_127, %c0_128] : memref<8x8x1024xf32, #tpu.memory_space<vmem>>, vector<1x8x512xf32>
    %344 = vector.shape_cast %343 : vector<1x8x512xf32> to vector<8x512xf32>
    %345 = arith.addf %341, %344 : vector<8x512xf32>
    %346 = arith.index_cast %340 : i32 to index
    %c0_129 = arith.constant 0 : index
    %c512_130 = arith.constant 512 : index
    %347 = vector.load %arg8[%346, %c0_129, %c512_130] : memref<8x8x1024xf32, #tpu.memory_space<vmem>>, vector<1x8x512xf32>
    %348 = vector.shape_cast %347 : vector<1x8x512xf32> to vector<8x512xf32>
    %349 = arith.addf %345, %348 : vector<8x512xf32>
    %350 = vector.extract_strided_slice %349 {offsets = [0, 0], sizes = [8, 128], strides = [1, 1]} : vector<8x512xf32> to vector<8x128xf32>
    %351 = arith.negf %350 : vector<8x128xf32>
    %352 = math.exp %351 : vector<8x128xf32>
    %cst_131 = arith.constant 1.000000e+00 : f32
    %353 = vector.broadcast %cst_131 : f32 to vector<8x128xf32>
    %354 = arith.addf %353, %352 : vector<8x128xf32>
    %355 = arith.divf %353, %354 : vector<8x128xf32>
    %356 = vector.extract_strided_slice %349 {offsets = [0, 128], sizes = [8, 128], strides = [1, 1]} : vector<8x512xf32> to vector<8x128xf32>
    %357 = arith.negf %356 : vector<8x128xf32>
    %358 = math.exp %357 : vector<8x128xf32>
    %cst_132 = arith.constant 1.000000e+00 : f32
    %359 = vector.broadcast %cst_132 : f32 to vector<8x128xf32>
    %360 = arith.addf %359, %358 : vector<8x128xf32>
    %361 = arith.divf %359, %360 : vector<8x128xf32>
    %362 = vector.extract_strided_slice %349 {offsets = [0, 256], sizes = [8, 128], strides = [1, 1]} : vector<8x512xf32> to vector<8x128xf32>
    %363 = math.tanh %362 : vector<8x128xf32>
    %364 = vector.extract_strided_slice %349 {offsets = [0, 384], sizes = [8, 128], strides = [1, 1]} : vector<8x512xf32> to vector<8x128xf32>
    %365 = arith.negf %364 : vector<8x128xf32>
    %366 = math.exp %365 : vector<8x128xf32>
    %cst_133 = arith.constant 1.000000e+00 : f32
    %367 = vector.broadcast %cst_133 : f32 to vector<8x128xf32>
    %368 = arith.addf %367, %366 : vector<8x128xf32>
    %369 = arith.divf %367, %368 : vector<8x128xf32>
    %370 = arith.mulf %361, %318 : vector<8x128xf32>
    %371 = arith.mulf %355, %363 : vector<8x128xf32>
    %372 = arith.addf %370, %371 : vector<8x128xf32>
    %373 = math.tanh %372 : vector<8x128xf32>
    %374 = arith.mulf %369, %373 : vector<8x128xf32>
    %cst_134 = arith.constant dense<0.000000e+00> : vector<8x256xf32>
    %375 = tpu.matmul %374, %14, %cst_134 {dimension_numbers = #tpu.dot_dimension_numbers<[1], [0], [0], [1], [0, 0, 1, 1], [], []>} : vector<8x128xf32>, vector<128x256xf32>, vector<8x256xf32> -> vector<8x256xf32>
    %376 = arith.index_cast %c6_i32 : i32 to index
    %c0_135 = arith.constant 0 : index
    %c0_136 = arith.constant 0 : index
    %377 = vector.load %arg7[%376, %c0_135, %c0_136] : memref<8x8x128xf32, #tpu.memory_space<vmem>>, vector<1x8x128xf32>
    %378 = vector.shape_cast %377 : vector<1x8x128xf32> to vector<8x128xf32>
    %379 = vector.extract_strided_slice %375 {offsets = [0, 0], sizes = [8, 128], strides = [1, 1]} : vector<8x256xf32> to vector<8x128xf32>
    %380 = arith.addf %378, %379 : vector<8x128xf32>
    %381 = arith.index_cast %c6_i32 : i32 to index
    %c0_137 = arith.constant 0 : index
    %c0_138 = arith.constant 0 : index
    %382 = vector.load %arg7[%381, %c0_137, %c0_138] : memref<8x8x128xf32, #tpu.memory_space<vmem>>, vector<1x8x128xf32>
    %383 = vector.shape_cast %382 : vector<1x8x128xf32> to vector<8x128xf32>
    %384 = vector.shape_cast %380 : vector<8x128xf32> to vector<1x8x128xf32>
    tpu.vector_store %arg7[%381, %c0_137, %c0_138], %384 {strides = array<i32>} : memref<8x8x128xf32, #tpu.memory_space<vmem>>, vector<1x8x128xf32>,
    %385 = arith.index_cast %340 : i32 to index
    %c0_139 = arith.constant 0 : index
    %c0_140 = arith.constant 0 : index
    %386 = vector.load %arg7[%385, %c0_139, %c0_140] : memref<8x8x128xf32, #tpu.memory_space<vmem>>, vector<1x8x128xf32>
    %387 = vector.shape_cast %386 : vector<1x8x128xf32> to vector<8x128xf32>
    %388 = vector.extract_strided_slice %375 {offsets = [0, 128], sizes = [8, 128], strides = [1, 1]} : vector<8x256xf32> to vector<8x128xf32>
    %389 = arith.addf %387, %388 : vector<8x128xf32>
    %390 = arith.index_cast %340 : i32 to index
    %c0_141 = arith.constant 0 : index
    %c0_142 = arith.constant 0 : index
    %391 = vector.load %arg7[%390, %c0_141, %c0_142] : memref<8x8x128xf32, #tpu.memory_space<vmem>>, vector<1x8x128xf32>
    %392 = vector.shape_cast %391 : vector<1x8x128xf32> to vector<8x128xf32>
    %393 = vector.shape_cast %389 : vector<8x128xf32> to vector<1x8x128xf32>
    tpu.vector_store %arg7[%390, %c0_141, %c0_142], %393 {strides = array<i32>} : memref<8x8x128xf32, #tpu.memory_space<vmem>>, vector<1x8x128xf32>,
    %c7_i32_143 = arith.constant 7 : i32
    %c7_i32_144 = arith.constant 7 : i32
    %394 = arith.subi %c7_i32_144, %c7_i32_143 : i32
    %cst_145 = arith.constant dense<0.000000e+00> : vector<8x512xf32>
    %395 = tpu.matmul %374, %13, %cst_145 {dimension_numbers = #tpu.dot_dimension_numbers<[1], [0], [0], [1], [0, 0, 1, 1], [], []>} : vector<8x128xf32>, vector<128x512xf32>, vector<8x512xf32> -> vector<8x512xf32>
    %396 = arith.index_cast %c7_i32_143 : i32 to index
    %c0_146 = arith.constant 0 : index
    %c0_147 = arith.constant 0 : index
    %397 = vector.load %arg8[%396, %c0_146, %c0_147] : memref<8x8x1024xf32, #tpu.memory_space<vmem>>, vector<1x8x512xf32>
    %398 = vector.shape_cast %397 : vector<1x8x512xf32> to vector<8x512xf32>
    %399 = arith.addf %395, %398 : vector<8x512xf32>
    %400 = arith.index_cast %394 : i32 to index
    %c0_148 = arith.constant 0 : index
    %c512_149 = arith.constant 512 : index
    %401 = vector.load %arg8[%400, %c0_148, %c512_149] : memref<8x8x1024xf32, #tpu.memory_space<vmem>>, vector<1x8x512xf32>
    %402 = vector.shape_cast %401 : vector<1x8x512xf32> to vector<8x512xf32>
    %403 = arith.addf %399, %402 : vector<8x512xf32>
    %404 = vector.extract_strided_slice %403 {offsets = [0, 0], sizes = [8, 128], strides = [1, 1]} : vector<8x512xf32> to vector<8x128xf32>
    %405 = arith.negf %404 : vector<8x128xf32>
    %406 = math.exp %405 : vector<8x128xf32>
    %cst_150 = arith.constant 1.000000e+00 : f32
    %407 = vector.broadcast %cst_150 : f32 to vector<8x128xf32>
    %408 = arith.addf %407, %406 : vector<8x128xf32>
    %409 = arith.divf %407, %408 : vector<8x128xf32>
    %410 = vector.extract_strided_slice %403 {offsets = [0, 128], sizes = [8, 128], strides = [1, 1]} : vector<8x512xf32> to vector<8x128xf32>
    %411 = arith.negf %410 : vector<8x128xf32>
    %412 = math.exp %411 : vector<8x128xf32>
    %cst_151 = arith.constant 1.000000e+00 : f32
    %413 = vector.broadcast %cst_151 : f32 to vector<8x128xf32>
    %414 = arith.addf %413, %412 : vector<8x128xf32>
    %415 = arith.divf %413, %414 : vector<8x128xf32>
    %416 = vector.extract_strided_slice %403 {offsets = [0, 256], sizes = [8, 128], strides = [1, 1]} : vector<8x512xf32> to vector<8x128xf32>
    %417 = math.tanh %416 : vector<8x128xf32>
    %418 = vector.extract_strided_slice %403 {offsets = [0, 384], sizes = [8, 128], strides = [1, 1]} : vector<8x512xf32> to vector<8x128xf32>
    %419 = arith.negf %418 : vector<8x128xf32>
    %420 = math.exp %419 : vector<8x128xf32>
    %cst_152 = arith.constant 1.000000e+00 : f32
    %421 = vector.broadcast %cst_152 : f32 to vector<8x128xf32>
    %422 = arith.addf %421, %420 : vector<8x128xf32>
    %423 = arith.divf %421, %422 : vector<8x128xf32>
    %424 = arith.mulf %415, %372 : vector<8x128xf32>
    %425 = arith.mulf %409, %417 : vector<8x128xf32>
    %426 = arith.addf %424, %425 : vector<8x128xf32>
    %427 = math.tanh %426 : vector<8x128xf32>
    %428 = arith.mulf %423, %427 : vector<8x128xf32>
    %cst_153 = arith.constant dense<0.000000e+00> : vector<8x256xf32>
    %429 = tpu.matmul %428, %14, %cst_153 {dimension_numbers = #tpu.dot_dimension_numbers<[1], [0], [0], [1], [0, 0, 1, 1], [], []>} : vector<8x128xf32>, vector<128x256xf32>, vector<8x256xf32> -> vector<8x256xf32>
    %430 = arith.index_cast %c7_i32_143 : i32 to index
    %c0_154 = arith.constant 0 : index
    %c0_155 = arith.constant 0 : index
    %431 = vector.load %arg7[%430, %c0_154, %c0_155] : memref<8x8x128xf32, #tpu.memory_space<vmem>>, vector<1x8x128xf32>
    %432 = vector.shape_cast %431 : vector<1x8x128xf32> to vector<8x128xf32>
    %433 = vector.extract_strided_slice %429 {offsets = [0, 0], sizes = [8, 128], strides = [1, 1]} : vector<8x256xf32> to vector<8x128xf32>
    %434 = arith.addf %432, %433 : vector<8x128xf32>
    %435 = arith.index_cast %c7_i32_143 : i32 to index
    %c0_156 = arith.constant 0 : index
    %c0_157 = arith.constant 0 : index
    %436 = vector.load %arg7[%435, %c0_156, %c0_157] : memref<8x8x128xf32, #tpu.memory_space<vmem>>, vector<1x8x128xf32>
    %437 = vector.shape_cast %436 : vector<1x8x128xf32> to vector<8x128xf32>
    %438 = vector.shape_cast %434 : vector<8x128xf32> to vector<1x8x128xf32>
    tpu.vector_store %arg7[%435, %c0_156, %c0_157], %438 {strides = array<i32>} : memref<8x8x128xf32, #tpu.memory_space<vmem>>, vector<1x8x128xf32>,
    %439 = arith.index_cast %394 : i32 to index
    %c0_158 = arith.constant 0 : index
    %c0_159 = arith.constant 0 : index
    %440 = vector.load %arg7[%439, %c0_158, %c0_159] : memref<8x8x128xf32, #tpu.memory_space<vmem>>, vector<1x8x128xf32>
    %441 = vector.shape_cast %440 : vector<1x8x128xf32> to vector<8x128xf32>
    %442 = vector.extract_strided_slice %429 {offsets = [0, 128], sizes = [8, 128], strides = [1, 1]} : vector<8x256xf32> to vector<8x128xf32>
    %443 = arith.addf %441, %442 : vector<8x128xf32>
    %444 = arith.index_cast %394 : i32 to index
    %c0_160 = arith.constant 0 : index
    %c0_161 = arith.constant 0 : index
    %445 = vector.load %arg7[%444, %c0_160, %c0_161] : memref<8x8x128xf32, #tpu.memory_space<vmem>>, vector<1x8x128xf32>
    %446 = vector.shape_cast %445 : vector<1x8x128xf32> to vector<8x128xf32>
    %447 = vector.shape_cast %443 : vector<8x128xf32> to vector<1x8x128xf32>
    tpu.vector_store %arg7[%444, %c0_160, %c0_161], %447 {strides = array<i32>} : memref<8x8x128xf32, #tpu.memory_space<vmem>>, vector<1x8x128xf32>,
    %c8_i32 = arith.constant 8 : i32
    return
  }
  func.func @transform_0(%arg0: i32) -> (i32, i32, i32) {
    %c0_i32 = arith.constant 0 : i32
    %c0_i32_0 = arith.constant 0 : i32
    %c0_i32_1 = arith.constant 0 : i32
    %c0_i32_2 = arith.constant 0 : i32
    return %c0_i32, %c0_i32_0, %c0_i32_1 : i32, i32, i32
  }
  func.func @transform_1(%arg0: i32) -> (i32, i32) {
    %c0_i32 = arith.constant 0 : i32
    %c0_i32_0 = arith.constant 0 : i32
    %c0_i32_1 = arith.constant 0 : i32
    return %c0_i32, %c0_i32_0 : i32, i32
  }
  func.func @transform_2(%arg0: i32) -> (i32, i32) {
    %c0_i32 = arith.constant 0 : i32
    %c0_i32_0 = arith.constant 0 : i32
    %c0_i32_1 = arith.constant 0 : i32
    return %c0_i32, %c0_i32_0 : i32, i32
  }
  func.func @transform_3(%arg0: i32) -> (i32, i32) {
    %c0_i32 = arith.constant 0 : i32
    %c0_i32_0 = arith.constant 0 : i32
    %c0_i32_1 = arith.constant 0 : i32
    return %c0_i32, %c0_i32_0 : i32, i32
  }
  func.func @transform_4(%arg0: i32) -> (i32, i32) {
    %c0_i32 = arith.constant 0 : i32
    %c0_i32_0 = arith.constant 0 : i32
    %c0_i32_1 = arith.constant 0 : i32
    return %c0_i32, %c0_i32_0 : i32, i32
  }
  func.func @transform_5(%arg0: i32) -> (i32, i32) {
    %c0_i32 = arith.constant 0 : i32
    %c0_i32_0 = arith.constant 0 : i32
    %c0_i32_1 = arith.constant 0 : i32
    return %c0_i32, %c0_i32_0 : i32, i32
  }
  func.func @transform_6(%arg0: i32) -> (i32, i32, i32) {
    %c0_i32 = arith.constant 0 : i32
    %c0_i32_0 = arith.constant 0 : i32
    %c0_i32_1 = arith.constant 0 : i32
    %c0_i32_2 = arith.constant 0 : i32
    return %c0_i32, %c0_i32_0, %c0_i32_1 : i32, i32, i32
  }
}

</mosaic_0001>

<llo_original>
// kernel: tpu_custom_call.1
$region0: #{tpu_custom_call.1}
  #allocation0 [shape = 'u32[]', space=smem, size = 0x4, offset = 0x4, fixed_abs, tag = 'smem constant byte address 0x4 - core index']
  #allocation1 [shape = 'u32[72,128]{1,0:T(1,128)}', space=vmem, size = 0x9000, scoped, tag = 'internal scratch']
  #allocation2 [shape = 'f32[8,8,1024]{2,1,0:T(8,128)}', space=vmem, size = 0x40000, scoped, tag = 'scratch operand']
  %s0 = inlined_call_operand.hbm [shape: f32[8,8,16], index: 0, kind: input, shape index: {}]
  %s1 = inlined_call_operand.hbm [shape: f32[16,1024], index: 1, kind: input, shape index: {}]
  %s2 = inlined_call_operand.hbm [shape: f32[1,1024], index: 2, kind: input, shape index: {}]
  %s3 = inlined_call_operand.hbm [shape: f32[128,512], index: 3, kind: input, shape index: {}]
  %s4 = inlined_call_operand.hbm [shape: f32[128,256], index: 4, kind: input, shape index: {}]
  %s5 = inlined_call_operand.vmem [shape: f32[1,128], index: 5, kind: input, shape index: {}]
  %s6 = inlined_call_operand.hbm [shape: f32[8,8,128], index: 6, kind: output, shape index: {}]
  %s7 = sld [smem:[#allocation0]]
  $region54: #{tpu_custom_call.1} parent=0
    _
  %s9 = ssub.s32 1, %s7
  %s10 = scalar_select 0, %s9, %s7
  $region1: #{tpu_custom_call.1} parent=0
    #allocation3 [shape = 'u8[32768]{0}', space=vmem, size = 0x8000, scoped, tag = 'input window, operand 0, single buffered']
    #allocation4 [shape = 's32[1]{0}', space=sflag, size = 0x4, scoped, tag = 'scoped memory for tpu_custom_call.1']
    #allocation5 [shape = 's32[1]{0}', space=sflag, size = 0x4, scoped, tag = 'scoped memory for tpu_custom_call.1']
    #allocation6 [shape = 'u8[65536]{0}', space=vmem, size = 0x10000, scoped, tag = 'input window, operand 1, single buffered']
    #allocation7 [shape = 's32[1]{0}', space=sflag, size = 0x4, scoped, tag = 'scoped memory for tpu_custom_call.1']
    #allocation8 [shape = 'u8[4096]{0}', space=vmem, size = 0x1000, scoped, tag = 'input window, operand 2, single buffered']
    #allocation9 [shape = 'u8[262144]{0}', space=vmem, size = 0x40000, scoped, tag = 'input window, operand 3, single buffered']
    #allocation10 [shape = 's32[1]{0}', space=sflag, size = 0x4, scoped, tag = 'scoped memory for tpu_custom_call.1']
    #allocation11 [shape = 'u8[131072]{0}', space=vmem, size = 0x20000, scoped, tag = 'input window, operand 4, single buffered']
    #allocation12 [shape = 'u8[32768]{0}', space=vmem, size = 0x8000, scoped, tag = 'output window, operand 0, single buffered']
    %11 = vsyncpa [#allocation4], 0
    %12 = vsyncpa [#allocation7], 0
    %13 = vsyncpa [#allocation10], 0
    %14 = vsyncpa [#allocation5], 0
    // Predicated region
    $region2: #{tpu_custom_call.1} parent=1 // pred_check
      _
    $region3: #{tpu_custom_call.1} parent=1 // pred_check_branch
      %16 = sbr.rel (0) target = $region5
    $region4: #{tpu_custom_call.1} parent=1 // pred_region
      %18 = vsyncadd [#allocation4], 0
      %s19 = sshll.u32 %s0, 4
      %s20 = int_to_ptr.hbm [resolvable:$true] %s19
      %s21 = sshll.u32 [#allocation3], 4
      %s22 = int_to_ptr.vmem [resolvable:$true] %s21
      %27 = dma.hbm_to_vmem [thread:$0]  %s20, 1024, %s22, [#allocation4], 128, 128, 8
    $region5: #{tpu_custom_call.1} parent=1 // pred_fallthru
      _
    // Predicated region
    $region6: #{tpu_custom_call.1} parent=1 // pred_check
      _
    $region7: #{tpu_custom_call.1} parent=1 // pred_check_branch
      %29 = sbr.rel (0) target = $region9
    $region8: #{tpu_custom_call.1} parent=1 // pred_region
      %31 = vsyncadd [#allocation7], 0
      %s32 = sshll.u32 %s1, 4
      %s33 = int_to_ptr.hbm [resolvable:$true] %s32
      %s34 = sshll.u32 [#allocation6], 4
      %s35 = int_to_ptr.vmem [resolvable:$true] %s34
      %40 = dma.hbm_to_vmem [thread:$0]  %s33, 2048, %s35, [#allocation7], 1024, 1024, 64
    $region9: #{tpu_custom_call.1} parent=1 // pred_fallthru
      _
    // Predicated region
    $region10: #{tpu_custom_call.1} parent=1 // pred_check
      _
    $region11: #{tpu_custom_call.1} parent=1 // pred_check_branch
      %42 = sbr.rel (0) target = $region13
    $region12: #{tpu_custom_call.1} parent=1 // pred_region
      %44 = vsyncadd [#allocation7], 0
      %s46 = sshll.u32 %s2, 4
      %s47 = int_to_ptr.hbm [resolvable:$true] %s46
      %s48 = sshll.u32 [#allocation8], 4
      %s49 = int_to_ptr.vmem [resolvable:$true] %s48
      %51 = dma.hbm_to_vmem [thread:$0]  %s47, 128, %s49, [#allocation7]
    $region13: #{tpu_custom_call.1} parent=1 // pred_fallthru
      _
    // Predicated region
    $region14: #{tpu_custom_call.1} parent=1 // pred_check
      _
    $region15: #{tpu_custom_call.1} parent=1 // pred_check_branch
      %53 = sbr.rel (0) target = $region17
    $region16: #{tpu_custom_call.1} parent=1 // pred_region
      %55 = vsyncadd [#allocation10], 0
      %s56 = sshll.u32 %s3, 4
      %s57 = int_to_ptr.hbm [resolvable:$true] %s56
      %s58 = sshll.u32 [#allocation9], 4
      %s59 = int_to_ptr.vmem [resolvable:$true] %s58
      %64 = dma.hbm_to_vmem [thread:$0]  %s57, 8192, %s59, [#allocation10], 512, 512, 32
    $region17: #{tpu_custom_call.1} parent=1 // pred_fallthru
      _
    // Predicated region
    $region18: #{tpu_custom_call.1} parent=1 // pred_check
      _
    $region19: #{tpu_custom_call.1} parent=1 // pred_check_branch
      %66 = sbr.rel (0) target = $region21
    $region20: #{tpu_custom_call.1} parent=1 // pred_region
      %68 = vsyncadd [#allocation10], 0
      %s69 = sshll.u32 %s4, 4
      %s70 = int_to_ptr.hbm [resolvable:$true] %s69
      %s71 = sshll.u32 [#allocation11], 4
      %s72 = int_to_ptr.vmem [resolvable:$true] %s71
      %77 = dma.hbm_to_vmem [thread:$0]  %s70, 4096, %s72, [#allocation10], 256, 256, 16
    $region21: #{tpu_custom_call.1} parent=1 // pred_fallthru
      _
    // Predicated region
    $region22: #{tpu_custom_call.1} parent=1 // pred_check
      _
    $region23: #{tpu_custom_call.1} parent=1 // pred_check_branch
      %79 = sbr.rel (0) target = $region25
    $region24: #{tpu_custom_call.1} parent=1 // pred_region
      _
    $region25: #{tpu_custom_call.1} parent=1 // pred_fallthru
      _
    // Predicated region
    $region26: #{tpu_custom_call.1} parent=1 // pred_check
      _
    $region27: #{tpu_custom_call.1} parent=1 // pred_check_branch
      %81 = sbr.rel (0) target = $region29
    $region28: #{tpu_custom_call.1} parent=1 // pred_region
      %83 = dma.done [#allocation4], 1024
    $region29: #{tpu_custom_call.1} parent=1 // pred_fallthru
      _
    // Predicated region
    $region30: #{tpu_custom_call.1} parent=1 // pred_check
      _
    $region31: #{tpu_custom_call.1} parent=1 // pred_check_branch
      %85 = sbr.rel (0) target = $region33
    $region32: #{tpu_custom_call.1} parent=1 // pred_region
      %87 = dma.done [#allocation7], 2048
    $region33: #{tpu_custom_call.1} parent=1 // pred_fallthru
      _
    // Predicated region
    $region34: #{tpu_custom_call.1} parent=1 // pred_check
      _
    $region35: #{tpu_custom_call.1} parent=1 // pred_check_branch
      %89 = sbr.rel (0) target = $region37
    $region36: #{tpu_custom_call.1} parent=1 // pred_region
      %91 = dma.done [#allocation7], 128
    $region37: #{tpu_custom_call.1} parent=1 // pred_fallthru
      _
    // Predicated region
    $region38: #{tpu_custom_call.1} parent=1 // pred_check
      _
    $region39: #{tpu_custom_call.1} parent=1 // pred_check_branch
      %93 = sbr.rel (0) target = $region41
    $region40: #{tpu_custom_call.1} parent=1 // pred_region
      %95 = dma.done [#allocation10], 8192
    $region41: #{tpu_custom_call.1} parent=1 // pred_fallthru
      _
    // Predicated region
    $region42: #{tpu_custom_call.1} parent=1 // pred_check
      _
    $region43: #{tpu_custom_call.1} parent=1 // pred_check_branch
      %97 = sbr.rel (0) target = $region45
    $region44: #{tpu_custom_call.1} parent=1 // pred_region
      %99 = dma.done [#allocation10], 4096
    $region45: #{tpu_custom_call.1} parent=1 // pred_fallthru
      _
    %v100 = vld [vmem:[#allocation3] sm:$0xff]
    %v101 = vld [vmem:[#allocation3 + $0x8] sm:$0xff]
    %v102 = vld [vmem:[#allocation3 + $0x10] sm:$0xff]
    %v103 = vld [vmem:[#allocation3 + $0x18] sm:$0xff]
    %v104 = vld [vmem:[#allocation3 + $0x20] sm:$0xff]
    %v105 = vld [vmem:[#allocation3 + $0x28] sm:$0xff]
    %v106 = vld [vmem:[#allocation3 + $0x30] sm:$0xff]
    %v107 = vld [vmem:[#allocation3 + $0x38] sm:$0xff]
    %v108 = vld [vmem:[#allocation6] sm:$0xff]
    %v109 = vld [vmem:[#allocation6 + $0x8] sm:$0xff]
    %v110 = vld [vmem:[#allocation6 + $0x10] sm:$0xff]
    %v111 = vld [vmem:[#allocation6 + $0x18] sm:$0xff]
    %v112 = vld [vmem:[#allocation6 + $0x20] sm:$0xff]
    %v113 = vld [vmem:[#allocation6 + $0x28] sm:$0xff]
    %v114 = vld [vmem:[#allocation6 + $0x30] sm:$0xff]
    %v115 = vld [vmem:[#allocation6 + $0x38] sm:$0xff]
    %v116 = vld [vmem:[#allocation6 + $0x40] sm:$0xff]
    %v117 = vld [vmem:[#allocation6 + $0x48] sm:$0xff]
    %v118 = vld [vmem:[#allocation6 + $0x50] sm:$0xff]
    %v119 = vld [vmem:[#allocation6 + $0x58] sm:$0xff]
    %v120 = vld [vmem:[#allocation6 + $0x60] sm:$0xff]
    %v121 = vld [vmem:[#allocation6 + $0x68] sm:$0xff]
    %v122 = vld [vmem:[#allocation6 + $0x70] sm:$0xff]
    %v123 = vld [vmem:[#allocation6 + $0x78] sm:$0xff]
    %v124 = vld [vmem:[#allocation8] sm:$0xff]
    %v126 = vperm.slane %v124, 0
    %v127 = vperm.slane %v124, 1
    %v128 = vperm.slane %v124, 2
    %v129 = vperm.slane %v124, 3
    %v130 = vperm.slane %v124, 4
    %v131 = vperm.slane %v124, 5
    %v132 = vperm.slane %v124, 6
    %v133 = vperm.slane %v124, 7
    %vm142 = vcmask 130048
    %v144 = vsel %vm142, %v100, 0
    %v147 = vsel %vm142, %v101, 0
    %v150 = vsel %vm142, %v102, 0
    %v153 = vsel %vm142, %v103, 0
    %v156 = vsel %vm142, %v104, 0
    %v159 = vsel %vm142, %v105, 0
    %v162 = vsel %vm142, %v106, 0
    %v165 = vsel %vm142, %v107, 0
    %167 = vmatpush.msra.mxu0 0.0
    %168 = vmatpush.msra.mxu0 0.0
    %169 = vmatpush.msra.mxu0 0.0
    %170 = vmatpush.msra.mxu0 0.0
    %171 = vmatpush.msra.mxu0 0.0
    %172 = vmatpush.msra.mxu0 0.0
    %173 = vmatpush.msra.mxu0 0.0
    %174 = vmatpush.msra.mxu0 0.0
    %175 = vmatpush.msra.mxu0 0.0
    %176 = vmatpush.msra.mxu0 0.0
    %177 = vmatpush.msra.mxu0 0.0
    %178 = vmatpush.msra.mxu0 0.0
    %179 = vmatpush.msra.mxu0 0.0
    %180 = vmatpush.msra.mxu0 0.0
    %181 = vmatpush.msra.mxu0 %v116
    %182 = vmatpush.msra.mxu0 %v108
    %183 = vmatmul.f32.gmra.mxu0 %v144
    %v184 = vpop.f32.mrf.mxu0
    %v185 = vadd.f32 %v126, %v184
    %186 = vmatmul.f32.gmra.mxu0 %v147
    %v187 = vpop.f32.mrf.mxu0
    %v188 = vadd.f32 %v126, %v187
    %189 = vmatmul.f32.gmra.mxu0 %v150
    %v190 = vpop.f32.mrf.mxu0
    %v191 = vadd.f32 %v126, %v190
    %192 = vmatmul.f32.gmra.mxu0 %v153
    %v193 = vpop.f32.mrf.mxu0
    %v194 = vadd.f32 %v126, %v193
    %195 = vmatmul.f32.gmra.mxu0 %v156
    %v196 = vpop.f32.mrf.mxu0
    %v197 = vadd.f32 %v126, %v196
    %198 = vmatmul.f32.gmra.mxu0 %v159
    %v199 = vpop.f32.mrf.mxu0
    %v200 = vadd.f32 %v126, %v199
    %201 = vmatmul.f32.gmra.mxu0 %v162
    %v202 = vpop.f32.mrf.mxu0
    %v203 = vadd.f32 %v126, %v202
    %204 = vmatmul.f32.gmra.mxu0 %v165
    %v205 = vpop.f32.mrf.mxu0
    %v206 = vadd.f32 %v126, %v205
    %207 = vdwg.mxu0
    %208 = vmatpush.msra.mxu0 0.0
    %209 = vmatpush.msra.mxu0 0.0
    %210 = vmatpush.msra.mxu0 0.0
    %211 = vmatpush.msra.mxu0 0.0
    %212 = vmatpush.msra.mxu0 0.0
    %213 = vmatpush.msra.mxu0 0.0
    %214 = vmatpush.msra.mxu0 0.0
    %215 = vmatpush.msra.mxu0 0.0
    %216 = vmatpush.msra.mxu0 0.0
    %217 = vmatpush.msra.mxu0 0.0
    %218 = vmatpush.msra.mxu0 0.0
    %219 = vmatpush.msra.mxu0 0.0
    %220 = vmatpush.msra.mxu0 0.0
    %221 = vmatpush.msra.mxu0 0.0
    %222 = vmatpush.msra.mxu0 %v117
    %223 = vmatpush.msra.mxu0 %v109
    %224 = vmatmul.f32.gmra.mxu0 %v144
    %v225 = vpop.f32.mrf.mxu0
    %v226 = vadd.f32 %v127, %v225
    %227 = vmatmul.f32.gmra.mxu0 %v147
    %v228 = vpop.f32.mrf.mxu0
    %v229 = vadd.f32 %v127, %v228
    %230 = vmatmul.f32.gmra.mxu0 %v150
    %v231 = vpop.f32.mrf.mxu0
    %v232 = vadd.f32 %v127, %v231
    %233 = vmatmul.f32.gmra.mxu0 %v153
    %v234 = vpop.f32.mrf.mxu0
    %v235 = vadd.f32 %v127, %v234
    %236 = vmatmul.f32.gmra.mxu0 %v156
    %v237 = vpop.f32.mrf.mxu0
    %v238 = vadd.f32 %v127, %v237
    %239 = vmatmul.f32.gmra.mxu0 %v159
    %v240 = vpop.f32.mrf.mxu0
    %v241 = vadd.f32 %v127, %v240
    %242 = vmatmul.f32.gmra.mxu0 %v162
    %v243 = vpop.f32.mrf.mxu0
    %v244 = vadd.f32 %v127, %v243
    %245 = vmatmul.f32.gmra.mxu0 %v165
    %v246 = vpop.f32.mrf.mxu0
    %v247 = vadd.f32 %v127, %v246
    %248 = vdwg.mxu0
    %249 = vmatpush.msra.mxu0 0.0
    %250 = vmatpush.msra.mxu0 0.0
    %251 = vmatpush.msra.mxu0 0.0
    %252 = vmatpush.msra.mxu0 0.0
    %253 = vmatpush.msra.mxu0 0.0
    %254 = vmatpush.msra.mxu0 0.0
    %255 = vmatpush.msra.mxu0 0.0
    %256 = vmatpush.msra.mxu0 0.0
    %257 = vmatpush.msra.mxu0 0.0
    %258 = vmatpush.msra.mxu0 0.0
    %259 = vmatpush.msra.mxu0 0.0
    %260 = vmatpush.msra.mxu0 0.0
    %261 = vmatpush.msra.mxu0 0.0
    %262 = vmatpush.msra.mxu0 0.0
    %263 = vmatpush.msra.mxu0 %v118
    %264 = vmatpush.msra.mxu0 %v110
    %265 = vmatmul.f32.gmra.mxu0 %v144
    %v266 = vpop.f32.mrf.mxu0
    %v267 = vadd.f32 %v128, %v266
    %268 = vmatmul.f32.gmra.mxu0 %v147
    %v269 = vpop.f32.mrf.mxu0
    %v270 = vadd.f32 %v128, %v269
    %271 = vmatmul.f32.gmra.mxu0 %v150
    %v272 = vpop.f32.mrf.mxu0
    %v273 = vadd.f32 %v128, %v272
    %274 = vmatmul.f32.gmra.mxu0 %v153
    %v275 = vpop.f32.mrf.mxu0
    %v276 = vadd.f32 %v128, %v275
    %277 = vmatmul.f32.gmra.mxu0 %v156
    %v278 = vpop.f32.mrf.mxu0
    %v279 = vadd.f32 %v128, %v278
    %280 = vmatmul.f32.gmra.mxu0 %v159
    %v281 = vpop.f32.mrf.mxu0
    %v282 = vadd.f32 %v128, %v281
    %283 = vmatmul.f32.gmra.mxu0 %v162
    %v284 = vpop.f32.mrf.mxu0
    %v285 = vadd.f32 %v128, %v284
    %286 = vmatmul.f32.gmra.mxu0 %v165
    %v287 = vpop.f32.mrf.mxu0
    %v288 = vadd.f32 %v128, %v287
    %289 = vdwg.mxu0
    %290 = vmatpush.msra.mxu0 0.0
    %291 = vmatpush.msra.mxu0 0.0
    %292 = vmatpush.msra.mxu0 0.0
    %293 = vmatpush.msra.mxu0 0.0
    %294 = vmatpush.msra.mxu0 0.0
    %295 = vmatpush.msra.mxu0 0.0
    %296 = vmatpush.msra.mxu0 0.0
    %297 = vmatpush.msra.mxu0 0.0
    %298 = vmatpush.msra.mxu0 0.0
    %299 = vmatpush.msra.mxu0 0.0
    %300 = vmatpush.msra.mxu0 0.0
    %301 = vmatpush.msra.mxu0 0.0
    %302 = vmatpush.msra.mxu0 0.0
    %303 = vmatpush.msra.mxu0 0.0
    %304 = vmatpush.msra.mxu0 %v119
    %305 = vmatpush.msra.mxu0 %v111
    %306 = vmatmul.f32.gmra.mxu0 %v144
    %v307 = vpop.f32.mrf.mxu0
    %v308 = vadd.f32 %v129, %v307
    %309 = vmatmul.f32.gmra.mxu0 %v147
    %v310 = vpop.f32.mrf.mxu0
    %v311 = vadd.f32 %v129, %v310
    %312 = vmatmul.f32.gmra.mxu0 %v150
    %v313 = vpop.f32.mrf.mxu0
    %v314 = vadd.f32 %v129, %v313
    %315 = vmatmul.f32.gmra.mxu0 %v153
    %v316 = vpop.f32.mrf.mxu0
    %v317 = vadd.f32 %v129, %v316
    %318 = vmatmul.f32.gmra.mxu0 %v156
    %v319 = vpop.f32.mrf.mxu0
    %v320 = vadd.f32 %v129, %v319
    %321 = vmatmul.f32.gmra.mxu0 %v159
    %v322 = vpop.f32.mrf.mxu0
    %v323 = vadd.f32 %v129, %v322
    %324 = vmatmul.f32.gmra.mxu0 %v162
    %v325 = vpop.f32.mrf.mxu0
    %v326 = vadd.f32 %v129, %v325
    %327 = vmatmul.f32.gmra.mxu0 %v165
    %v328 = vpop.f32.mrf.mxu0
    %v329 = vadd.f32 %v129, %v328
    %330 = vdwg.mxu0
    %331 = vmatpush.msra.mxu0 0.0
    %332 = vmatpush.msra.mxu0 0.0
    %333 = vmatpush.msra.mxu0 0.0
    %334 = vmatpush.msra.mxu0 0.0
    %335 = vmatpush.msra.mxu0 0.0
    %336 = vmatpush.msra.mxu0 0.0
    %337 = vmatpush.msra.mxu0 0.0
    %338 = vmatpush.msra.mxu0 0.0
    %339 = vmatpush.msra.mxu0 0.0
    %340 = vmatpush.msra.mxu0 0.0
    %341 = vmatpush.msra.mxu0 0.0
    %342 = vmatpush.msra.mxu0 0.0
    %343 = vmatpush.msra.mxu0 0.0
    %344 = vmatpush.msra.mxu0 0.0
    %345 = vmatpush.msra.mxu0 %v120
    %346 = vmatpush.msra.mxu0 %v112
    %347 = vmatmul.f32.gmra.mxu0 %v144
    %v348 = vpop.f32.mrf.mxu0
    %v349 = vadd.f32 %v130, %v348
    %350 = vmatmul.f32.gmra.mxu0 %v147
    %v351 = vpop.f32.mrf.mxu0
    %v352 = vadd.f32 %v130, %v351
    %353 = vmatmul.f32.gmra.mxu0 %v150
    %v354 = vpop.f32.mrf.mxu0
    %v355 = vadd.f32 %v130, %v354
    %356 = vmatmul.f32.gmra.mxu0 %v153
    %v357 = vpop.f32.mrf.mxu0
    %v358 = vadd.f32 %v130, %v357
    %359 = vmatmul.f32.gmra.mxu0 %v156
    %v360 = vpop.f32.mrf.mxu0
    %v361 = vadd.f32 %v130, %v360
    %362 = vmatmul.f32.gmra.mxu0 %v159
    %v363 = vpop.f32.mrf.mxu0
    %v364 = vadd.f32 %v130, %v363
    %365 = vmatmul.f32.gmra.mxu0 %v162
    %v366 = vpop.f32.mrf.mxu0
    %v367 = vadd.f32 %v130, %v366
    %368 = vmatmul.f32.gmra.mxu0 %v165
    %v369 = vpop.f32.mrf.mxu0
    %v370 = vadd.f32 %v130, %v369
    %371 = vdwg.mxu0
    %372 = vmatpush.msra.mxu0 0.0
    %373 = vmatpush.msra.mxu0 0.0
    %374 = vmatpush.msra.mxu0 0.0
    %375 = vmatpush.msra.mxu0 0.0
    %376 = vmatpush.msra.mxu0 0.0
    %377 = vmatpush.msra.mxu0 0.0
    %378 = vmatpush.msra.mxu0 0.0
    %379 = vmatpush.msra.mxu0 0.0
    %380 = vmatpush.msra.mxu0 0.0
    %381 = vmatpush.msra.mxu0 0.0
    %382 = vmatpush.msra.mxu0 0.0
    %383 = vmatpush.msra.mxu0 0.0
    %384 = vmatpush.msra.mxu0 0.0
    %385 = vmatpush.msra.mxu0 0.0
    %386 = vmatpush.msra.mxu0 %v121
    %387 = vmatpush.msra.mxu0 %v113
    %388 = vmatmul.f32.gmra.mxu0 %v144
    %v389 = vpop.f32.mrf.mxu0
    %v390 = vadd.f32 %v131, %v389
    %391 = vmatmul.f32.gmra.mxu0 %v147
    %v392 = vpop.f32.mrf.mxu0
    %v393 = vadd.f32 %v131, %v392
    %394 = vmatmul.f32.gmra.mxu0 %v150
    %v395 = vpop.f32.mrf.mxu0
    %v396 = vadd.f32 %v131, %v395
    %397 = vmatmul.f32.gmra.mxu0 %v153
    %v398 = vpop.f32.mrf.mxu0
    %v399 = vadd.f32 %v131, %v398
    %400 = vmatmul.f32.gmra.mxu0 %v156
    %v401 = vpop.f32.mrf.mxu0
    %v402 = vadd.f32 %v131, %v401
    %403 = vmatmul.f32.gmra.mxu0 %v159
    %v404 = vpop.f32.mrf.mxu0
    %v405 = vadd.f32 %v131, %v404
    %406 = vmatmul.f32.gmra.mxu0 %v162
    %v407 = vpop.f32.mrf.mxu0
    %v408 = vadd.f32 %v131, %v407
    %409 = vmatmul.f32.gmra.mxu0 %v165
    %v410 = vpop.f32.mrf.mxu0
    %v411 = vadd.f32 %v131, %v410
    %412 = vdwg.mxu0
    %413 = vmatpush.msra.mxu0 0.0
    %414 = vmatpush.msra.mxu0 0.0
    %415 = vmatpush.msra.mxu0 0.0
    %416 = vmatpush.msra.mxu0 0.0
    %417 = vmatpush.msra.mxu0 0.0
    %418 = vmatpush.msra.mxu0 0.0
    %419 = vmatpush.msra.mxu0 0.0
    %420 = vmatpush.msra.mxu0 0.0
    %421 = vmatpush.msra.mxu0 0.0
    %422 = vmatpush.msra.mxu0 0.0
    %423 = vmatpush.msra.mxu0 0.0
    %424 = vmatpush.msra.mxu0 0.0
    %425 = vmatpush.msra.mxu0 0.0
    %426 = vmatpush.msra.mxu0 0.0
    %427 = vmatpush.msra.mxu0 %v122
    %428 = vmatpush.msra.mxu0 %v114
    %429 = vmatmul.f32.gmra.mxu0 %v144
    %v430 = vpop.f32.mrf.mxu0
    %v431 = vadd.f32 %v132, %v430
    %432 = vmatmul.f32.gmra.mxu0 %v147
    %v433 = vpop.f32.mrf.mxu0
    %v434 = vadd.f32 %v132, %v433
    %435 = vmatmul.f32.gmra.mxu0 %v150
    %v436 = vpop.f32.mrf.mxu0
    %v437 = vadd.f32 %v132, %v436
    %438 = vmatmul.f32.gmra.mxu0 %v153
    %v439 = vpop.f32.mrf.mxu0
    %v440 = vadd.f32 %v132, %v439
    %441 = vmatmul.f32.gmra.mxu0 %v156
    %v442 = vpop.f32.mrf.mxu0
    %v443 = vadd.f32 %v132, %v442
    %444 = vmatmul.f32.gmra.mxu0 %v159
    %v445 = vpop.f32.mrf.mxu0
    %v446 = vadd.f32 %v132, %v445
    %447 = vmatmul.f32.gmra.mxu0 %v162
    %v448 = vpop.f32.mrf.mxu0
    %v449 = vadd.f32 %v132, %v448
    %450 = vmatmul.f32.gmra.mxu0 %v165
    %v451 = vpop.f32.mrf.mxu0
    %v452 = vadd.f32 %v132, %v451
    %453 = vdwg.mxu0
    %454 = vmatpush.msra.mxu0 0.0
    %455 = vmatpush.msra.mxu0 0.0
    %456 = vmatpush.msra.mxu0 0.0
    %457 = vmatpush.msra.mxu0 0.0
    %458 = vmatpush.msra.mxu0 0.0
    %459 = vmatpush.msra.mxu0 0.0
    %460 = vmatpush.msra.mxu0 0.0
    %461 = vmatpush.msra.mxu0 0.0
    %462 = vmatpush.msra.mxu0 0.0
    %463 = vmatpush.msra.mxu0 0.0
    %464 = vmatpush.msra.mxu0 0.0
    %465 = vmatpush.msra.mxu0 0.0
    %466 = vmatpush.msra.mxu0 0.0
    %467 = vmatpush.msra.mxu0 0.0
    %468 = vmatpush.msra.mxu0 %v123
    %469 = vmatpush.msra.mxu0 %v115
    %470 = vmatmul.f32.gmra.mxu0 %v144
    %v471 = vpop.f32.mrf.mxu0
    %v472 = vadd.f32 %v133, %v471
    %473 = vmatmul.f32.gmra.mxu0 %v147
    %v474 = vpop.f32.mrf.mxu0
    %v475 = vadd.f32 %v133, %v474
    %476 = vmatmul.f32.gmra.mxu0 %v150
    %v477 = vpop.f32.mrf.mxu0
    %v478 = vadd.f32 %v133, %v477
    %479 = vmatmul.f32.gmra.mxu0 %v153
    %v480 = vpop.f32.mrf.mxu0
    %v481 = vadd.f32 %v133, %v480
    %482 = vmatmul.f32.gmra.mxu0 %v156
    %v483 = vpop.f32.mrf.mxu0
    %v484 = vadd.f32 %v133, %v483
    %485 = vmatmul.f32.gmra.mxu0 %v159
    %v486 = vpop.f32.mrf.mxu0
    %v487 = vadd.f32 %v133, %v486
    %488 = vmatmul.f32.gmra.mxu0 %v162
    %v489 = vpop.f32.mrf.mxu0
    %v490 = vadd.f32 %v133, %v489
    %491 = vmatmul.f32.gmra.mxu0 %v165
    %v492 = vpop.f32.mrf.mxu0
    %v493 = vadd.f32 %v133, %v492
    %494 = vdwg.mxu0
    %495 = vst [vmem:[#allocation2] sm:$0xff] %v185
    %496 = vst [vmem:[#allocation2 + $0x8] sm:$0xff] %v226
    %497 = vst [vmem:[#allocation2 + $0x10] sm:$0xff] %v267
    %498 = vst [vmem:[#allocation2 + $0x18] sm:$0xff] %v308
    %499 = vst [vmem:[#allocation2 + $0x20] sm:$0xff] %v349
    %500 = vst [vmem:[#allocation2 + $0x28] sm:$0xff] %v390
    %501 = vst [vmem:[#allocation2 + $0x30] sm:$0xff] %v431
    %502 = vst [vmem:[#allocation2 + $0x38] sm:$0xff] %v472
    %503 = vst [vmem:[#allocation2 + $0x40] sm:$0xff] %v188
    %504 = vst [vmem:[#allocation2 + $0x48] sm:$0xff] %v229
    %505 = vst [vmem:[#allocation2 + $0x50] sm:$0xff] %v270
    %506 = vst [vmem:[#allocation2 + $0x58] sm:$0xff] %v311
    %507 = vst [vmem:[#allocation2 + $0x60] sm:$0xff] %v352
    %508 = vst [vmem:[#allocation2 + $0x68] sm:$0xff] %v393
    %509 = vst [vmem:[#allocation2 + $0x70] sm:$0xff] %v434
    %510 = vst [vmem:[#allocation2 + $0x78] sm:$0xff] %v475
    %511 = vst [vmem:[#allocation2 + $0x80] sm:$0xff] %v191
    %512 = vst [vmem:[#allocation2 + $0x88] sm:$0xff] %v232
    %513 = vst [vmem:[#allocation2 + $0x90] sm:$0xff] %v273
    %514 = vst [vmem:[#allocation2 + $0x98] sm:$0xff] %v314
    %515 = vst [vmem:[#allocation2 + $0xa0] sm:$0xff] %v355
    %516 = vst [vmem:[#allocation2 + $0xa8] sm:$0xff] %v396
    %517 = vst [vmem:[#allocation2 + $0xb0] sm:$0xff] %v437
    %518 = vst [vmem:[#allocation2 + $0xb8] sm:$0xff] %v478
    %519 = vst [vmem:[#allocation2 + $0xc0] sm:$0xff] %v194
    %520 = vst [vmem:[#allocation2 + $0xc8] sm:$0xff] %v235
    %521 = vst [vmem:[#allocation2 + $0xd0] sm:$0xff] %v276
    %522 = vst [vmem:[#allocation2 + $0xd8] sm:$0xff] %v317
    %523 = vst [vmem:[#allocation2 + $0xe0] sm:$0xff] %v358
    %524 = vst [vmem:[#allocation2 + $0xe8] sm:$0xff] %v399
    %525 = vst [vmem:[#allocation2 + $0xf0] sm:$0xff] %v440
    %526 = vst [vmem:[#allocation2 + $0xf8] sm:$0xff] %v481
    %527 = vst [vmem:[#allocation2 + $0x100] sm:$0xff] %v197
    %528 = vst [vmem:[#allocation2 + $0x108] sm:$0xff] %v238
    %529 = vst [vmem:[#allocation2 + $0x110] sm:$0xff] %v279
    %530 = vst [vmem:[#allocation2 + $0x118] sm:$0xff] %v320
    %531 = vst [vmem:[#allocation2 + $0x120] sm:$0xff] %v361
    %532 = vst [vmem:[#allocation2 + $0x128] sm:$0xff] %v402
    %533 = vst [vmem:[#allocation2 + $0x130] sm:$0xff] %v443
    %534 = vst [vmem:[#allocation2 + $0x138] sm:$0xff] %v484
    %535 = vst [vmem:[#allocation2 + $0x140] sm:$0xff] %v200
    %536 = vst [vmem:[#allocation2 + $0x148] sm:$0xff] %v241
    %537 = vst [vmem:[#allocation2 + $0x150] sm:$0xff] %v282
    %538 = vst [vmem:[#allocation2 + $0x158] sm:$0xff] %v323
    %539 = vst [vmem:[#allocation2 + $0x160] sm:$0xff] %v364
    %540 = vst [vmem:[#allocation2 + $0x168] sm:$0xff] %v405
    %541 = vst [vmem:[#allocation2 + $0x170] sm:$0xff] %v446
    %542 = vst [vmem:[#allocation2 + $0x178] sm:$0xff] %v487
    %543 = vst [vmem:[#allocation2 + $0x180] sm:$0xff] %v203
    %544 = vst [vmem:[#allocation2 + $0x188] sm:$0xff] %v244
    %545 = vst [vmem:[#allocation2 + $0x190] sm:$0xff] %v285
    %546 = vst [vmem:[#allocation2 + $0x198] sm:$0xff] %v326
    %547 = vst [vmem:[#allocation2 + $0x1a0] sm:$0xff] %v367
    %548 = vst [vmem:[#allocation2 + $0x1a8] sm:$0xff] %v408
    %549 = vst [vmem:[#allocation2 + $0x1b0] sm:$0xff] %v449
    %550 = vst [vmem:[#allocation2 + $0x1b8] sm:$0xff] %v490
    %551 = vst [vmem:[#allocation2 + $0x1c0] sm:$0xff] %v206
    %552 = vst [vmem:[#allocation2 + $0x1c8] sm:$0xff] %v247
    %553 = vst [vmem:[#allocation2 + $0x1d0] sm:$0xff] %v288
    %554 = vst [vmem:[#allocation2 + $0x1d8] sm:$0xff] %v329
    %555 = vst [vmem:[#allocation2 + $0x1e0] sm:$0xff] %v370
    %556 = vst [vmem:[#allocation2 + $0x1e8] sm:$0xff] %v411
    %557 = vst [vmem:[#allocation2 + $0x1f0] sm:$0xff] %v452
    %558 = vst [vmem:[#allocation2 + $0x1f8] sm:$0xff] %v493
    %v559 = vld [vmem:[%s5] sm:$0x1]
    %v561 = vperm.slane %v559, 0
    %563 = vst [vmem:[#allocation12] sm:$0xff] %v561
    %564 = vst [vmem:[#allocation12 + $0x8] sm:$0xff] %v561
    %565 = vst [vmem:[#allocation12 + $0x10] sm:$0xff] %v561
    %566 = vst [vmem:[#allocation12 + $0x18] sm:$0xff] %v561
    %567 = vst [vmem:[#allocation12 + $0x20] sm:$0xff] %v561
    %568 = vst [vmem:[#allocation12 + $0x28] sm:$0xff] %v561
    %569 = vst [vmem:[#allocation12 + $0x30] sm:$0xff] %v561
    %570 = vst [vmem:[#allocation12 + $0x38] sm:$0xff] %v561
    %v571 = vld [vmem:[#allocation9] sm:$0xff]
    %v572 = vld [vmem:[#allocation9 + $0x8] sm:$0xff]
    %v573 = vld [vmem:[#allocation9 + $0x10] sm:$0xff]
    %v574 = vld [vmem:[#allocation9 + $0x18] sm:$0xff]
    %v575 = vld [vmem:[#allocation9 + $0x20] sm:$0xff]
    %v576 = vld [vmem:[#allocation9 + $0x28] sm:$0xff]
    %v577 = vld [vmem:[#allocation9 + $0x30] sm:$0xff]
    %v578 = vld [vmem:[#allocation9 + $0x38] sm:$0xff]
    %v579 = vld [vmem:[#allocation9 + $0x40] sm:$0xff]
    %v580 = vld [vmem:[#allocation9 + $0x48] sm:$0xff]
    %v581 = vld [vmem:[#allocation9 + $0x50] sm:$0xff]
    %v582 = vld [vmem:[#allocation9 + $0x58] sm:$0xff]
    %v583 = vld [vmem:[#allocation9 + $0x60] sm:$0xff]
    %v584 = vld [vmem:[#allocation9 + $0x68] sm:$0xff]
    %v585 = vld [vmem:[#allocation9 + $0x70] sm:$0xff]
    %v586 = vld [vmem:[#allocation9 + $0x78] sm:$0xff]
    %v587 = vld [vmem:[#allocation9 + $0x80] sm:$0xff]
    %v588 = vld [vmem:[#allocation9 + $0x88] sm:$0xff]
    %v589 = vld [vmem:[#allocation9 + $0x90] sm:$0xff]
    %v590 = vld [vmem:[#allocation9 + $0x98] sm:$0xff]
    %v591 = vld [vmem:[#allocation9 + $0xa0] sm:$0xff]
    %v592 = vld [vmem:[#allocation9 + $0xa8] sm:$0xff]
    %v593 = vld [vmem:[#allocation9 + $0xb0] sm:$0xff]
    %v594 = vld [vmem:[#allocation9 + $0xb8] sm:$0xff]
    %v595 = vld [vmem:[#allocation9 + $0xc0] sm:$0xff]
    %v596 = vld [vmem:[#allocation9 + $0xc8] sm:$0xff]
    %v597 = vld [vmem:[#allocation9 + $0xd0] sm:$0xff]
    %v598 = vld [vmem:[#allocation9 + $0xd8] sm:$0xff]
    %v599 = vld [vmem:[#allocation9 + $0xe0] sm:$0xff]
    %v600 = vld [vmem:[#allocation9 + $0xe8] sm:$0xff]
    %v601 = vld [vmem:[#allocation9 + $0xf0] sm:$0xff]
    %v602 = vld [vmem:[#allocation9 + $0xf8] sm:$0xff]
    %v603 = vld [vmem:[#allocation9 + $0x100] sm:$0xff]
    %v604 = vld [vmem:[#allocation9 + $0x108] sm:$0xff]
    %v605 = vld [vmem:[#allocation9 + $0x110] sm:$0xff]
    %v606 = vld [vmem:[#allocation9 + $0x118] sm:$0xff]
    %v607 = vld [vmem:[#allocation9 + $0x120] sm:$0xff]
    %v608 = vld [vmem:[#allocation9 + $0x128] sm:$0xff]
    %v609 = vld [vmem:[#allocation9 + $0x130] sm:$0xff]
    %v610 = vld [vmem:[#allocation9 + $0x138] sm:$0xff]
    %v611 = vld [vmem:[#allocation9 + $0x140] sm:$0xff]
    %v612 = vld [vmem:[#allocation9 + $0x148] sm:$0xff]
    %v613 = vld [vmem:[#allocation9 + $0x150] sm:$0xff]
    %v614 = vld [vmem:[#allocation9 + $0x158] sm:$0xff]
    %v615 = vld [vmem:[#allocation9 + $0x160] sm:$0xff]
    %v616 = vld [vmem:[#allocation9 + $0x168] sm:$0xff]
    %v617 = vld [vmem:[#allocation9 + $0x170] sm:$0xff]
    %v618 = vld [vmem:[#allocation9 + $0x178] sm:$0xff]
    %v619 = vld [vmem:[#allocation9 + $0x180] sm:$0xff]
    %v620 = vld [vmem:[#allocation9 + $0x188] sm:$0xff]
    %v621 = vld [vmem:[#allocation9 + $0x190] sm:$0xff]
    %v622 = vld [vmem:[#allocation9 + $0x198] sm:$0xff]
    %v623 = vld [vmem:[#allocation9 + $0x1a0] sm:$0xff]
    %v624 = vld [vmem:[#allocation9 + $0x1a8] sm:$0xff]
    %v625 = vld [vmem:[#allocation9 + $0x1b0] sm:$0xff]
    %v626 = vld [vmem:[#allocation9 + $0x1b8] sm:$0xff]
    %v627 = vld [vmem:[#allocation9 + $0x1c0] sm:$0xff]
    %v628 = vld [vmem:[#allocation9 + $0x1c8] sm:$0xff]
    %v629 = vld [vmem:[#allocation9 + $0x1d0] sm:$0xff]
    %v630 = vld [vmem:[#allocation9 + $0x1d8] sm:$0xff]
    %v631 = vld [vmem:[#allocation9 + $0x1e0] sm:$0xff]
    %v632 = vld [vmem:[#allocation9 + $0x1e8] sm:$0xff]
    %v633 = vld [vmem:[#allocation9 + $0x1f0] sm:$0xff]
    %v634 = vld [vmem:[#allocation9 + $0x1f8] sm:$0xff]
    %v635 = vld [vmem:[#allocation11] sm:$0xff]
    %v636 = vld [vmem:[#allocation11 + $0x8] sm:$0xff]
    %v637 = vld [vmem:[#allocation11 + $0x10] sm:$0xff]
    %v638 = vld [vmem:[#allocation11 + $0x18] sm:$0xff]
    %v639 = vld [vmem:[#allocation11 + $0x20] sm:$0xff]
    %v640 = vld [vmem:[#allocation11 + $0x28] sm:$0xff]
    %v641 = vld [vmem:[#allocation11 + $0x30] sm:$0xff]
    %v642 = vld [vmem:[#allocation11 + $0x38] sm:$0xff]
    %v643 = vld [vmem:[#allocation11 + $0x40] sm:$0xff]
    %v644 = vld [vmem:[#allocation11 + $0x48] sm:$0xff]
    %v645 = vld [vmem:[#allocation11 + $0x50] sm:$0xff]
    %v646 = vld [vmem:[#allocation11 + $0x58] sm:$0xff]
    %v647 = vld [vmem:[#allocation11 + $0x60] sm:$0xff]
    %v648 = vld [vmem:[#allocation11 + $0x68] sm:$0xff]
    %v649 = vld [vmem:[#allocation11 + $0x70] sm:$0xff]
    %v650 = vld [vmem:[#allocation11 + $0x78] sm:$0xff]
    %v651 = vld [vmem:[#allocation11 + $0x80] sm:$0xff]
    %v652 = vld [vmem:[#allocation11 + $0x88] sm:$0xff]
    %v653 = vld [vmem:[#allocation11 + $0x90] sm:$0xff]
    %v654 = vld [vmem:[#allocation11 + $0x98] sm:$0xff]
    %v655 = vld [vmem:[#allocation11 + $0xa0] sm:$0xff]
    %v656 = vld [vmem:[#allocation11 + $0xa8] sm:$0xff]
    %v657 = vld [vmem:[#allocation11 + $0xb0] sm:$0xff]
    %v658 = vld [vmem:[#allocation11 + $0xb8] sm:$0xff]
    %v659 = vld [vmem:[#allocation11 + $0xc0] sm:$0xff]
    %v660 = vld [vmem:[#allocation11 + $0xc8] sm:$0xff]
    %v661 = vld [vmem:[#allocation11 + $0xd0] sm:$0xff]
    %v662 = vld [vmem:[#allocation11 + $0xd8] sm:$0xff]
    %v663 = vld [vmem:[#allocation11 + $0xe0] sm:$0xff]
    %v664 = vld [vmem:[#allocation11 + $0xe8] sm:$0xff]
    %v665 = vld [vmem:[#allocation11 + $0xf0] sm:$0xff]
    %v666 = vld [vmem:[#allocation11 + $0xf8] sm:$0xff]
    %v667 = vld [vmem:[#allocation2] sm:$0xff]
    %v668 = vld [vmem:[#allocation2 + $0x8] sm:$0xff]
    %v669 = vld [vmem:[#allocation2 + $0x10] sm:$0xff]
    %v670 = vld [vmem:[#allocation2 + $0x18] sm:$0xff]
    %671 = vmatpush.msra.mxu0 %v631
    %672 = vmatpush.msra.mxu0 %v627
    %673 = vmatpush.msra.mxu0 %v623
    %674 = vmatpush.msra.mxu0 %v619
    %675 = vmatpush.msra.mxu0 %v615
    %676 = vmatpush.msra.mxu0 %v611
    %677 = vmatpush.msra.mxu0 %v607
    %678 = vmatpush.msra.mxu0 %v603
    %679 = vmatpush.msra.mxu0 %v599
    %680 = vmatpush.msra.mxu0 %v595
    %681 = vmatpush.msra.mxu0 %v591
    %682 = vmatpush.msra.mxu0 %v587
    %683 = vmatpush.msra.mxu0 %v583
    %684 = vmatpush.msra.mxu0 %v579
    %685 = vmatpush.msra.mxu0 %v575
    %686 = vmatpush.msra.mxu0 %v571
    %687 = vmatmul.f32.gmra.mxu0 0.0
    %v688 = vpop.f32.mrf.mxu0
    %v689 = vadd.f32 %v667, %v688
    %690 = vdwg.mxu0
    %691 = vmatpush.msra.mxu0 %v632
    %692 = vmatpush.msra.mxu0 %v628
    %693 = vmatpush.msra.mxu0 %v624
    %694 = vmatpush.msra.mxu0 %v620
    %695 = vmatpush.msra.mxu0 %v616
    %696 = vmatpush.msra.mxu0 %v612
    %697 = vmatpush.msra.mxu0 %v608
    %698 = vmatpush.msra.mxu0 %v604
    %699 = vmatpush.msra.mxu0 %v600
    %700 = vmatpush.msra.mxu0 %v596
    %701 = vmatpush.msra.mxu0 %v592
    %702 = vmatpush.msra.mxu0 %v588
    %703 = vmatpush.msra.mxu0 %v584
    %704 = vmatpush.msra.mxu0 %v580
    %705 = vmatpush.msra.mxu0 %v576
    %706 = vmatpush.msra.mxu0 %v572
    %707 = vmatmul.f32.gmra.mxu0 0.0
    %v708 = vpop.f32.mrf.mxu0
    %v709 = vadd.f32 %v668, %v708
    %710 = vdwg.mxu0
    %711 = vmatpush.msra.mxu0 %v633
    %712 = vmatpush.msra.mxu0 %v629
    %713 = vmatpush.msra.mxu0 %v625
    %714 = vmatpush.msra.mxu0 %v621
    %715 = vmatpush.msra.mxu0 %v617
    %716 = vmatpush.msra.mxu0 %v613
    %717 = vmatpush.msra.mxu0 %v609
    %718 = vmatpush.msra.mxu0 %v605
    %719 = vmatpush.msra.mxu0 %v601
    %720 = vmatpush.msra.mxu0 %v597
    %721 = vmatpush.msra.mxu0 %v593
    %722 = vmatpush.msra.mxu0 %v589
    %723 = vmatpush.msra.mxu0 %v585
    %724 = vmatpush.msra.mxu0 %v581
    %725 = vmatpush.msra.mxu0 %v577
    %726 = vmatpush.msra.mxu0 %v573
    %727 = vmatmul.f32.gmra.mxu0 0.0
    %v728 = vpop.f32.mrf.mxu0
    %v729 = vadd.f32 %v669, %v728
    %730 = vdwg.mxu0
    %731 = vmatpush.msra.mxu0 %v634
    %732 = vmatpush.msra.mxu0 %v630
    %733 = vmatpush.msra.mxu0 %v626
    %734 = vmatpush.msra.mxu0 %v622
    %735 = vmatpush.msra.mxu0 %v618
    %736 = vmatpush.msra.mxu0 %v614
    %737 = vmatpush.msra.mxu0 %v610
    %738 = vmatpush.msra.mxu0 %v606
    %739 = vmatpush.msra.mxu0 %v602
    %740 = vmatpush.msra.mxu0 %v598
    %741 = vmatpush.msra.mxu0 %v594
    %742 = vmatpush.msra.mxu0 %v590
    %743 = vmatpush.msra.mxu0 %v586
    %744 = vmatpush.msra.mxu0 %v582
    %745 = vmatpush.msra.mxu0 %v578
    %746 = vmatpush.msra.mxu0 %v574
    %747 = vmatmul.f32.gmra.mxu0 0.0
    %v748 = vpop.f32.mrf.mxu0
    %v749 = vadd.f32 %v670, %v748
    %750 = vdwg.mxu0
    %s751 = scalar_lea.vmem [#allocation2], 448
    %v752 = vld [vmem:[%s751 + $0x20] sm:$0xff]
    %v753 = vld [vmem:[%s751 + $0x28] sm:$0xff]
    %v754 = vld [vmem:[%s751 + $0x30] sm:$0xff]
    %v755 = vld [vmem:[%s751 + $0x38] sm:$0xff]
    %v756 = vadd.f32 %v689, %v752
    %v757 = vadd.f32 %v709, %v753
    %v758 = vadd.f32 %v729, %v754
    %v759 = vadd.f32 %v749, %v755
    %v760 = vxor.u32 %v756, 2147483648
    %v761 = vmul.f32 %v760, 1.442695
    %v762 = vpow.pop %v761
    %v763 = vadd.f32 %v762, 1.0
    %v764 = vrcp.pop %v763
    %v765 = vmul.f32 %v763, %v764
    %v766 = vsub.f32 1.0, %v765
    %v767 = vmul.f32 %v764, %v766
    %v768 = vadd.f32 %v764, %v767
    %vm769 = vweird.f32 %v763
    %vm770 = vweird.f32 %v764
    %vm771 = vmor %vm769, %vm770
    %v772 = vsel %vm771, %v764, %v768
    %v773 = vand.u32 2147483647, %v763
    %vm774 = vcmp.eq.f32.partialorder %v773, 8.507059e+37
    %v775 = vand.u32 %v763, 2147483648
    %v776 = vor.u32 1.1754944e-38, %v775
    %v777 = vsel %vm774, %v776, %v772
    %v778 = vmul.f32 1.0, %v777
    %v779 = vxor.u32 %v757, 2147483648
    %v780 = vmul.f32 %v779, 1.442695
    %v781 = vpow.pop %v780
    %v782 = vadd.f32 %v781, 1.0
    %v783 = vrcp.pop %v782
    %v784 = vmul.f32 %v782, %v783
    %v785 = vsub.f32 1.0, %v784
    %v786 = vmul.f32 %v783, %v785
    %v787 = vadd.f32 %v783, %v786
    %vm788 = vweird.f32 %v782
    %vm789 = vweird.f32 %v783
    %vm790 = vmor %vm788, %vm789
    %v791 = vsel %vm790, %v783, %v787
    %v792 = vand.u32 2147483647, %v782
    %vm793 = vcmp.eq.f32.partialorder %v792, 8.507059e+37
    %v794 = vand.u32 %v782, 2147483648
    %v795 = vor.u32 1.1754944e-38, %v794
    %v796 = vsel %vm793, %v795, %v791
    %v797 = vmul.f32 1.0, %v796
    %v798 = vtanh.pop %v758
    %v799 = vxor.u32 %v759, 2147483648
    %v800 = vmul.f32 %v799, 1.442695
    %v801 = vpow.pop %v800
    %v802 = vadd.f32 %v801, 1.0
    %v803 = vrcp.pop %v802
    %v804 = vmul.f32 %v802, %v803
    %v805 = vsub.f32 1.0, %v804
    %v806 = vmul.f32 %v803, %v805
    %v807 = vadd.f32 %v803, %v806
    %vm808 = vweird.f32 %v802
    %vm809 = vweird.f32 %v803
    %vm810 = vmor %vm808, %vm809
    %v811 = vsel %vm810, %v803, %v807
    %v812 = vand.u32 2147483647, %v802
    %vm813 = vcmp.eq.f32.partialorder %v812, 8.507059e+37
    %v814 = vand.u32 %v802, 2147483648
    %v815 = vor.u32 1.1754944e-38, %v814
    %v816 = vsel %vm813, %v815, %v811
    %v817 = vmul.f32 1.0, %v816
    %v818 = vmul.f32 %v797, 0.0
    %v819 = vmul.f32 %v778, %v798
    %v820 = vadd.f32 %v818, %v819
    %v821 = vtanh.pop %v820
    %v822 = vmul.f32 %v817, %v821
    %823 = vmatpush.msra.mxu0 %v665
    %824 = vmatpush.msra.mxu0 %v663
    %825 = vmatpush.msra.mxu0 %v661
    %826 = vmatpush.msra.mxu0 %v659
    %827 = vmatpush.msra.mxu0 %v657
    %828 = vmatpush.msra.mxu0 %v655
    %829 = vmatpush.msra.mxu0 %v653
    %830 = vmatpush.msra.mxu0 %v651
    %831 = vmatpush.msra.mxu0 %v649
    %832 = vmatpush.msra.mxu0 %v647
    %833 = vmatpush.msra.mxu0 %v645
    %834 = vmatpush.msra.mxu0 %v643
    %835 = vmatpush.msra.mxu0 %v641
    %836 = vmatpush.msra.mxu0 %v639
    %837 = vmatpush.msra.mxu0 %v637
    %838 = vmatpush.msra.mxu0 %v635
    %839 = vmatmul.f32.gmra.mxu0 %v822
    %v840 = vpop.f32.mrf.mxu0
    %v841 = vadd.f32 0.0, %v840
    %842 = vdwg.mxu0
    %843 = vmatpush.msra.mxu0 %v666
    %844 = vmatpush.msra.mxu0 %v664
    %845 = vmatpush.msra.mxu0 %v662
    %846 = vmatpush.msra.mxu0 %v660
    %847 = vmatpush.msra.mxu0 %v658
    %848 = vmatpush.msra.mxu0 %v656
    %849 = vmatpush.msra.mxu0 %v654
    %850 = vmatpush.msra.mxu0 %v652
    %851 = vmatpush.msra.mxu0 %v650
    %852 = vmatpush.msra.mxu0 %v648
    %853 = vmatpush.msra.mxu0 %v646
    %854 = vmatpush.msra.mxu0 %v644
    %855 = vmatpush.msra.mxu0 %v642
    %856 = vmatpush.msra.mxu0 %v640
    %857 = vmatpush.msra.mxu0 %v638
    %858 = vmatpush.msra.mxu0 %v636
    %859 = vmatmul.f32.gmra.mxu0 %v822
    %v860 = vpop.f32.mrf.mxu0
    %v861 = vadd.f32 0.0, %v860
    %862 = vdwg.mxu0
    %v863 = vld [vmem:[#allocation12] sm:$0xff]
    %v864 = vadd.f32 %v863, %v841
    %865 = vst [vmem:[#allocation12] sm:$0xff] %v864
    %s866 = scalar_lea.vmem [#allocation12], 56
    %v867 = vld [vmem:[%s866] sm:$0xff]
    %v868 = vadd.f32 %v867, %v861
    %869 = vst [vmem:[%s866] sm:$0xff] %v868
    %s870 = scalar_lea.vmem [#allocation2], 64
    %v871 = vld [vmem:[%s870] sm:$0xff]
    %v872 = vld [vmem:[%s870 + $0x8] sm:$0xff]
    %v873 = vld [vmem:[%s870 + $0x10] sm:$0xff]
    %v874 = vld [vmem:[%s870 + $0x18] sm:$0xff]
    %875 = vmatpush.msra.mxu0 %v631
    %876 = vmatpush.msra.mxu0 %v627
    %877 = vmatpush.msra.mxu0 %v623
    %878 = vmatpush.msra.mxu0 %v619
    %879 = vmatpush.msra.mxu0 %v615
    %880 = vmatpush.msra.mxu0 %v611
    %881 = vmatpush.msra.mxu0 %v607
    %882 = vmatpush.msra.mxu0 %v603
    %883 = vmatpush.msra.mxu0 %v599
    %884 = vmatpush.msra.mxu0 %v595
    %885 = vmatpush.msra.mxu0 %v591
    %886 = vmatpush.msra.mxu0 %v587
    %887 = vmatpush.msra.mxu0 %v583
    %888 = vmatpush.msra.mxu0 %v579
    %889 = vmatpush.msra.mxu0 %v575
    %890 = vmatpush.msra.mxu0 %v571
    %891 = vmatmul.f32.gmra.mxu0 %v822
    %v892 = vpop.f32.mrf.mxu0
    %v893 = vadd.f32 %v871, %v892
    %894 = vdwg.mxu0
    %895 = vmatpush.msra.mxu0 %v632
    %896 = vmatpush.msra.mxu0 %v628
    %897 = vmatpush.msra.mxu0 %v624
    %898 = vmatpush.msra.mxu0 %v620
    %899 = vmatpush.msra.mxu0 %v616
    %900 = vmatpush.msra.mxu0 %v612
    %901 = vmatpush.msra.mxu0 %v608
    %902 = vmatpush.msra.mxu0 %v604
    %903 = vmatpush.msra.mxu0 %v600
    %904 = vmatpush.msra.mxu0 %v596
    %905 = vmatpush.msra.mxu0 %v592
    %906 = vmatpush.msra.mxu0 %v588
    %907 = vmatpush.msra.mxu0 %v584
    %908 = vmatpush.msra.mxu0 %v580
    %909 = vmatpush.msra.mxu0 %v576
    %910 = vmatpush.msra.mxu0 %v572
    %911 = vmatmul.f32.gmra.mxu0 %v822
    %v912 = vpop.f32.mrf.mxu0
    %v913 = vadd.f32 %v872, %v912
    %914 = vdwg.mxu0
    %915 = vmatpush.msra.mxu0 %v633
    %916 = vmatpush.msra.mxu0 %v629
    %917 = vmatpush.msra.mxu0 %v625
    %918 = vmatpush.msra.mxu0 %v621
    %919 = vmatpush.msra.mxu0 %v617
    %920 = vmatpush.msra.mxu0 %v613
    %921 = vmatpush.msra.mxu0 %v609
    %922 = vmatpush.msra.mxu0 %v605
    %923 = vmatpush.msra.mxu0 %v601
    %924 = vmatpush.msra.mxu0 %v597
    %925 = vmatpush.msra.mxu0 %v593
    %926 = vmatpush.msra.mxu0 %v589
    %927 = vmatpush.msra.mxu0 %v585
    %928 = vmatpush.msra.mxu0 %v581
    %929 = vmatpush.msra.mxu0 %v577
    %930 = vmatpush.msra.mxu0 %v573
    %931 = vmatmul.f32.gmra.mxu0 %v822
    %v932 = vpop.f32.mrf.mxu0
    %v933 = vadd.f32 %v873, %v932
    %934 = vdwg.mxu0
    %935 = vmatpush.msra.mxu0 %v634
    %936 = vmatpush.msra.mxu0 %v630
    %937 = vmatpush.msra.mxu0 %v626
    %938 = vmatpush.msra.mxu0 %v622
    %939 = vmatpush.msra.mxu0 %v618
    %940 = vmatpush.msra.mxu0 %v614
    %941 = vmatpush.msra.mxu0 %v610
    %942 = vmatpush.msra.mxu0 %v606
    %943 = vmatpush.msra.mxu0 %v602
    %944 = vmatpush.msra.mxu0 %v598
    %945 = vmatpush.msra.mxu0 %v594
    %946 = vmatpush.msra.mxu0 %v590
    %947 = vmatpush.msra.mxu0 %v586
    %948 = vmatpush.msra.mxu0 %v582
    %949 = vmatpush.msra.mxu0 %v578
    %950 = vmatpush.msra.mxu0 %v574
    %951 = vmatmul.f32.gmra.mxu0 %v822
    %v952 = vpop.f32.mrf.mxu0
    %v953 = vadd.f32 %v874, %v952
    %954 = vdwg.mxu0
    %s955 = scalar_lea.vmem [#allocation2], 384
    %v956 = vld [vmem:[%s955 + $0x20] sm:$0xff]
    %v957 = vld [vmem:[%s955 + $0x28] sm:$0xff]
    %v958 = vld [vmem:[%s955 + $0x30] sm:$0xff]
    %v959 = vld [vmem:[%s955 + $0x38] sm:$0xff]
    %v960 = vadd.f32 %v893, %v956
    %v961 = vadd.f32 %v913, %v957
    %v962 = vadd.f32 %v933, %v958
    %v963 = vadd.f32 %v953, %v959
    %v964 = vxor.u32 %v960, 2147483648
    %v965 = vmul.f32 %v964, 1.442695
    %v966 = vpow.pop %v965
    %v967 = vadd.f32 %v966, 1.0
    %v968 = vrcp.pop %v967
    %v969 = vmul.f32 %v967, %v968
    %v970 = vsub.f32 1.0, %v969
    %v971 = vmul.f32 %v968, %v970
    %v972 = vadd.f32 %v968, %v971
    %vm973 = vweird.f32 %v967
    %vm974 = vweird.f32 %v968
    %vm975 = vmor %vm973, %vm974
    %v976 = vsel %vm975, %v968, %v972
    %v977 = vand.u32 2147483647, %v967
    %vm978 = vcmp.eq.f32.partialorder %v977, 8.507059e+37
    %v979 = vand.u32 %v967, 2147483648
    %v980 = vor.u32 1.1754944e-38, %v979
    %v981 = vsel %vm978, %v980, %v976
    %v982 = vmul.f32 1.0, %v981
    %v983 = vxor.u32 %v961, 2147483648
    %v984 = vmul.f32 %v983, 1.442695
    %v985 = vpow.pop %v984
    %v986 = vadd.f32 %v985, 1.0
    %v987 = vrcp.pop %v986
    %v988 = vmul.f32 %v986, %v987
    %v989 = vsub.f32 1.0, %v988
    %v990 = vmul.f32 %v987, %v989
    %v991 = vadd.f32 %v987, %v990
    %vm992 = vweird.f32 %v986
    %vm993 = vweird.f32 %v987
    %vm994 = vmor %vm992, %vm993
    %v995 = vsel %vm994, %v987, %v991
    %v996 = vand.u32 2147483647, %v986
    %vm997 = vcmp.eq.f32.partialorder %v996, 8.507059e+37
    %v998 = vand.u32 %v986, 2147483648
    %v999 = vor.u32 1.1754944e-38, %v998
    %v1000 = vsel %vm997, %v999, %v995
    %v1001 = vmul.f32 1.0, %v1000
    %v1002 = vtanh.pop %v962
    %v1003 = vxor.u32 %v963, 2147483648
    %v1004 = vmul.f32 %v1003, 1.442695
    %v1005 = vpow.pop %v1004
    %v1006 = vadd.f32 %v1005, 1.0
    %v1007 = vrcp.pop %v1006
    %v1008 = vmul.f32 %v1006, %v1007
    %v1009 = vsub.f32 1.0, %v1008
    %v1010 = vmul.f32 %v1007, %v1009
    %v1011 = vadd.f32 %v1007, %v1010
    %vm1012 = vweird.f32 %v1006
    %vm1013 = vweird.f32 %v1007
    %vm1014 = vmor %vm1012, %vm1013
    %v1015 = vsel %vm1014, %v1007, %v1011
    %v1016 = vand.u32 2147483647, %v1006
    %vm1017 = vcmp.eq.f32.partialorder %v1016, 8.507059e+37
    %v1018 = vand.u32 %v1006, 2147483648
    %v1019 = vor.u32 1.1754944e-38, %v1018
    %v1020 = vsel %vm1017, %v1019, %v1015
    %v1021 = vmul.f32 1.0, %v1020
    %v1022 = vmul.f32 %v1001, %v820
    %v1023 = vmul.f32 %v982, %v1002
    %v1024 = vadd.f32 %v1022, %v1023
    %v1025 = vtanh.pop %v1024
    %v1026 = vmul.f32 %v1021, %v1025
    %1027 = vmatpush.msra.mxu0 %v665
    %1028 = vmatpush.msra.mxu0 %v663
    %1029 = vmatpush.msra.mxu0 %v661
    %1030 = vmatpush.msra.mxu0 %v659
    %1031 = vmatpush.msra.mxu0 %v657
    %1032 = vmatpush.msra.mxu0 %v655
    %1033 = vmatpush.msra.mxu0 %v653
    %1034 = vmatpush.msra.mxu0 %v651
    %1035 = vmatpush.msra.mxu0 %v649
    %1036 = vmatpush.msra.mxu0 %v647
    %1037 = vmatpush.msra.mxu0 %v645
    %1038 = vmatpush.msra.mxu0 %v643
    %1039 = vmatpush.msra.mxu0 %v641
    %1040 = vmatpush.msra.mxu0 %v639
    %1041 = vmatpush.msra.mxu0 %v637
    %1042 = vmatpush.msra.mxu0 %v635
    %1043 = vmatmul.f32.gmra.mxu0 %v1026
    %v1044 = vpop.f32.mrf.mxu0
    %v1045 = vadd.f32 0.0, %v1044
    %1046 = vdwg.mxu0
    %1047 = vmatpush.msra.mxu0 %v666
    %1048 = vmatpush.msra.mxu0 %v664
    %1049 = vmatpush.msra.mxu0 %v662
    %1050 = vmatpush.msra.mxu0 %v660
    %1051 = vmatpush.msra.mxu0 %v658
    %1052 = vmatpush.msra.mxu0 %v656
    %1053 = vmatpush.msra.mxu0 %v654
    %1054 = vmatpush.msra.mxu0 %v652
    %1055 = vmatpush.msra.mxu0 %v650
    %1056 = vmatpush.msra.mxu0 %v648
    %1057 = vmatpush.msra.mxu0 %v646
    %1058 = vmatpush.msra.mxu0 %v644
    %1059 = vmatpush.msra.mxu0 %v642
    %1060 = vmatpush.msra.mxu0 %v640
    %1061 = vmatpush.msra.mxu0 %v638
    %1062 = vmatpush.msra.mxu0 %v636
    %1063 = vmatmul.f32.gmra.mxu0 %v1026
    %v1064 = vpop.f32.mrf.mxu0
    %v1065 = vadd.f32 0.0, %v1064
    %1066 = vdwg.mxu0
    %s1067 = scalar_lea.vmem [#allocation12], 8
    %v1068 = vld [vmem:[%s1067] sm:$0xff]
    %v1069 = vadd.f32 %v1068, %v1045
    %1070 = vst [vmem:[%s1067] sm:$0xff] %v1069
    %s1071 = scalar_lea.vmem [#allocation12], 48
    %v1072 = vld [vmem:[%s1071] sm:$0xff]
    %v1073 = vadd.f32 %v1072, %v1065
    %1074 = vst [vmem:[%s1071] sm:$0xff] %v1073
    %s1075 = scalar_lea.vmem [#allocation2], 128
    %v1076 = vld [vmem:[%s1075] sm:$0xff]
    %v1077 = vld [vmem:[%s1075 + $0x8] sm:$0xff]
    %v1078 = vld [vmem:[%s1075 + $0x10] sm:$0xff]
    %v1079 = vld [vmem:[%s1075 + $0x18] sm:$0xff]
    %1080 = vmatpush.msra.mxu0 %v631
    %1081 = vmatpush.msra.mxu0 %v627
    %1082 = vmatpush.msra.mxu0 %v623
    %1083 = vmatpush.msra.mxu0 %v619
    %1084 = vmatpush.msra.mxu0 %v615
    %1085 = vmatpush.msra.mxu0 %v611
    %1086 = vmatpush.msra.mxu0 %v607
    %1087 = vmatpush.msra.mxu0 %v603
    %1088 = vmatpush.msra.mxu0 %v599
    %1089 = vmatpush.msra.mxu0 %v595
    %1090 = vmatpush.msra.mxu0 %v591
    %1091 = vmatpush.msra.mxu0 %v587
    %1092 = vmatpush.msra.mxu0 %v583
    %1093 = vmatpush.msra.mxu0 %v579
    %1094 = vmatpush.msra.mxu0 %v575
    %1095 = vmatpush.msra.mxu0 %v571
    %1096 = vmatmul.f32.gmra.mxu0 %v1026
    %v1097 = vpop.f32.mrf.mxu0
    %v1098 = vadd.f32 %v1076, %v1097
    %1099 = vdwg.mxu0
    %1100 = vmatpush.msra.mxu0 %v632
    %1101 = vmatpush.msra.mxu0 %v628
    %1102 = vmatpush.msra.mxu0 %v624
    %1103 = vmatpush.msra.mxu0 %v620
    %1104 = vmatpush.msra.mxu0 %v616
    %1105 = vmatpush.msra.mxu0 %v612
    %1106 = vmatpush.msra.mxu0 %v608
    %1107 = vmatpush.msra.mxu0 %v604
    %1108 = vmatpush.msra.mxu0 %v600
    %1109 = vmatpush.msra.mxu0 %v596
    %1110 = vmatpush.msra.mxu0 %v592
    %1111 = vmatpush.msra.mxu0 %v588
    %1112 = vmatpush.msra.mxu0 %v584
    %1113 = vmatpush.msra.mxu0 %v580
    %1114 = vmatpush.msra.mxu0 %v576
    %1115 = vmatpush.msra.mxu0 %v572
    %1116 = vmatmul.f32.gmra.mxu0 %v1026
    %v1117 = vpop.f32.mrf.mxu0
    %v1118 = vadd.f32 %v1077, %v1117
    %1119 = vdwg.mxu0
    %1120 = vmatpush.msra.mxu0 %v633
    %1121 = vmatpush.msra.mxu0 %v629
    %1122 = vmatpush.msra.mxu0 %v625
    %1123 = vmatpush.msra.mxu0 %v621
    %1124 = vmatpush.msra.mxu0 %v617
    %1125 = vmatpush.msra.mxu0 %v613
    %1126 = vmatpush.msra.mxu0 %v609
    %1127 = vmatpush.msra.mxu0 %v605
    %1128 = vmatpush.msra.mxu0 %v601
    %1129 = vmatpush.msra.mxu0 %v597
    %1130 = vmatpush.msra.mxu0 %v593
    %1131 = vmatpush.msra.mxu0 %v589
    %1132 = vmatpush.msra.mxu0 %v585
    %1133 = vmatpush.msra.mxu0 %v581
    %1134 = vmatpush.msra.mxu0 %v577
    %1135 = vmatpush.msra.mxu0 %v573
    %1136 = vmatmul.f32.gmra.mxu0 %v1026
    %v1137 = vpop.f32.mrf.mxu0
    %v1138 = vadd.f32 %v1078, %v1137
    %1139 = vdwg.mxu0
    %1140 = vmatpush.msra.mxu0 %v634
    %1141 = vmatpush.msra.mxu0 %v630
    %1142 = vmatpush.msra.mxu0 %v626
    %1143 = vmatpush.msra.mxu0 %v622
    %1144 = vmatpush.msra.mxu0 %v618
    %1145 = vmatpush.msra.mxu0 %v614
    %1146 = vmatpush.msra.mxu0 %v610
    %1147 = vmatpush.msra.mxu0 %v606
    %1148 = vmatpush.msra.mxu0 %v602
    %1149 = vmatpush.msra.mxu0 %v598
    %1150 = vmatpush.msra.mxu0 %v594
    %1151 = vmatpush.msra.mxu0 %v590
    %1152 = vmatpush.msra.mxu0 %v586
    %1153 = vmatpush.msra.mxu0 %v582
    %1154 = vmatpush.msra.mxu0 %v578
    %1155 = vmatpush.msra.mxu0 %v574
    %1156 = vmatmul.f32.gmra.mxu0 %v1026
    %v1157 = vpop.f32.mrf.mxu0
    %v1158 = vadd.f32 %v1079, %v1157
    %1159 = vdwg.mxu0
    %s1160 = scalar_lea.vmem [#allocation2], 320
    %v1161 = vld [vmem:[%s1160 + $0x20] sm:$0xff]
    %v1162 = vld [vmem:[%s1160 + $0x28] sm:$0xff]
    %v1163 = vld [vmem:[%s1160 + $0x30] sm:$0xff]
    %v1164 = vld [vmem:[%s1160 + $0x38] sm:$0xff]
    %v1165 = vadd.f32 %v1098, %v1161
    %v1166 = vadd.f32 %v1118, %v1162
    %v1167 = vadd.f32 %v1138, %v1163
    %v1168 = vadd.f32 %v1158, %v1164
    %v1169 = vxor.u32 %v1165, 2147483648
    %v1170 = vmul.f32 %v1169, 1.442695
    %v1171 = vpow.pop %v1170
    %v1172 = vadd.f32 %v1171, 1.0
    %v1173 = vrcp.pop %v1172
    %v1174 = vmul.f32 %v1172, %v1173
    %v1175 = vsub.f32 1.0, %v1174
    %v1176 = vmul.f32 %v1173, %v1175
    %v1177 = vadd.f32 %v1173, %v1176
    %vm1178 = vweird.f32 %v1172
    %vm1179 = vweird.f32 %v1173
    %vm1180 = vmor %vm1178, %vm1179
    %v1181 = vsel %vm1180, %v1173, %v1177
    %v1182 = vand.u32 2147483647, %v1172
    %vm1183 = vcmp.eq.f32.partialorder %v1182, 8.507059e+37
    %v1184 = vand.u32 %v1172, 2147483648
    %v1185 = vor.u32 1.1754944e-38, %v1184
    %v1186 = vsel %vm1183, %v1185, %v1181
    %v1187 = vmul.f32 1.0, %v1186
    %v1188 = vxor.u32 %v1166, 2147483648
    %v1189 = vmul.f32 %v1188, 1.442695
    %v1190 = vpow.pop %v1189
    %v1191 = vadd.f32 %v1190, 1.0
    %v1192 = vrcp.pop %v1191
    %v1193 = vmul.f32 %v1191, %v1192
    %v1194 = vsub.f32 1.0, %v1193
    %v1195 = vmul.f32 %v1192, %v1194
    %v1196 = vadd.f32 %v1192, %v1195
    %vm1197 = vweird.f32 %v1191
    %vm1198 = vweird.f32 %v1192
    %vm1199 = vmor %vm1197, %vm1198
    %v1200 = vsel %vm1199, %v1192, %v1196
    %v1201 = vand.u32 2147483647, %v1191
    %vm1202 = vcmp.eq.f32.partialorder %v1201, 8.507059e+37
    %v1203 = vand.u32 %v1191, 2147483648
    %v1204 = vor.u32 1.1754944e-38, %v1203
    %v1205 = vsel %vm1202, %v1204, %v1200
    %v1206 = vmul.f32 1.0, %v1205
    %v1207 = vtanh.pop %v1167
    %v1208 = vxor.u32 %v1168, 2147483648
    %v1209 = vmul.f32 %v1208, 1.442695
    %v1210 = vpow.pop %v1209
    %v1211 = vadd.f32 %v1210, 1.0
    %v1212 = vrcp.pop %v1211
    %v1213 = vmul.f32 %v1211, %v1212
    %v1214 = vsub.f32 1.0, %v1213
    %v1215 = vmul.f32 %v1212, %v1214
    %v1216 = vadd.f32 %v1212, %v1215
    %vm1217 = vweird.f32 %v1211
    %vm1218 = vweird.f32 %v1212
    %vm1219 = vmor %vm1217, %vm1218
    %v1220 = vsel %vm1219, %v1212, %v1216
    %v1221 = vand.u32 2147483647, %v1211
    %vm1222 = vcmp.eq.f32.partialorder %v1221, 8.507059e+37
    %v1223 = vand.u32 %v1211, 2147483648
    %v1224 = vor.u32 1.1754944e-38, %v1223
    %v1225 = vsel %vm1222, %v1224, %v1220
    %v1226 = vmul.f32 1.0, %v1225
    %v1227 = vmul.f32 %v1206, %v1024
    %v1228 = vmul.f32 %v1187, %v1207
    %v1229 = vadd.f32 %v1227, %v1228
    %v1230 = vtanh.pop %v1229
    %v1231 = vmul.f32 %v1226, %v1230
    %1232 = vmatpush.msra.mxu0 %v665
    %1233 = vmatpush.msra.mxu0 %v663
    %1234 = vmatpush.msra.mxu0 %v661
    %1235 = vmatpush.msra.mxu0 %v659
    %1236 = vmatpush.msra.mxu0 %v657
    %1237 = vmatpush.msra.mxu0 %v655
    %1238 = vmatpush.msra.mxu0 %v653
    %1239 = vmatpush.msra.mxu0 %v651
    %1240 = vmatpush.msra.mxu0 %v649
    %1241 = vmatpush.msra.mxu0 %v647
    %1242 = vmatpush.msra.mxu0 %v645
    %1243 = vmatpush.msra.mxu0 %v643
    %1244 = vmatpush.msra.mxu0 %v641
    %1245 = vmatpush.msra.mxu0 %v639
    %1246 = vmatpush.msra.mxu0 %v637
    %1247 = vmatpush.msra.mxu0 %v635
    %1248 = vmatmul.f32.gmra.mxu0 %v1231
    %v1249 = vpop.f32.mrf.mxu0
    %v1250 = vadd.f32 0.0, %v1249
    %1251 = vdwg.mxu0
    %1252 = vmatpush.msra.mxu0 %v666
    %1253 = vmatpush.msra.mxu0 %v664
    %1254 = vmatpush.msra.mxu0 %v662
    %1255 = vmatpush.msra.mxu0 %v660
    %1256 = vmatpush.msra.mxu0 %v658
    %1257 = vmatpush.msra.mxu0 %v656
    %1258 = vmatpush.msra.mxu0 %v654
    %1259 = vmatpush.msra.mxu0 %v652
    %1260 = vmatpush.msra.mxu0 %v650
    %1261 = vmatpush.msra.mxu0 %v648
    %1262 = vmatpush.msra.mxu0 %v646
    %1263 = vmatpush.msra.mxu0 %v644
    %1264 = vmatpush.msra.mxu0 %v642
    %1265 = vmatpush.msra.mxu0 %v640
    %1266 = vmatpush.msra.mxu0 %v638
    %1267 = vmatpush.msra.mxu0 %v636
    %1268 = vmatmul.f32.gmra.mxu0 %v1231
    %v1269 = vpop.f32.mrf.mxu0
    %v1270 = vadd.f32 0.0, %v1269
    %1271 = vdwg.mxu0
    %s1272 = scalar_lea.vmem [#allocation12], 16
    %v1273 = vld [vmem:[%s1272] sm:$0xff]
    %v1274 = vadd.f32 %v1273, %v1250
    %1275 = vst [vmem:[%s1272] sm:$0xff] %v1274
    %s1276 = scalar_lea.vmem [#allocation12], 40
    %v1277 = vld [vmem:[%s1276] sm:$0xff]
    %v1278 = vadd.f32 %v1277, %v1270
    %1279 = vst [vmem:[%s1276] sm:$0xff] %v1278
    %s1280 = scalar_lea.vmem [#allocation2], 192
    %v1281 = vld [vmem:[%s1280] sm:$0xff]
    %v1282 = vld [vmem:[%s1280 + $0x8] sm:$0xff]
    %v1283 = vld [vmem:[%s1280 + $0x10] sm:$0xff]
    %v1284 = vld [vmem:[%s1280 + $0x18] sm:$0xff]
    %1285 = vmatpush.msra.mxu0 %v631
    %1286 = vmatpush.msra.mxu0 %v627
    %1287 = vmatpush.msra.mxu0 %v623
    %1288 = vmatpush.msra.mxu0 %v619
    %1289 = vmatpush.msra.mxu0 %v615
    %1290 = vmatpush.msra.mxu0 %v611
    %1291 = vmatpush.msra.mxu0 %v607
    %1292 = vmatpush.msra.mxu0 %v603
    %1293 = vmatpush.msra.mxu0 %v599
    %1294 = vmatpush.msra.mxu0 %v595
    %1295 = vmatpush.msra.mxu0 %v591
    %1296 = vmatpush.msra.mxu0 %v587
    %1297 = vmatpush.msra.mxu0 %v583
    %1298 = vmatpush.msra.mxu0 %v579
    %1299 = vmatpush.msra.mxu0 %v575
    %1300 = vmatpush.msra.mxu0 %v571
    %1301 = vmatmul.f32.gmra.mxu0 %v1231
    %v1302 = vpop.f32.mrf.mxu0
    %v1303 = vadd.f32 %v1281, %v1302
    %1304 = vdwg.mxu0
    %1305 = vmatpush.msra.mxu0 %v632
    %1306 = vmatpush.msra.mxu0 %v628
    %1307 = vmatpush.msra.mxu0 %v624
    %1308 = vmatpush.msra.mxu0 %v620
    %1309 = vmatpush.msra.mxu0 %v616
    %1310 = vmatpush.msra.mxu0 %v612
    %1311 = vmatpush.msra.mxu0 %v608
    %1312 = vmatpush.msra.mxu0 %v604
    %1313 = vmatpush.msra.mxu0 %v600
    %1314 = vmatpush.msra.mxu0 %v596
    %1315 = vmatpush.msra.mxu0 %v592
    %1316 = vmatpush.msra.mxu0 %v588
    %1317 = vmatpush.msra.mxu0 %v584
    %1318 = vmatpush.msra.mxu0 %v580
    %1319 = vmatpush.msra.mxu0 %v576
    %1320 = vmatpush.msra.mxu0 %v572
    %1321 = vmatmul.f32.gmra.mxu0 %v1231
    %v1322 = vpop.f32.mrf.mxu0
    %v1323 = vadd.f32 %v1282, %v1322
    %1324 = vdwg.mxu0
    %1325 = vmatpush.msra.mxu0 %v633
    %1326 = vmatpush.msra.mxu0 %v629
    %1327 = vmatpush.msra.mxu0 %v625
    %1328 = vmatpush.msra.mxu0 %v621
    %1329 = vmatpush.msra.mxu0 %v617
    %1330 = vmatpush.msra.mxu0 %v613
    %1331 = vmatpush.msra.mxu0 %v609
    %1332 = vmatpush.msra.mxu0 %v605
    %1333 = vmatpush.msra.mxu0 %v601
    %1334 = vmatpush.msra.mxu0 %v597
    %1335 = vmatpush.msra.mxu0 %v593
    %1336 = vmatpush.msra.mxu0 %v589
    %1337 = vmatpush.msra.mxu0 %v585
    %1338 = vmatpush.msra.mxu0 %v581
    %1339 = vmatpush.msra.mxu0 %v577
    %1340 = vmatpush.msra.mxu0 %v573
    %1341 = vmatmul.f32.gmra.mxu0 %v1231
    %v1342 = vpop.f32.mrf.mxu0
    %v1343 = vadd.f32 %v1283, %v1342
    %1344 = vdwg.mxu0
    %1345 = vmatpush.msra.mxu0 %v634
    %1346 = vmatpush.msra.mxu0 %v630
    %1347 = vmatpush.msra.mxu0 %v626
    %1348 = vmatpush.msra.mxu0 %v622
    %1349 = vmatpush.msra.mxu0 %v618
    %1350 = vmatpush.msra.mxu0 %v614
    %1351 = vmatpush.msra.mxu0 %v610
    %1352 = vmatpush.msra.mxu0 %v606
    %1353 = vmatpush.msra.mxu0 %v602
    %1354 = vmatpush.msra.mxu0 %v598
    %1355 = vmatpush.msra.mxu0 %v594
    %1356 = vmatpush.msra.mxu0 %v590
    %1357 = vmatpush.msra.mxu0 %v586
    %1358 = vmatpush.msra.mxu0 %v582
    %1359 = vmatpush.msra.mxu0 %v578
    %1360 = vmatpush.msra.mxu0 %v574
    %1361 = vmatmul.f32.gmra.mxu0 %v1231
    %v1362 = vpop.f32.mrf.mxu0
    %v1363 = vadd.f32 %v1284, %v1362
    %1364 = vdwg.mxu0
    %s1365 = scalar_lea.vmem [#allocation2], 256
    %v1366 = vld [vmem:[%s1365 + $0x20] sm:$0xff]
    %v1367 = vld [vmem:[%s1365 + $0x28] sm:$0xff]
    %v1368 = vld [vmem:[%s1365 + $0x30] sm:$0xff]
    %v1369 = vld [vmem:[%s1365 + $0x38] sm:$0xff]
    %v1370 = vadd.f32 %v1303, %v1366
    %v1371 = vadd.f32 %v1323, %v1367
    %v1372 = vadd.f32 %v1343, %v1368
    %v1373 = vadd.f32 %v1363, %v1369
    %v1374 = vxor.u32 %v1370, 2147483648
    %v1375 = vmul.f32 %v1374, 1.442695
    %v1376 = vpow.pop %v1375
    %v1377 = vadd.f32 %v1376, 1.0
    %v1378 = vrcp.pop %v1377
    %v1379 = vmul.f32 %v1377, %v1378
    %v1380 = vsub.f32 1.0, %v1379
    %v1381 = vmul.f32 %v1378, %v1380
    %v1382 = vadd.f32 %v1378, %v1381
    %vm1383 = vweird.f32 %v1377
    %vm1384 = vweird.f32 %v1378
    %vm1385 = vmor %vm1383, %vm1384
    %v1386 = vsel %vm1385, %v1378, %v1382
    %v1387 = vand.u32 2147483647, %v1377
    %vm1388 = vcmp.eq.f32.partialorder %v1387, 8.507059e+37
    %v1389 = vand.u32 %v1377, 2147483648
    %v1390 = vor.u32 1.1754944e-38, %v1389
    %v1391 = vsel %vm1388, %v1390, %v1386
    %v1392 = vmul.f32 1.0, %v1391
    %v1393 = vxor.u32 %v1371, 2147483648
    %v1394 = vmul.f32 %v1393, 1.442695
    %v1395 = vpow.pop %v1394
    %v1396 = vadd.f32 %v1395, 1.0
    %v1397 = vrcp.pop %v1396
    %v1398 = vmul.f32 %v1396, %v1397
    %v1399 = vsub.f32 1.0, %v1398
    %v1400 = vmul.f32 %v1397, %v1399
    %v1401 = vadd.f32 %v1397, %v1400
    %vm1402 = vweird.f32 %v1396
    %vm1403 = vweird.f32 %v1397
    %vm1404 = vmor %vm1402, %vm1403
    %v1405 = vsel %vm1404, %v1397, %v1401
    %v1406 = vand.u32 2147483647, %v1396
    %vm1407 = vcmp.eq.f32.partialorder %v1406, 8.507059e+37
    %v1408 = vand.u32 %v1396, 2147483648
    %v1409 = vor.u32 1.1754944e-38, %v1408
    %v1410 = vsel %vm1407, %v1409, %v1405
    %v1411 = vmul.f32 1.0, %v1410
    %v1412 = vtanh.pop %v1372
    %v1413 = vxor.u32 %v1373, 2147483648
    %v1414 = vmul.f32 %v1413, 1.442695
    %v1415 = vpow.pop %v1414
    %v1416 = vadd.f32 %v1415, 1.0
    %v1417 = vrcp.pop %v1416
    %v1418 = vmul.f32 %v1416, %v1417
    %v1419 = vsub.f32 1.0, %v1418
    %v1420 = vmul.f32 %v1417, %v1419
    %v1421 = vadd.f32 %v1417, %v1420
    %vm1422 = vweird.f32 %v1416
    %vm1423 = vweird.f32 %v1417
    %vm1424 = vmor %vm1422, %vm1423
    %v1425 = vsel %vm1424, %v1417, %v1421
    %v1426 = vand.u32 2147483647, %v1416
    %vm1427 = vcmp.eq.f32.partialorder %v1426, 8.507059e+37
    %v1428 = vand.u32 %v1416, 2147483648
    %v1429 = vor.u32 1.1754944e-38, %v1428
    %v1430 = vsel %vm1427, %v1429, %v1425
    %v1431 = vmul.f32 1.0, %v1430
    %v1432 = vmul.f32 %v1411, %v1229
    %v1433 = vmul.f32 %v1392, %v1412
    %v1434 = vadd.f32 %v1432, %v1433
    %v1435 = vtanh.pop %v1434
    %v1436 = vmul.f32 %v1431, %v1435
    %1437 = vmatpush.msra.mxu0 %v665
    %1438 = vmatpush.msra.mxu0 %v663
    %1439 = vmatpush.msra.mxu0 %v661
    %1440 = vmatpush.msra.mxu0 %v659
    %1441 = vmatpush.msra.mxu0 %v657
    %1442 = vmatpush.msra.mxu0 %v655
    %1443 = vmatpush.msra.mxu0 %v653
    %1444 = vmatpush.msra.mxu0 %v651
    %1445 = vmatpush.msra.mxu0 %v649
    %1446 = vmatpush.msra.mxu0 %v647
    %1447 = vmatpush.msra.mxu0 %v645
    %1448 = vmatpush.msra.mxu0 %v643
    %1449 = vmatpush.msra.mxu0 %v641
    %1450 = vmatpush.msra.mxu0 %v639
    %1451 = vmatpush.msra.mxu0 %v637
    %1452 = vmatpush.msra.mxu0 %v635
    %1453 = vmatmul.f32.gmra.mxu0 %v1436
    %v1454 = vpop.f32.mrf.mxu0
    %v1455 = vadd.f32 0.0, %v1454
    %1456 = vdwg.mxu0
    %1457 = vmatpush.msra.mxu0 %v666
    %1458 = vmatpush.msra.mxu0 %v664
    %1459 = vmatpush.msra.mxu0 %v662
    %1460 = vmatpush.msra.mxu0 %v660
    %1461 = vmatpush.msra.mxu0 %v658
    %1462 = vmatpush.msra.mxu0 %v656
    %1463 = vmatpush.msra.mxu0 %v654
    %1464 = vmatpush.msra.mxu0 %v652
    %1465 = vmatpush.msra.mxu0 %v650
    %1466 = vmatpush.msra.mxu0 %v648
    %1467 = vmatpush.msra.mxu0 %v646
    %1468 = vmatpush.msra.mxu0 %v644
    %1469 = vmatpush.msra.mxu0 %v642
    %1470 = vmatpush.msra.mxu0 %v640
    %1471 = vmatpush.msra.mxu0 %v638
    %1472 = vmatpush.msra.mxu0 %v636
    %1473 = vmatmul.f32.gmra.mxu0 %v1436
    %v1474 = vpop.f32.mrf.mxu0
    %v1475 = vadd.f32 0.0, %v1474
    %1476 = vdwg.mxu0
    %s1477 = scalar_lea.vmem [#allocation12], 24
    %v1478 = vld [vmem:[%s1477] sm:$0xff]
    %v1479 = vadd.f32 %v1478, %v1455
    %1480 = vst [vmem:[%s1477] sm:$0xff] %v1479
    %s1481 = scalar_lea.vmem [#allocation12], 32
    %v1482 = vld [vmem:[%s1481] sm:$0xff]
    %v1483 = vadd.f32 %v1482, %v1475
    %1484 = vst [vmem:[%s1481] sm:$0xff] %v1483
    %v1485 = vld [vmem:[%s1365] sm:$0xff]
    %v1486 = vld [vmem:[%s1365 + $0x8] sm:$0xff]
    %v1487 = vld [vmem:[%s1365 + $0x10] sm:$0xff]
    %v1488 = vld [vmem:[%s1365 + $0x18] sm:$0xff]
    %1489 = vmatpush.msra.mxu0 %v631
    %1490 = vmatpush.msra.mxu0 %v627
    %1491 = vmatpush.msra.mxu0 %v623
    %1492 = vmatpush.msra.mxu0 %v619
    %1493 = vmatpush.msra.mxu0 %v615
    %1494 = vmatpush.msra.mxu0 %v611
    %1495 = vmatpush.msra.mxu0 %v607
    %1496 = vmatpush.msra.mxu0 %v603
    %1497 = vmatpush.msra.mxu0 %v599
    %1498 = vmatpush.msra.mxu0 %v595
    %1499 = vmatpush.msra.mxu0 %v591
    %1500 = vmatpush.msra.mxu0 %v587
    %1501 = vmatpush.msra.mxu0 %v583
    %1502 = vmatpush.msra.mxu0 %v579
    %1503 = vmatpush.msra.mxu0 %v575
    %1504 = vmatpush.msra.mxu0 %v571
    %1505 = vmatmul.f32.gmra.mxu0 %v1436
    %v1506 = vpop.f32.mrf.mxu0
    %v1507 = vadd.f32 %v1485, %v1506
    %1508 = vdwg.mxu0
    %1509 = vmatpush.msra.mxu0 %v632
    %1510 = vmatpush.msra.mxu0 %v628
    %1511 = vmatpush.msra.mxu0 %v624
    %1512 = vmatpush.msra.mxu0 %v620
    %1513 = vmatpush.msra.mxu0 %v616
    %1514 = vmatpush.msra.mxu0 %v612
    %1515 = vmatpush.msra.mxu0 %v608
    %1516 = vmatpush.msra.mxu0 %v604
    %1517 = vmatpush.msra.mxu0 %v600
    %1518 = vmatpush.msra.mxu0 %v596
    %1519 = vmatpush.msra.mxu0 %v592
    %1520 = vmatpush.msra.mxu0 %v588
    %1521 = vmatpush.msra.mxu0 %v584
    %1522 = vmatpush.msra.mxu0 %v580
    %1523 = vmatpush.msra.mxu0 %v576
    %1524 = vmatpush.msra.mxu0 %v572
    %1525 = vmatmul.f32.gmra.mxu0 %v1436
    %v1526 = vpop.f32.mrf.mxu0
    %v1527 = vadd.f32 %v1486, %v1526
    %1528 = vdwg.mxu0
    %1529 = vmatpush.msra.mxu0 %v633
    %1530 = vmatpush.msra.mxu0 %v629
    %1531 = vmatpush.msra.mxu0 %v625
    %1532 = vmatpush.msra.mxu0 %v621
    %1533 = vmatpush.msra.mxu0 %v617
    %1534 = vmatpush.msra.mxu0 %v613
    %1535 = vmatpush.msra.mxu0 %v609
    %1536 = vmatpush.msra.mxu0 %v605
    %1537 = vmatpush.msra.mxu0 %v601
    %1538 = vmatpush.msra.mxu0 %v597
    %1539 = vmatpush.msra.mxu0 %v593
    %1540 = vmatpush.msra.mxu0 %v589
    %1541 = vmatpush.msra.mxu0 %v585
    %1542 = vmatpush.msra.mxu0 %v581
    %1543 = vmatpush.msra.mxu0 %v577
    %1544 = vmatpush.msra.mxu0 %v573
    %1545 = vmatmul.f32.gmra.mxu0 %v1436
    %v1546 = vpop.f32.mrf.mxu0
    %v1547 = vadd.f32 %v1487, %v1546
    %1548 = vdwg.mxu0
    %1549 = vmatpush.msra.mxu0 %v634
    %1550 = vmatpush.msra.mxu0 %v630
    %1551 = vmatpush.msra.mxu0 %v626
    %1552 = vmatpush.msra.mxu0 %v622
    %1553 = vmatpush.msra.mxu0 %v618
    %1554 = vmatpush.msra.mxu0 %v614
    %1555 = vmatpush.msra.mxu0 %v610
    %1556 = vmatpush.msra.mxu0 %v606
    %1557 = vmatpush.msra.mxu0 %v602
    %1558 = vmatpush.msra.mxu0 %v598
    %1559 = vmatpush.msra.mxu0 %v594
    %1560 = vmatpush.msra.mxu0 %v590
    %1561 = vmatpush.msra.mxu0 %v586
    %1562 = vmatpush.msra.mxu0 %v582
    %1563 = vmatpush.msra.mxu0 %v578
    %1564 = vmatpush.msra.mxu0 %v574
    %1565 = vmatmul.f32.gmra.mxu0 %v1436
    %v1566 = vpop.f32.mrf.mxu0
    %v1567 = vadd.f32 %v1488, %v1566
    %1568 = vdwg.mxu0
    %v1569 = vld [vmem:[%s1280 + $0x20] sm:$0xff]
    %v1570 = vld [vmem:[%s1280 + $0x28] sm:$0xff]
    %v1571 = vld [vmem:[%s1280 + $0x30] sm:$0xff]
    %v1572 = vld [vmem:[%s1280 + $0x38] sm:$0xff]
    %v1573 = vadd.f32 %v1507, %v1569
    %v1574 = vadd.f32 %v1527, %v1570
    %v1575 = vadd.f32 %v1547, %v1571
    %v1576 = vadd.f32 %v1567, %v1572
    %v1577 = vxor.u32 %v1573, 2147483648
    %v1578 = vmul.f32 %v1577, 1.442695
    %v1579 = vpow.pop %v1578
    %v1580 = vadd.f32 %v1579, 1.0
    %v1581 = vrcp.pop %v1580
    %v1582 = vmul.f32 %v1580, %v1581
    %v1583 = vsub.f32 1.0, %v1582
    %v1584 = vmul.f32 %v1581, %v1583
    %v1585 = vadd.f32 %v1581, %v1584
    %vm1586 = vweird.f32 %v1580
    %vm1587 = vweird.f32 %v1581
    %vm1588 = vmor %vm1586, %vm1587
    %v1589 = vsel %vm1588, %v1581, %v1585
    %v1590 = vand.u32 2147483647, %v1580
    %vm1591 = vcmp.eq.f32.partialorder %v1590, 8.507059e+37
    %v1592 = vand.u32 %v1580, 2147483648
    %v1593 = vor.u32 1.1754944e-38, %v1592
    %v1594 = vsel %vm1591, %v1593, %v1589
    %v1595 = vmul.f32 1.0, %v1594
    %v1596 = vxor.u32 %v1574, 2147483648
    %v1597 = vmul.f32 %v1596, 1.442695
    %v1598 = vpow.pop %v1597
    %v1599 = vadd.f32 %v1598, 1.0
    %v1600 = vrcp.pop %v1599
    %v1601 = vmul.f32 %v1599, %v1600
    %v1602 = vsub.f32 1.0, %v1601
    %v1603 = vmul.f32 %v1600, %v1602
    %v1604 = vadd.f32 %v1600, %v1603
    %vm1605 = vweird.f32 %v1599
    %vm1606 = vweird.f32 %v1600
    %vm1607 = vmor %vm1605, %vm1606
    %v1608 = vsel %vm1607, %v1600, %v1604
    %v1609 = vand.u32 2147483647, %v1599
    %vm1610 = vcmp.eq.f32.partialorder %v1609, 8.507059e+37
    %v1611 = vand.u32 %v1599, 2147483648
    %v1612 = vor.u32 1.1754944e-38, %v1611
    %v1613 = vsel %vm1610, %v1612, %v1608
    %v1614 = vmul.f32 1.0, %v1613
    %v1615 = vtanh.pop %v1575
    %v1616 = vxor.u32 %v1576, 2147483648
    %v1617 = vmul.f32 %v1616, 1.442695
    %v1618 = vpow.pop %v1617
    %v1619 = vadd.f32 %v1618, 1.0
    %v1620 = vrcp.pop %v1619
    %v1621 = vmul.f32 %v1619, %v1620
    %v1622 = vsub.f32 1.0, %v1621
    %v1623 = vmul.f32 %v1620, %v1622
    %v1624 = vadd.f32 %v1620, %v1623
    %vm1625 = vweird.f32 %v1619
    %vm1626 = vweird.f32 %v1620
    %vm1627 = vmor %vm1625, %vm1626
    %v1628 = vsel %vm1627, %v1620, %v1624
    %v1629 = vand.u32 2147483647, %v1619
    %vm1630 = vcmp.eq.f32.partialorder %v1629, 8.507059e+37
    %v1631 = vand.u32 %v1619, 2147483648
    %v1632 = vor.u32 1.1754944e-38, %v1631
    %v1633 = vsel %vm1630, %v1632, %v1628
    %v1634 = vmul.f32 1.0, %v1633
    %v1635 = vmul.f32 %v1614, %v1434
    %v1636 = vmul.f32 %v1595, %v1615
    %v1637 = vadd.f32 %v1635, %v1636
    %v1638 = vtanh.pop %v1637
    %v1639 = vmul.f32 %v1634, %v1638
    %1640 = vmatpush.msra.mxu0 %v665
    %1641 = vmatpush.msra.mxu0 %v663
    %1642 = vmatpush.msra.mxu0 %v661
    %1643 = vmatpush.msra.mxu0 %v659
    %1644 = vmatpush.msra.mxu0 %v657
    %1645 = vmatpush.msra.mxu0 %v655
    %1646 = vmatpush.msra.mxu0 %v653
    %1647 = vmatpush.msra.mxu0 %v651
    %1648 = vmatpush.msra.mxu0 %v649
    %1649 = vmatpush.msra.mxu0 %v647
    %1650 = vmatpush.msra.mxu0 %v645
    %1651 = vmatpush.msra.mxu0 %v643
    %1652 = vmatpush.msra.mxu0 %v641
    %1653 = vmatpush.msra.mxu0 %v639
    %1654 = vmatpush.msra.mxu0 %v637
    %1655 = vmatpush.msra.mxu0 %v635
    %1656 = vmatmul.f32.gmra.mxu0 %v1639
    %v1657 = vpop.f32.mrf.mxu0
    %v1658 = vadd.f32 0.0, %v1657
    %1659 = vdwg.mxu0
    %1660 = vmatpush.msra.mxu0 %v666
    %1661 = vmatpush.msra.mxu0 %v664
    %1662 = vmatpush.msra.mxu0 %v662
    %1663 = vmatpush.msra.mxu0 %v660
    %1664 = vmatpush.msra.mxu0 %v658
    %1665 = vmatpush.msra.mxu0 %v656
    %1666 = vmatpush.msra.mxu0 %v654
    %1667 = vmatpush.msra.mxu0 %v652
    %1668 = vmatpush.msra.mxu0 %v650
    %1669 = vmatpush.msra.mxu0 %v648
    %1670 = vmatpush.msra.mxu0 %v646
    %1671 = vmatpush.msra.mxu0 %v644
    %1672 = vmatpush.msra.mxu0 %v642
    %1673 = vmatpush.msra.mxu0 %v640
    %1674 = vmatpush.msra.mxu0 %v638
    %1675 = vmatpush.msra.mxu0 %v636
    %1676 = vmatmul.f32.gmra.mxu0 %v1639
    %v1677 = vpop.f32.mrf.mxu0
    %v1678 = vadd.f32 0.0, %v1677
    %1679 = vdwg.mxu0
    %v1680 = vld [vmem:[%s1481] sm:$0xff]
    %v1681 = vadd.f32 %v1680, %v1658
    %1682 = vst [vmem:[%s1481] sm:$0xff] %v1681
    %v1683 = vld [vmem:[%s1477] sm:$0xff]
    %v1684 = vadd.f32 %v1683, %v1678
    %1685 = vst [vmem:[%s1477] sm:$0xff] %v1684
    %v1686 = vld [vmem:[%s1160] sm:$0xff]
    %v1687 = vld [vmem:[%s1160 + $0x8] sm:$0xff]
    %v1688 = vld [vmem:[%s1160 + $0x10] sm:$0xff]
    %v1689 = vld [vmem:[%s1160 + $0x18] sm:$0xff]
    %1690 = vmatpush.msra.mxu0 %v631
    %1691 = vmatpush.msra.mxu0 %v627
    %1692 = vmatpush.msra.mxu0 %v623
    %1693 = vmatpush.msra.mxu0 %v619
    %1694 = vmatpush.msra.mxu0 %v615
    %1695 = vmatpush.msra.mxu0 %v611
    %1696 = vmatpush.msra.mxu0 %v607
    %1697 = vmatpush.msra.mxu0 %v603
    %1698 = vmatpush.msra.mxu0 %v599
    %1699 = vmatpush.msra.mxu0 %v595
    %1700 = vmatpush.msra.mxu0 %v591
    %1701 = vmatpush.msra.mxu0 %v587
    %1702 = vmatpush.msra.mxu0 %v583
    %1703 = vmatpush.msra.mxu0 %v579
    %1704 = vmatpush.msra.mxu0 %v575
    %1705 = vmatpush.msra.mxu0 %v571
    %1706 = vmatmul.f32.gmra.mxu0 %v1639
    %v1707 = vpop.f32.mrf.mxu0
    %v1708 = vadd.f32 %v1686, %v1707
    %1709 = vdwg.mxu0
    %1710 = vmatpush.msra.mxu0 %v632
    %1711 = vmatpush.msra.mxu0 %v628
    %1712 = vmatpush.msra.mxu0 %v624
    %1713 = vmatpush.msra.mxu0 %v620
    %1714 = vmatpush.msra.mxu0 %v616
    %1715 = vmatpush.msra.mxu0 %v612
    %1716 = vmatpush.msra.mxu0 %v608
    %1717 = vmatpush.msra.mxu0 %v604
    %1718 = vmatpush.msra.mxu0 %v600
    %1719 = vmatpush.msra.mxu0 %v596
    %1720 = vmatpush.msra.mxu0 %v592
    %1721 = vmatpush.msra.mxu0 %v588
    %1722 = vmatpush.msra.mxu0 %v584
    %1723 = vmatpush.msra.mxu0 %v580
    %1724 = vmatpush.msra.mxu0 %v576
    %1725 = vmatpush.msra.mxu0 %v572
    %1726 = vmatmul.f32.gmra.mxu0 %v1639
    %v1727 = vpop.f32.mrf.mxu0
    %v1728 = vadd.f32 %v1687, %v1727
    %1729 = vdwg.mxu0
    %1730 = vmatpush.msra.mxu0 %v633
    %1731 = vmatpush.msra.mxu0 %v629
    %1732 = vmatpush.msra.mxu0 %v625
    %1733 = vmatpush.msra.mxu0 %v621
    %1734 = vmatpush.msra.mxu0 %v617
    %1735 = vmatpush.msra.mxu0 %v613
    %1736 = vmatpush.msra.mxu0 %v609
    %1737 = vmatpush.msra.mxu0 %v605
    %1738 = vmatpush.msra.mxu0 %v601
    %1739 = vmatpush.msra.mxu0 %v597
    %1740 = vmatpush.msra.mxu0 %v593
    %1741 = vmatpush.msra.mxu0 %v589
    %1742 = vmatpush.msra.mxu0 %v585
    %1743 = vmatpush.msra.mxu0 %v581
    %1744 = vmatpush.msra.mxu0 %v577
    %1745 = vmatpush.msra.mxu0 %v573
    %1746 = vmatmul.f32.gmra.mxu0 %v1639
    %v1747 = vpop.f32.mrf.mxu0
    %v1748 = vadd.f32 %v1688, %v1747
    %1749 = vdwg.mxu0
    %1750 = vmatpush.msra.mxu0 %v634
    %1751 = vmatpush.msra.mxu0 %v630
    %1752 = vmatpush.msra.mxu0 %v626
    %1753 = vmatpush.msra.mxu0 %v622
    %1754 = vmatpush.msra.mxu0 %v618
    %1755 = vmatpush.msra.mxu0 %v614
    %1756 = vmatpush.msra.mxu0 %v610
    %1757 = vmatpush.msra.mxu0 %v606
    %1758 = vmatpush.msra.mxu0 %v602
    %1759 = vmatpush.msra.mxu0 %v598
    %1760 = vmatpush.msra.mxu0 %v594
    %1761 = vmatpush.msra.mxu0 %v590
    %1762 = vmatpush.msra.mxu0 %v586
    %1763 = vmatpush.msra.mxu0 %v582
    %1764 = vmatpush.msra.mxu0 %v578
    %1765 = vmatpush.msra.mxu0 %v574
    %1766 = vmatmul.f32.gmra.mxu0 %v1639
    %v1767 = vpop.f32.mrf.mxu0
    %v1768 = vadd.f32 %v1689, %v1767
    %1769 = vdwg.mxu0
    %v1770 = vld [vmem:[%s1075 + $0x20] sm:$0xff]
    %v1771 = vld [vmem:[%s1075 + $0x28] sm:$0xff]
    %v1772 = vld [vmem:[%s1075 + $0x30] sm:$0xff]
    %v1773 = vld [vmem:[%s1075 + $0x38] sm:$0xff]
    %v1774 = vadd.f32 %v1708, %v1770
    %v1775 = vadd.f32 %v1728, %v1771
    %v1776 = vadd.f32 %v1748, %v1772
    %v1777 = vadd.f32 %v1768, %v1773
    %v1778 = vxor.u32 %v1774, 2147483648
    %v1779 = vmul.f32 %v1778, 1.442695
    %v1780 = vpow.pop %v1779
    %v1781 = vadd.f32 %v1780, 1.0
    %v1782 = vrcp.pop %v1781
    %v1783 = vmul.f32 %v1781, %v1782
    %v1784 = vsub.f32 1.0, %v1783
    %v1785 = vmul.f32 %v1782, %v1784
    %v1786 = vadd.f32 %v1782, %v1785
    %vm1787 = vweird.f32 %v1781
    %vm1788 = vweird.f32 %v1782
    %vm1789 = vmor %vm1787, %vm1788
    %v1790 = vsel %vm1789, %v1782, %v1786
    %v1791 = vand.u32 2147483647, %v1781
    %vm1792 = vcmp.eq.f32.partialorder %v1791, 8.507059e+37
    %v1793 = vand.u32 %v1781, 2147483648
    %v1794 = vor.u32 1.1754944e-38, %v1793
    %v1795 = vsel %vm1792, %v1794, %v1790
    %v1796 = vmul.f32 1.0, %v1795
    %v1797 = vxor.u32 %v1775, 2147483648
    %v1798 = vmul.f32 %v1797, 1.442695
    %v1799 = vpow.pop %v1798
    %v1800 = vadd.f32 %v1799, 1.0
    %v1801 = vrcp.pop %v1800
    %v1802 = vmul.f32 %v1800, %v1801
    %v1803 = vsub.f32 1.0, %v1802
    %v1804 = vmul.f32 %v1801, %v1803
    %v1805 = vadd.f32 %v1801, %v1804
    %vm1806 = vweird.f32 %v1800
    %vm1807 = vweird.f32 %v1801
    %vm1808 = vmor %vm1806, %vm1807
    %v1809 = vsel %vm1808, %v1801, %v1805
    %v1810 = vand.u32 2147483647, %v1800
    %vm1811 = vcmp.eq.f32.partialorder %v1810, 8.507059e+37
    %v1812 = vand.u32 %v1800, 2147483648
    %v1813 = vor.u32 1.1754944e-38, %v1812
    %v1814 = vsel %vm1811, %v1813, %v1809
    %v1815 = vmul.f32 1.0, %v1814
    %v1816 = vtanh.pop %v1776
    %v1817 = vxor.u32 %v1777, 2147483648
    %v1818 = vmul.f32 %v1817, 1.442695
    %v1819 = vpow.pop %v1818
    %v1820 = vadd.f32 %v1819, 1.0
    %v1821 = vrcp.pop %v1820
    %v1822 = vmul.f32 %v1820, %v1821
    %v1823 = vsub.f32 1.0, %v1822
    %v1824 = vmul.f32 %v1821, %v1823
    %v1825 = vadd.f32 %v1821, %v1824
    %vm1826 = vweird.f32 %v1820
    %vm1827 = vweird.f32 %v1821
    %vm1828 = vmor %vm1826, %vm1827
    %v1829 = vsel %vm1828, %v1821, %v1825
    %v1830 = vand.u32 2147483647, %v1820
    %vm1831 = vcmp.eq.f32.partialorder %v1830, 8.507059e+37
    %v1832 = vand.u32 %v1820, 2147483648
    %v1833 = vor.u32 1.1754944e-38, %v1832
    %v1834 = vsel %vm1831, %v1833, %v1829
    %v1835 = vmul.f32 1.0, %v1834
    %v1836 = vmul.f32 %v1815, %v1637
    %v1837 = vmul.f32 %v1796, %v1816
    %v1838 = vadd.f32 %v1836, %v1837
    %v1839 = vtanh.pop %v1838
    %v1840 = vmul.f32 %v1835, %v1839
    %1841 = vmatpush.msra.mxu0 %v665
    %1842 = vmatpush.msra.mxu0 %v663
    %1843 = vmatpush.msra.mxu0 %v661
    %1844 = vmatpush.msra.mxu0 %v659
    %1845 = vmatpush.msra.mxu0 %v657
    %1846 = vmatpush.msra.mxu0 %v655
    %1847 = vmatpush.msra.mxu0 %v653
    %1848 = vmatpush.msra.mxu0 %v651
    %1849 = vmatpush.msra.mxu0 %v649
    %1850 = vmatpush.msra.mxu0 %v647
    %1851 = vmatpush.msra.mxu0 %v645
    %1852 = vmatpush.msra.mxu0 %v643
    %1853 = vmatpush.msra.mxu0 %v641
    %1854 = vmatpush.msra.mxu0 %v639
    %1855 = vmatpush.msra.mxu0 %v637
    %1856 = vmatpush.msra.mxu0 %v635
    %1857 = vmatmul.f32.gmra.mxu0 %v1840
    %v1858 = vpop.f32.mrf.mxu0
    %v1859 = vadd.f32 0.0, %v1858
    %1860 = vdwg.mxu0
    %1861 = vmatpush.msra.mxu0 %v666
    %1862 = vmatpush.msra.mxu0 %v664
    %1863 = vmatpush.msra.mxu0 %v662
    %1864 = vmatpush.msra.mxu0 %v660
    %1865 = vmatpush.msra.mxu0 %v658
    %1866 = vmatpush.msra.mxu0 %v656
    %1867 = vmatpush.msra.mxu0 %v654
    %1868 = vmatpush.msra.mxu0 %v652
    %1869 = vmatpush.msra.mxu0 %v650
    %1870 = vmatpush.msra.mxu0 %v648
    %1871 = vmatpush.msra.mxu0 %v646
    %1872 = vmatpush.msra.mxu0 %v644
    %1873 = vmatpush.msra.mxu0 %v642
    %1874 = vmatpush.msra.mxu0 %v640
    %1875 = vmatpush.msra.mxu0 %v638
    %1876 = vmatpush.msra.mxu0 %v636
    %1877 = vmatmul.f32.gmra.mxu0 %v1840
    %v1878 = vpop.f32.mrf.mxu0
    %v1879 = vadd.f32 0.0, %v1878
    %1880 = vdwg.mxu0
    %v1881 = vld [vmem:[%s1276] sm:$0xff]
    %v1882 = vadd.f32 %v1881, %v1859
    %1883 = vst [vmem:[%s1276] sm:$0xff] %v1882
    %v1884 = vld [vmem:[%s1272] sm:$0xff]
    %v1885 = vadd.f32 %v1884, %v1879
    %1886 = vst [vmem:[%s1272] sm:$0xff] %v1885
    %v1887 = vld [vmem:[%s955] sm:$0xff]
    %v1888 = vld [vmem:[%s955 + $0x8] sm:$0xff]
    %v1889 = vld [vmem:[%s955 + $0x10] sm:$0xff]
    %v1890 = vld [vmem:[%s955 + $0x18] sm:$0xff]
    %1891 = vmatpush.msra.mxu0 %v631
    %1892 = vmatpush.msra.mxu0 %v627
    %1893 = vmatpush.msra.mxu0 %v623
    %1894 = vmatpush.msra.mxu0 %v619
    %1895 = vmatpush.msra.mxu0 %v615
    %1896 = vmatpush.msra.mxu0 %v611
    %1897 = vmatpush.msra.mxu0 %v607
    %1898 = vmatpush.msra.mxu0 %v603
    %1899 = vmatpush.msra.mxu0 %v599
    %1900 = vmatpush.msra.mxu0 %v595
    %1901 = vmatpush.msra.mxu0 %v591
    %1902 = vmatpush.msra.mxu0 %v587
    %1903 = vmatpush.msra.mxu0 %v583
    %1904 = vmatpush.msra.mxu0 %v579
    %1905 = vmatpush.msra.mxu0 %v575
    %1906 = vmatpush.msra.mxu0 %v571
    %1907 = vmatmul.f32.gmra.mxu0 %v1840
    %v1908 = vpop.f32.mrf.mxu0
    %v1909 = vadd.f32 %v1887, %v1908
    %1910 = vdwg.mxu0
    %1911 = vmatpush.msra.mxu0 %v632
    %1912 = vmatpush.msra.mxu0 %v628
    %1913 = vmatpush.msra.mxu0 %v624
    %1914 = vmatpush.msra.mxu0 %v620
    %1915 = vmatpush.msra.mxu0 %v616
    %1916 = vmatpush.msra.mxu0 %v612
    %1917 = vmatpush.msra.mxu0 %v608
    %1918 = vmatpush.msra.mxu0 %v604
    %1919 = vmatpush.msra.mxu0 %v600
    %1920 = vmatpush.msra.mxu0 %v596
    %1921 = vmatpush.msra.mxu0 %v592
    %1922 = vmatpush.msra.mxu0 %v588
    %1923 = vmatpush.msra.mxu0 %v584
    %1924 = vmatpush.msra.mxu0 %v580
    %1925 = vmatpush.msra.mxu0 %v576
    %1926 = vmatpush.msra.mxu0 %v572
    %1927 = vmatmul.f32.gmra.mxu0 %v1840
    %v1928 = vpop.f32.mrf.mxu0
    %v1929 = vadd.f32 %v1888, %v1928
    %1930 = vdwg.mxu0
    %1931 = vmatpush.msra.mxu0 %v633
    %1932 = vmatpush.msra.mxu0 %v629
    %1933 = vmatpush.msra.mxu0 %v625
    %1934 = vmatpush.msra.mxu0 %v621
    %1935 = vmatpush.msra.mxu0 %v617
    %1936 = vmatpush.msra.mxu0 %v613
    %1937 = vmatpush.msra.mxu0 %v609
    %1938 = vmatpush.msra.mxu0 %v605
    %1939 = vmatpush.msra.mxu0 %v601
    %1940 = vmatpush.msra.mxu0 %v597
    %1941 = vmatpush.msra.mxu0 %v593
    %1942 = vmatpush.msra.mxu0 %v589
    %1943 = vmatpush.msra.mxu0 %v585
    %1944 = vmatpush.msra.mxu0 %v581
    %1945 = vmatpush.msra.mxu0 %v577
    %1946 = vmatpush.msra.mxu0 %v573
    %1947 = vmatmul.f32.gmra.mxu0 %v1840
    %v1948 = vpop.f32.mrf.mxu0
    %v1949 = vadd.f32 %v1889, %v1948
    %1950 = vdwg.mxu0
    %1951 = vmatpush.msra.mxu0 %v634
    %1952 = vmatpush.msra.mxu0 %v630
    %1953 = vmatpush.msra.mxu0 %v626
    %1954 = vmatpush.msra.mxu0 %v622
    %1955 = vmatpush.msra.mxu0 %v618
    %1956 = vmatpush.msra.mxu0 %v614
    %1957 = vmatpush.msra.mxu0 %v610
    %1958 = vmatpush.msra.mxu0 %v606
    %1959 = vmatpush.msra.mxu0 %v602
    %1960 = vmatpush.msra.mxu0 %v598
    %1961 = vmatpush.msra.mxu0 %v594
    %1962 = vmatpush.msra.mxu0 %v590
    %1963 = vmatpush.msra.mxu0 %v586
    %1964 = vmatpush.msra.mxu0 %v582
    %1965 = vmatpush.msra.mxu0 %v578
    %1966 = vmatpush.msra.mxu0 %v574
    %1967 = vmatmul.f32.gmra.mxu0 %v1840
    %v1968 = vpop.f32.mrf.mxu0
    %v1969 = vadd.f32 %v1890, %v1968
    %1970 = vdwg.mxu0
    %v1971 = vld [vmem:[%s870 + $0x20] sm:$0xff]
    %v1972 = vld [vmem:[%s870 + $0x28] sm:$0xff]
    %v1973 = vld [vmem:[%s870 + $0x30] sm:$0xff]
    %v1974 = vld [vmem:[%s870 + $0x38] sm:$0xff]
    %v1975 = vadd.f32 %v1909, %v1971
    %v1976 = vadd.f32 %v1929, %v1972
    %v1977 = vadd.f32 %v1949, %v1973
    %v1978 = vadd.f32 %v1969, %v1974
    %v1979 = vxor.u32 %v1975, 2147483648
    %v1980 = vmul.f32 %v1979, 1.442695
    %v1981 = vpow.pop %v1980
    %v1982 = vadd.f32 %v1981, 1.0
    %v1983 = vrcp.pop %v1982
    %v1984 = vmul.f32 %v1982, %v1983
    %v1985 = vsub.f32 1.0, %v1984
    %v1986 = vmul.f32 %v1983, %v1985
    %v1987 = vadd.f32 %v1983, %v1986
    %vm1988 = vweird.f32 %v1982
    %vm1989 = vweird.f32 %v1983
    %vm1990 = vmor %vm1988, %vm1989
    %v1991 = vsel %vm1990, %v1983, %v1987
    %v1992 = vand.u32 2147483647, %v1982
    %vm1993 = vcmp.eq.f32.partialorder %v1992, 8.507059e+37
    %v1994 = vand.u32 %v1982, 2147483648
    %v1995 = vor.u32 1.1754944e-38, %v1994
    %v1996 = vsel %vm1993, %v1995, %v1991
    %v1997 = vmul.f32 1.0, %v1996
    %v1998 = vxor.u32 %v1976, 2147483648
    %v1999 = vmul.f32 %v1998, 1.442695
    %v2000 = vpow.pop %v1999
    %v2001 = vadd.f32 %v2000, 1.0
    %v2002 = vrcp.pop %v2001
    %v2003 = vmul.f32 %v2001, %v2002
    %v2004 = vsub.f32 1.0, %v2003
    %v2005 = vmul.f32 %v2002, %v2004
    %v2006 = vadd.f32 %v2002, %v2005
    %vm2007 = vweird.f32 %v2001
    %vm2008 = vweird.f32 %v2002
    %vm2009 = vmor %vm2007, %vm2008
    %v2010 = vsel %vm2009, %v2002, %v2006
    %v2011 = vand.u32 2147483647, %v2001
    %vm2012 = vcmp.eq.f32.partialorder %v2011, 8.507059e+37
    %v2013 = vand.u32 %v2001, 2147483648
    %v2014 = vor.u32 1.1754944e-38, %v2013
    %v2015 = vsel %vm2012, %v2014, %v2010
    %v2016 = vmul.f32 1.0, %v2015
    %v2017 = vtanh.pop %v1977
    %v2018 = vxor.u32 %v1978, 2147483648
    %v2019 = vmul.f32 %v2018, 1.442695
    %v2020 = vpow.pop %v2019
    %v2021 = vadd.f32 %v2020, 1.0
    %v2022 = vrcp.pop %v2021
    %v2023 = vmul.f32 %v2021, %v2022
    %v2024 = vsub.f32 1.0, %v2023
    %v2025 = vmul.f32 %v2022, %v2024
    %v2026 = vadd.f32 %v2022, %v2025
    %vm2027 = vweird.f32 %v2021
    %vm2028 = vweird.f32 %v2022
    %vm2029 = vmor %vm2027, %vm2028
    %v2030 = vsel %vm2029, %v2022, %v2026
    %v2031 = vand.u32 2147483647, %v2021
    %vm2032 = vcmp.eq.f32.partialorder %v2031, 8.507059e+37
    %v2033 = vand.u32 %v2021, 2147483648
    %v2034 = vor.u32 1.1754944e-38, %v2033
    %v2035 = vsel %vm2032, %v2034, %v2030
    %v2036 = vmul.f32 1.0, %v2035
    %v2037 = vmul.f32 %v2016, %v1838
    %v2038 = vmul.f32 %v1997, %v2017
    %v2039 = vadd.f32 %v2037, %v2038
    %v2040 = vtanh.pop %v2039
    %v2041 = vmul.f32 %v2036, %v2040
    %2042 = vmatpush.msra.mxu0 %v665
    %2043 = vmatpush.msra.mxu0 %v663
    %2044 = vmatpush.msra.mxu0 %v661
    %2045 = vmatpush.msra.mxu0 %v659
    %2046 = vmatpush.msra.mxu0 %v657
    %2047 = vmatpush.msra.mxu0 %v655
    %2048 = vmatpush.msra.mxu0 %v653
    %2049 = vmatpush.msra.mxu0 %v651
    %2050 = vmatpush.msra.mxu0 %v649
    %2051 = vmatpush.msra.mxu0 %v647
    %2052 = vmatpush.msra.mxu0 %v645
    %2053 = vmatpush.msra.mxu0 %v643
    %2054 = vmatpush.msra.mxu0 %v641
    %2055 = vmatpush.msra.mxu0 %v639
    %2056 = vmatpush.msra.mxu0 %v637
    %2057 = vmatpush.msra.mxu0 %v635
    %2058 = vmatmul.f32.gmra.mxu0 %v2041
    %v2059 = vpop.f32.mrf.mxu0
    %v2060 = vadd.f32 0.0, %v2059
    %2061 = vdwg.mxu0
    %2062 = vmatpush.msra.mxu0 %v666
    %2063 = vmatpush.msra.mxu0 %v664
    %2064 = vmatpush.msra.mxu0 %v662
    %2065 = vmatpush.msra.mxu0 %v660
    %2066 = vmatpush.msra.mxu0 %v658
    %2067 = vmatpush.msra.mxu0 %v656
    %2068 = vmatpush.msra.mxu0 %v654
    %2069 = vmatpush.msra.mxu0 %v652
    %2070 = vmatpush.msra.mxu0 %v650
    %2071 = vmatpush.msra.mxu0 %v648
    %2072 = vmatpush.msra.mxu0 %v646
    %2073 = vmatpush.msra.mxu0 %v644
    %2074 = vmatpush.msra.mxu0 %v642
    %2075 = vmatpush.msra.mxu0 %v640
    %2076 = vmatpush.msra.mxu0 %v638
    %2077 = vmatpush.msra.mxu0 %v636
    %2078 = vmatmul.f32.gmra.mxu0 %v2041
    %v2079 = vpop.f32.mrf.mxu0
    %v2080 = vadd.f32 0.0, %v2079
    %2081 = vdwg.mxu0
    %v2082 = vld [vmem:[%s1071] sm:$0xff]
    %v2083 = vadd.f32 %v2082, %v2060
    %2084 = vst [vmem:[%s1071] sm:$0xff] %v2083
    %v2085 = vld [vmem:[%s1067] sm:$0xff]
    %v2086 = vadd.f32 %v2085, %v2080
    %2087 = vst [vmem:[%s1067] sm:$0xff] %v2086
    %v2088 = vld [vmem:[%s751] sm:$0xff]
    %v2089 = vld [vmem:[%s751 + $0x8] sm:$0xff]
    %v2090 = vld [vmem:[%s751 + $0x10] sm:$0xff]
    %v2091 = vld [vmem:[%s751 + $0x18] sm:$0xff]
    %2092 = vmatpush.msra.mxu0 %v631
    %2093 = vmatpush.msra.mxu0 %v627
    %2094 = vmatpush.msra.mxu0 %v623
    %2095 = vmatpush.msra.mxu0 %v619
    %2096 = vmatpush.msra.mxu0 %v615
    %2097 = vmatpush.msra.mxu0 %v611
    %2098 = vmatpush.msra.mxu0 %v607
    %2099 = vmatpush.msra.mxu0 %v603
    %2100 = vmatpush.msra.mxu0 %v599
    %2101 = vmatpush.msra.mxu0 %v595
    %2102 = vmatpush.msra.mxu0 %v591
    %2103 = vmatpush.msra.mxu0 %v587
    %2104 = vmatpush.msra.mxu0 %v583
    %2105 = vmatpush.msra.mxu0 %v579
    %2106 = vmatpush.msra.mxu0 %v575
    %2107 = vmatpush.msra.mxu0 %v571
    %2108 = vmatmul.f32.gmra.mxu0 %v2041
    %v2109 = vpop.f32.mrf.mxu0
    %v2110 = vadd.f32 %v2088, %v2109
    %2111 = vdwg.mxu0
    %2112 = vmatpush.msra.mxu0 %v632
    %2113 = vmatpush.msra.mxu0 %v628
    %2114 = vmatpush.msra.mxu0 %v624
    %2115 = vmatpush.msra.mxu0 %v620
    %2116 = vmatpush.msra.mxu0 %v616
    %2117 = vmatpush.msra.mxu0 %v612
    %2118 = vmatpush.msra.mxu0 %v608
    %2119 = vmatpush.msra.mxu0 %v604
    %2120 = vmatpush.msra.mxu0 %v600
    %2121 = vmatpush.msra.mxu0 %v596
    %2122 = vmatpush.msra.mxu0 %v592
    %2123 = vmatpush.msra.mxu0 %v588
    %2124 = vmatpush.msra.mxu0 %v584
    %2125 = vmatpush.msra.mxu0 %v580
    %2126 = vmatpush.msra.mxu0 %v576
    %2127 = vmatpush.msra.mxu0 %v572
    %2128 = vmatmul.f32.gmra.mxu0 %v2041
    %v2129 = vpop.f32.mrf.mxu0
    %v2130 = vadd.f32 %v2089, %v2129
    %2131 = vdwg.mxu0
    %2132 = vmatpush.msra.mxu0 %v633
    %2133 = vmatpush.msra.mxu0 %v629
    %2134 = vmatpush.msra.mxu0 %v625
    %2135 = vmatpush.msra.mxu0 %v621
    %2136 = vmatpush.msra.mxu0 %v617
    %2137 = vmatpush.msra.mxu0 %v613
    %2138 = vmatpush.msra.mxu0 %v609
    %2139 = vmatpush.msra.mxu0 %v605
    %2140 = vmatpush.msra.mxu0 %v601
    %2141 = vmatpush.msra.mxu0 %v597
    %2142 = vmatpush.msra.mxu0 %v593
    %2143 = vmatpush.msra.mxu0 %v589
    %2144 = vmatpush.msra.mxu0 %v585
    %2145 = vmatpush.msra.mxu0 %v581
    %2146 = vmatpush.msra.mxu0 %v577
    %2147 = vmatpush.msra.mxu0 %v573
    %2148 = vmatmul.f32.gmra.mxu0 %v2041
    %v2149 = vpop.f32.mrf.mxu0
    %v2150 = vadd.f32 %v2090, %v2149
    %2151 = vdwg.mxu0
    %2152 = vmatpush.msra.mxu0 %v634
    %2153 = vmatpush.msra.mxu0 %v630
    %2154 = vmatpush.msra.mxu0 %v626
    %2155 = vmatpush.msra.mxu0 %v622
    %2156 = vmatpush.msra.mxu0 %v618
    %2157 = vmatpush.msra.mxu0 %v614
    %2158 = vmatpush.msra.mxu0 %v610
    %2159 = vmatpush.msra.mxu0 %v606
    %2160 = vmatpush.msra.mxu0 %v602
    %2161 = vmatpush.msra.mxu0 %v598
    %2162 = vmatpush.msra.mxu0 %v594
    %2163 = vmatpush.msra.mxu0 %v590
    %2164 = vmatpush.msra.mxu0 %v586
    %2165 = vmatpush.msra.mxu0 %v582
    %2166 = vmatpush.msra.mxu0 %v578
    %2167 = vmatpush.msra.mxu0 %v574
    %2168 = vmatmul.f32.gmra.mxu0 %v2041
    %v2169 = vpop.f32.mrf.mxu0
    %v2170 = vadd.f32 %v2091, %v2169
    %2171 = vdwg.mxu0
    %v2172 = vld [vmem:[#allocation2 + $0x20] sm:$0xff]
    %v2173 = vld [vmem:[#allocation2 + $0x28] sm:$0xff]
    %v2174 = vld [vmem:[#allocation2 + $0x30] sm:$0xff]
    %v2175 = vld [vmem:[#allocation2 + $0x38] sm:$0xff]
    %v2176 = vadd.f32 %v2110, %v2172
    %v2177 = vadd.f32 %v2130, %v2173
    %v2178 = vadd.f32 %v2150, %v2174
    %v2179 = vadd.f32 %v2170, %v2175
    %v2180 = vxor.u32 %v2176, 2147483648
    %v2181 = vmul.f32 %v2180, 1.442695
    %v2182 = vpow.pop %v2181
    %v2183 = vadd.f32 %v2182, 1.0
    %v2184 = vrcp.pop %v2183
    %v2185 = vmul.f32 %v2183, %v2184
    %v2186 = vsub.f32 1.0, %v2185
    %v2187 = vmul.f32 %v2184, %v2186
    %v2188 = vadd.f32 %v2184, %v2187
    %vm2189 = vweird.f32 %v2183
    %vm2190 = vweird.f32 %v2184
    %vm2191 = vmor %vm2189, %vm2190
    %v2192 = vsel %vm2191, %v2184, %v2188
    %v2193 = vand.u32 2147483647, %v2183
    %vm2194 = vcmp.eq.f32.partialorder %v2193, 8.507059e+37
    %v2195 = vand.u32 %v2183, 2147483648
    %v2196 = vor.u32 1.1754944e-38, %v2195
    %v2197 = vsel %vm2194, %v2196, %v2192
    %v2198 = vmul.f32 1.0, %v2197
    %v2199 = vxor.u32 %v2177, 2147483648
    %v2200 = vmul.f32 %v2199, 1.442695
    %v2201 = vpow.pop %v2200
    %v2202 = vadd.f32 %v2201, 1.0
    %v2203 = vrcp.pop %v2202
    %v2204 = vmul.f32 %v2202, %v2203
    %v2205 = vsub.f32 1.0, %v2204
    %v2206 = vmul.f32 %v2203, %v2205
    %v2207 = vadd.f32 %v2203, %v2206
    %vm2208 = vweird.f32 %v2202
    %vm2209 = vweird.f32 %v2203
    %vm2210 = vmor %vm2208, %vm2209
    %v2211 = vsel %vm2210, %v2203, %v2207
    %v2212 = vand.u32 2147483647, %v2202
    %vm2213 = vcmp.eq.f32.partialorder %v2212, 8.507059e+37
    %v2214 = vand.u32 %v2202, 2147483648
    %v2215 = vor.u32 1.1754944e-38, %v2214
    %v2216 = vsel %vm2213, %v2215, %v2211
    %v2217 = vmul.f32 1.0, %v2216
    %v2218 = vtanh.pop %v2178
    %v2219 = vxor.u32 %v2179, 2147483648
    %v2220 = vmul.f32 %v2219, 1.442695
    %v2221 = vpow.pop %v2220
    %v2222 = vadd.f32 %v2221, 1.0
    %v2223 = vrcp.pop %v2222
    %v2224 = vmul.f32 %v2222, %v2223
    %v2225 = vsub.f32 1.0, %v2224
    %v2226 = vmul.f32 %v2223, %v2225
    %v2227 = vadd.f32 %v2223, %v2226
    %vm2228 = vweird.f32 %v2222
    %vm2229 = vweird.f32 %v2223
    %vm2230 = vmor %vm2228, %vm2229
    %v2231 = vsel %vm2230, %v2223, %v2227
    %v2232 = vand.u32 2147483647, %v2222
    %vm2233 = vcmp.eq.f32.partialorder %v2232, 8.507059e+37
    %v2234 = vand.u32 %v2222, 2147483648
    %v2235 = vor.u32 1.1754944e-38, %v2234
    %v2236 = vsel %vm2233, %v2235, %v2231
    %v2237 = vmul.f32 1.0, %v2236
    %v2238 = vmul.f32 %v2217, %v2039
    %v2239 = vmul.f32 %v2198, %v2218
    %v2240 = vadd.f32 %v2238, %v2239
    %v2241 = vtanh.pop %v2240
    %v2242 = vmul.f32 %v2237, %v2241
    %2243 = vmatpush.msra.mxu0 %v665
    %2244 = vmatpush.msra.mxu0 %v663
    %2245 = vmatpush.msra.mxu0 %v661
    %2246 = vmatpush.msra.mxu0 %v659
    %2247 = vmatpush.msra.mxu0 %v657
    %2248 = vmatpush.msra.mxu0 %v655
    %2249 = vmatpush.msra.mxu0 %v653
    %2250 = vmatpush.msra.mxu0 %v651
    %2251 = vmatpush.msra.mxu0 %v649
    %2252 = vmatpush.msra.mxu0 %v647
    %2253 = vmatpush.msra.mxu0 %v645
    %2254 = vmatpush.msra.mxu0 %v643
    %2255 = vmatpush.msra.mxu0 %v641
    %2256 = vmatpush.msra.mxu0 %v639
    %2257 = vmatpush.msra.mxu0 %v637
    %2258 = vmatpush.msra.mxu0 %v635
    %2259 = vmatmul.f32.gmra.mxu0 %v2242
    %v2260 = vpop.f32.mrf.mxu0
    %v2261 = vadd.f32 0.0, %v2260
    %2262 = vdwg.mxu0
    %2263 = vmatpush.msra.mxu0 %v666
    %2264 = vmatpush.msra.mxu0 %v664
    %2265 = vmatpush.msra.mxu0 %v662
    %2266 = vmatpush.msra.mxu0 %v660
    %2267 = vmatpush.msra.mxu0 %v658
    %2268 = vmatpush.msra.mxu0 %v656
    %2269 = vmatpush.msra.mxu0 %v654
    %2270 = vmatpush.msra.mxu0 %v652
    %2271 = vmatpush.msra.mxu0 %v650
    %2272 = vmatpush.msra.mxu0 %v648
    %2273 = vmatpush.msra.mxu0 %v646
    %2274 = vmatpush.msra.mxu0 %v644
    %2275 = vmatpush.msra.mxu0 %v642
    %2276 = vmatpush.msra.mxu0 %v640
    %2277 = vmatpush.msra.mxu0 %v638
    %2278 = vmatpush.msra.mxu0 %v636
    %2279 = vmatmul.f32.gmra.mxu0 %v2242
    %v2280 = vpop.f32.mrf.mxu0
    %v2281 = vadd.f32 0.0, %v2280
    %2282 = vdwg.mxu0
    %v2283 = vld [vmem:[%s866] sm:$0xff]
    %v2284 = vadd.f32 %v2283, %v2261
    %2285 = vst [vmem:[%s866] sm:$0xff] %v2284
    %v2286 = vld [vmem:[#allocation12] sm:$0xff]
    %v2287 = vadd.f32 %v2286, %v2281
    %2288 = vst [vmem:[#allocation12] sm:$0xff] %v2287
    // Predicated region
    $region46: #{tpu_custom_call.1} parent=1 // pred_check
      _
    $region47: #{tpu_custom_call.1} parent=1 // pred_check_branch
      %2290 = sbr.rel (0) target = $region49
    $region48: #{tpu_custom_call.1} parent=1 // pred_region
      %2292 = vsyncadd [#allocation5], 0
      %s2293 = sshll.u32 [#allocation12], 4
      %s2294 = int_to_ptr.vmem [resolvable:$true] %s2293
      %s2295 = sshll.u32 %s6, 4
      %s2296 = int_to_ptr.hbm [resolvable:$true] %s2295
      %2301 = dma.vmem_to_hbm [thread:$0]  %s2294, 1024, %s2296, [#allocation5], 128, 128, 8
    $region49: #{tpu_custom_call.1} parent=1 // pred_fallthru
      _
    // Predicated region
    $region50: #{tpu_custom_call.1} parent=1 // pred_check
      _
    $region51: #{tpu_custom_call.1} parent=1 // pred_check_branch
      %2303 = sbr.rel (0) target = $region53
    $region52: #{tpu_custom_call.1} parent=1 // pred_region
      %2305 = dma.done [#allocation5], 1024
    $region53: #{tpu_custom_call.1} parent=1 // pred_fallthru
      _
    %2306 = vsyncpa [#allocation4], 1
    %2307 = vsyncpa [#allocation7], 1
    %2308 = vsyncpa [#allocation10], 1
    %2309 = vsyncpa [#allocation5], 1

</llo_original>
